<compile_context>
chip_gen: v5e
topology: v5e:2x2
jax: 0.10.0
libtpu: 0.0.40
codegen_flags: <defaults>
</compile_context>

<pallas_src>
import jax
import jax.numpy as jnp
from jax.experimental import pallas as pl
from jax.experimental.pallas import tpu as pltpu


# ------------------------------ fused kernel --------------------------------

def _net_fwd_kernel(*refs):
    """Fused forward for one graph block:
    encoders -> 3x GENConv(+ReLU) -> mean-pool -> MLP head -> sigmoid.

    Ref layout (28 inputs + 1 output):
      [0:6]   x_raw [Nb,Fx], edge_raw [Eb,Fe], gsrc [Eb,Nb], sdst [Nb,Eb],
              pool [Bb,Nb] (1/count pre-folded), graph_attr [Bb,G]
      [6:10]  node_enc (w, b), edge_enc (w, b)
      [10:22] conv1/2/3 params, 4 each: (w1_bnfolded, b1_bnfolded, w2, b2)
      [22:28] head params: (w1, b1, w2, b2, w3, b3)  -- w1 is [H+G, 32]
      [-1]    output [Bb, Y]
    """
    xr_ref, er_ref, gsrc_ref, sdst_ref, pool_ref, ga_ref = refs[:6]
    o_ref = refs[-1]
    p = [r[...] for r in refs[6:-1]]

    wn, bnn, we, bee = p[0:4]
    convs = [p[4 + 4 * i: 8 + 4 * i] for i in range(3)]
    hw1, hb1, hw2, hb2, hw3, hb3 = p[16:22]

    gsrc = gsrc_ref[...]          # [Eb, Nb] f32 one-hot
    sdst = sdst_ref[...]          # [Nb, Eb] f32 one-hot

    # ---- encoders -----------------------------------------------------------
    x = jnp.dot(xr_ref[...], wn, preferred_element_type=jnp.float32) + bnn
    e = jnp.dot(er_ref[...], we, preferred_element_type=jnp.float32) + bee
    H = x.shape[-1]

    # ---- 3x GENConv + outer F.relu (unrolled at trace time) ----------------
    eps = 1e-7
    for (w1, b1, w2, b2) in convs:
        # gather x_j for every edge via one-hot src matrix: [Eb, H]
        x_j = jnp.dot(gsrc, x, preferred_element_type=jnp.float32)
        msg = jnp.maximum(x_j + e, 0.0) + eps
        # softmax aggregation per destination node (t = 1.0).  The shift is
        # the per-feature max over ALL edges of this block, hence uniform
        # within every (dst, feature) softmax group -> numerically exact.
        m = jnp.max(msg, axis=0, keepdims=True)
        em = jnp.exp(msg - m)
        # fused denom/numer: one [Nb,Eb]x[Eb,2H] matmul instead of two.
        cat = jnp.concatenate([em, em * msg], axis=-1)                # [Eb,2H]
        agg = jnp.dot(sdst, cat, preferred_element_type=jnp.float32)  # [Nb,2H]
        denom = agg[:, :H]
        numer = agg[:, H:]
        inv = pl.reciprocal(jnp.maximum(denom, 1e-20), approx=True)
        aggr = jnp.where(denom > 0.0, numer * inv, 0.0)
        h = aggr + x
        # GENConv MLP: Linear(H,2H)+BN(folded,eval) -> ReLU -> Linear(2H,H)
        h1 = jnp.maximum(
            jnp.dot(h, w1, preferred_element_type=jnp.float32) + b1, 0.0)
        out = jnp.dot(h1, w2, preferred_element_type=jnp.float32) + b2
        # outer F.relu from Net.forward
        x = jnp.maximum(out, 0.0)

    # ---- global mean pool + dense head --------------------------------------
    # pool rows already hold 1/count -> this matmul IS the mean pool.
    pooled = jnp.dot(pool_ref[...], x, preferred_element_type=jnp.float32)
    # dense1 on concat([pooled, graph_attr]) as a single fused matmul
    hin = jnp.concatenate([pooled, ga_ref[...]], axis=-1)            # [Bb,H+G]
    h = jnp.maximum(
        jnp.dot(hin, hw1, preferred_element_type=jnp.float32) + hb1, 0.0)
    h = jnp.maximum(
        jnp.dot(h, hw2, preferred_element_type=jnp.float32) + hb2, 0.0)
    logits = jnp.dot(h, hw3, preferred_element_type=jnp.float32) + hb3
    # numerically-stable sigmoid
    z = jnp.exp(-jnp.abs(logits))
    o_ref[...] = jnp.where(logits >= 0.0, 1.0 / (1.0 + z), z / (1.0 + z))


def net_forward(params, x_raw, edge_raw, gsrc, sdst, pool, graph_attr,
                *, num_blocks):
    """Runs the fused forward with a parallel grid over graph blocks."""
    flat = (list(params["node_enc"]) + list(params["edge_enc"])
            + list(params["conv1"]) + list(params["conv2"])
            + list(params["conv3"]) + list(params["head"]))
    args = [x_raw, edge_raw, gsrc, sdst, pool, graph_attr] + flat

    n_tot, node_f = x_raw.shape
    e_tot, edge_f = edge_raw.shape
    b_tot, graph_f = graph_attr.shape
    nb, eb, bb = n_tot // num_blocks, e_tot // num_blocks, b_tot // num_blocks
    y_dim = params["head"][4].shape[1]           # denseOut weight -> out dim

    def blk(shape):
        return pl.BlockSpec(shape, lambda g: (g, 0))

    def const(arr):
        # weights: same block every grid step -> stay VMEM-resident
        return pl.BlockSpec(arr.shape, lambda g: (0, 0))

    in_specs = [
        blk((nb, node_f)),      # x_raw
        blk((eb, edge_f)),      # edge_raw
        blk((eb, nb)),          # gsrc  (block-local one-hot)
        blk((nb, eb)),          # sdst  (block-local one-hot)
        blk((bb, nb)),          # pool  (mean-pool matrix, 1/count folded)
        blk((bb, graph_f)),     # graph_attr
    ] + [const(w) for w in flat]

    return pl.pallas_call(
        _net_fwd_kernel,
        out_shape=jax.ShapeDtypeStruct((b_tot, y_dim), jnp.float32),
        grid_spec=pltpu.PrefetchScalarGridSpec(
            num_scalar_prefetch=0,
            grid=(num_blocks,),
            in_specs=in_specs,
            out_specs=pl.BlockSpec((bb, y_dim), lambda g: (g, 0)),
        ),
        compiler_params=pltpu.CompilerParams(
            dimension_semantics=("parallel",)),
    )(*args)


# ------------------------- parameter construction ---------------------------

def init_linear(key, fan_in, fan_out):
    kw, kb = jax.random.split(key)
    lim = 1.0 / float(fan_in) ** 0.5
    w = jax.random.uniform(kw, (fan_in, fan_out), jnp.float32, -lim, lim)
    b = jax.random.uniform(kb, (1, fan_out), jnp.float32, -lim, lim)
    return w, b


def init_genconv(key, hidden):
    k1, k2 = jax.random.split(key)
    w1, b1 = init_linear(k1, hidden, 2 * hidden)
    w2, b2 = init_linear(k2, 2 * hidden, hidden)
    # BatchNorm1d(2*hidden) in eval mode, fresh state (gamma=1, beta=0,
    # running_mean=0, running_var=1, eps=1e-5), folded into the Linear:
    #   scale = gamma / sqrt(var + eps);  bias = beta - mean * scale
    #   w1' = w1 * scale;  b1' = b1 * scale + bias
    # TODO(synk): when loading trained PyTorch weights, fold the trained
    # running statistics with the same formula.
    scale = jnp.full((1, 2 * hidden), 1.0 / (1.0 + 1e-5) ** 0.5, jnp.float32)
    bias = jnp.zeros((1, 2 * hidden), jnp.float32)
    return (w1 * scale, b1 * scale + bias, w2, b2)


def build_params(key, node_feat, edge_feat, hidden, graph_feat, y_dim):
    keys = jax.random.split(key, 8)
    # dense1 acts on torch.cat([global_mean_pool(x, batch), graph_attr], dim=1)
    head = (*init_linear(keys[5], hidden + graph_feat, 32),
            *init_linear(keys[6], 32, 32),
            *init_linear(keys[7], 32, y_dim))
    return {
        "node_enc": init_linear(keys[0], node_feat, hidden),
        "edge_enc": init_linear(keys[1], edge_feat, hidden),
        "conv1": init_genconv(keys[2], hidden),
        "conv2": init_genconv(keys[3], hidden),
        "conv3": init_genconv(keys[4], hidden),
        "head": head,
    }


# ------------------------------- main ---------------------------------------

if __name__ == "__main__":
    # raw feature dims / hidden size (consistent with the module)
    NODE_F, EDGE_F = 8, 6
    HIDDEN = 32            # hidden_nodes
    GRAPH_F, Y = 4, 3      # graph_attr dim, data.y dim

    # graphs are packed block-diagonally into grid blocks so matmul row
    # counts hit 128 (v5e MXU granularity; fills v6e/v7x sublanes too).
    G_BLOCKS = 2           # grid size ("parallel" -> both v7x TCs)
    GRAPHS_PER_BLOCK = 8
    NODES_PER_GRAPH = 16
    EDGES_PER_GRAPH = 32
    B = G_BLOCKS * GRAPHS_PER_BLOCK           # 16 graphs in the batch
    Nb = GRAPHS_PER_BLOCK * NODES_PER_GRAPH   # 128 nodes per block
    Eb = GRAPHS_PER_BLOCK * EDGES_PER_GRAPH   # 256 edges per block
    N = G_BLOCKS * Nb                         # 256 nodes total
    E = G_BLOCKS * Eb                         # 512 edges total

    key = jax.random.PRNGKey(0)
    kx, ke, kg, ks, kd, kp = jax.random.split(key, 6)

    x = jax.random.normal(kx, (N, NODE_F), jnp.float32)
    edge_attr = jax.random.normal(ke, (E, EDGE_F), jnp.float32)
    graph_attr = jax.random.normal(kg, (B, GRAPH_F), jnp.float32)

    # random within-graph edges (graphs packed consecutively)
    src_local = jax.random.randint(ks, (B, EDGES_PER_GRAPH), 0, NODES_PER_GRAPH)
    dst_local = jax.random.randint(kd, (B, EDGES_PER_GRAPH), 0, NODES_PER_GRAPH)
    offs = jnp.arange(B, dtype=jnp.int32)[:, None] * NODES_PER_GRAPH
    src = (src_local + offs).reshape(-1).astype(jnp.int32)   # global node idx
    dst = (dst_local + offs).reshape(-1).astype(jnp.int32)

    # block-local dense one-hot gather/scatter operators (glue JAX, f32)
    blk_off = jnp.arange(G_BLOCKS, dtype=jnp.int32)[:, None] * Nb
    src_b = src.reshape(G_BLOCKS, Eb) - blk_off              # local node idx
    dst_b = dst.reshape(G_BLOCKS, Eb) - blk_off
    node_ids = jnp.arange(Nb)
    gsrc = (src_b[:, :, None] == node_ids[None, None, :]).astype(jnp.float32)
    gsrc = gsrc.reshape(G_BLOCKS * Eb, Nb)                    # [G*Eb, Nb]
    sdst = (node_ids[None, :, None] == dst_b[:, None, :]).astype(jnp.float32)
    sdst = sdst.reshape(G_BLOCKS * Nb, Eb)                    # [G*Nb, Eb]

    # mean-pool matrix with 1/count pre-folded (every graph has 16 nodes)
    batch_in_block = jnp.repeat(jnp.arange(GRAPHS_PER_BLOCK), NODES_PER_GRAPH)
    pool_block = (jnp.arange(GRAPHS_PER_BLOCK)[:, None] == batch_in_block[None, :]
                  ).astype(jnp.float32) / float(NODES_PER_GRAPH)
    pool = jnp.tile(pool_block, (G_BLOCKS, 1))                # [G*Bb, Nb]

    params = build_params(kp, NODE_F, EDGE_F, HIDDEN, GRAPH_F, Y)

    out = net_forward(params, x, edge_attr, gsrc, sdst, pool, graph_attr,
                      num_blocks=G_BLOCKS)
    out = jax.block_until_ready(out)

    assert out.shape == (B, Y)
    assert bool(jnp.all(jnp.isfinite(out)))
    assert bool(jnp.all((out >= 0.0) & (out <= 1.0)))
    print("KERNEL_OK")
</pallas_src>

<mosaic_0001>
module attributes {stable_mosaic.version = 11 : i64} {
  func.func @_net_fwd_kernel(%arg0: i32, %arg1: memref<128x8xf32, #tpu.memory_space<vmem>>, %arg2: memref<256x6xf32, #tpu.memory_space<vmem>>, %arg3: memref<256x128xf32, #tpu.memory_space<vmem>>, %arg4: memref<128x256xf32, #tpu.memory_space<vmem>>, %arg5: memref<8x128xf32, #tpu.memory_space<vmem>>, %arg6: memref<8x4xf32, #tpu.memory_space<vmem>>, %arg7: memref<8x32xf32, #tpu.memory_space<vmem>>, %arg8: memref<1x32xf32, #tpu.memory_space<vmem>>, %arg9: memref<6x32xf32, #tpu.memory_space<vmem>>, %arg10: memref<1x32xf32, #tpu.memory_space<vmem>>, %arg11: memref<32x64xf32, #tpu.memory_space<vmem>>, %arg12: memref<1x64xf32, #tpu.memory_space<vmem>>, %arg13: memref<64x32xf32, #tpu.memory_space<vmem>>, %arg14: memref<1x32xf32, #tpu.memory_space<vmem>>, %arg15: memref<32x64xf32, #tpu.memory_space<vmem>>, %arg16: memref<1x64xf32, #tpu.memory_space<vmem>>, %arg17: memref<64x32xf32, #tpu.memory_space<vmem>>, %arg18: memref<1x32xf32, #tpu.memory_space<vmem>>, %arg19: memref<32x64xf32, #tpu.memory_space<vmem>>, %arg20: memref<1x64xf32, #tpu.memory_space<vmem>>, %arg21: memref<64x32xf32, #tpu.memory_space<vmem>>, %arg22: memref<1x32xf32, #tpu.memory_space<vmem>>, %arg23: memref<36x32xf32, #tpu.memory_space<vmem>>, %arg24: memref<1x32xf32, #tpu.memory_space<vmem>>, %arg25: memref<32x32xf32, #tpu.memory_space<vmem>>, %arg26: memref<1x32xf32, #tpu.memory_space<vmem>>, %arg27: memref<32x3xf32, #tpu.memory_space<vmem>>, %arg28: memref<1x3xf32, #tpu.memory_space<vmem>>, %arg29: memref<8x3xf32, #tpu.memory_space<vmem>>) attributes {dimension_semantics = [#tpu.dimension_semantics<parallel>], iteration_bounds = array<i64: 2>, scalar_prefetch = 0 : i64, scratch_operands = 0 : i64, tpu.core_type = #tpu.core_type<tc>, window_params = [{transform_indices = @transform_0, window_bounds = array<i64: 128, 8>}, {transform_indices = @transform_1, window_bounds = array<i64: 256, 6>}, {transform_indices = @transform_2, window_bounds = array<i64: 256, 128>}, {transform_indices = @transform_3, window_bounds = array<i64: 128, 256>}, {transform_indices = @transform_4, window_bounds = array<i64: 8, 128>}, {transform_indices = @transform_5, window_bounds = array<i64: 8, 4>}, {pipeline_mode = #tpu.pipeline_mode<synchronous>, transform_indices = @transform_6, window_bounds = array<i64: 8, 32>}, {pipeline_mode = #tpu.pipeline_mode<synchronous>, transform_indices = @transform_7, window_bounds = array<i64: 1, 32>}, {pipeline_mode = #tpu.pipeline_mode<synchronous>, transform_indices = @transform_8, window_bounds = array<i64: 6, 32>}, {pipeline_mode = #tpu.pipeline_mode<synchronous>, transform_indices = @transform_9, window_bounds = array<i64: 1, 32>}, {pipeline_mode = #tpu.pipeline_mode<synchronous>, transform_indices = @transform_10, window_bounds = array<i64: 32, 64>}, {pipeline_mode = #tpu.pipeline_mode<synchronous>, transform_indices = @transform_11, window_bounds = array<i64: 1, 64>}, {pipeline_mode = #tpu.pipeline_mode<synchronous>, transform_indices = @transform_12, window_bounds = array<i64: 64, 32>}, {pipeline_mode = #tpu.pipeline_mode<synchronous>, transform_indices = @transform_13, window_bounds = array<i64: 1, 32>}, {pipeline_mode = #tpu.pipeline_mode<synchronous>, transform_indices = @transform_14, window_bounds = array<i64: 32, 64>}, {pipeline_mode = #tpu.pipeline_mode<synchronous>, transform_indices = @transform_15, window_bounds = array<i64: 1, 64>}, {pipeline_mode = #tpu.pipeline_mode<synchronous>, transform_indices = @transform_16, window_bounds = array<i64: 64, 32>}, {pipeline_mode = #tpu.pipeline_mode<synchronous>, transform_indices = @transform_17, window_bounds = array<i64: 1, 32>}, {pipeline_mode = #tpu.pipeline_mode<synchronous>, transform_indices = @transform_18, window_bounds = array<i64: 32, 64>}, {pipeline_mode = #tpu.pipeline_mode<synchronous>, transform_indices = @transform_19, window_bounds = array<i64: 1, 64>}, {pipeline_mode = #tpu.pipeline_mode<synchronous>, transform_indices = @transform_20, window_bounds = array<i64: 64, 32>}, {pipeline_mode = #tpu.pipeline_mode<synchronous>, transform_indices = @transform_21, window_bounds = array<i64: 1, 32>}, {pipeline_mode = #tpu.pipeline_mode<synchronous>, transform_indices = @transform_22, window_bounds = array<i64: 36, 32>}, {pipeline_mode = #tpu.pipeline_mode<synchronous>, transform_indices = @transform_23, window_bounds = array<i64: 1, 32>}, {pipeline_mode = #tpu.pipeline_mode<synchronous>, transform_indices = @transform_24, window_bounds = array<i64: 32, 32>}, {pipeline_mode = #tpu.pipeline_mode<synchronous>, transform_indices = @transform_25, window_bounds = array<i64: 1, 32>}, {pipeline_mode = #tpu.pipeline_mode<synchronous>, transform_indices = @transform_26, window_bounds = array<i64: 32, 3>}, {pipeline_mode = #tpu.pipeline_mode<synchronous>, transform_indices = @transform_27, window_bounds = array<i64: 1, 3>}, {transform_indices = @transform_28, window_bounds = array<i64: 8, 3>}]} {
    %c0 = arith.constant 0 : index
    %c0_0 = arith.constant 0 : index
    %0 = vector.load %arg7[%c0, %c0_0] : memref<8x32xf32, #tpu.memory_space<vmem>>, vector<8x32xf32>
    %c0_1 = arith.constant 0 : index
    %c0_2 = arith.constant 0 : index
    %1 = vector.load %arg8[%c0_1, %c0_2] : memref<1x32xf32, #tpu.memory_space<vmem>>, vector<1x32xf32>
    %c0_3 = arith.constant 0 : index
    %c0_4 = arith.constant 0 : index
    %2 = vector.load %arg9[%c0_3, %c0_4] : memref<6x32xf32, #tpu.memory_space<vmem>>, vector<6x32xf32>
    %c0_5 = arith.constant 0 : index
    %c0_6 = arith.constant 0 : index
    %3 = vector.load %arg10[%c0_5, %c0_6] : memref<1x32xf32, #tpu.memory_space<vmem>>, vector<1x32xf32>
    %c0_7 = arith.constant 0 : index
    %c0_8 = arith.constant 0 : index
    %4 = vector.load %arg11[%c0_7, %c0_8] : memref<32x64xf32, #tpu.memory_space<vmem>>, vector<32x64xf32>
    %c0_9 = arith.constant 0 : index
    %c0_10 = arith.constant 0 : index
    %5 = vector.load %arg12[%c0_9, %c0_10] : memref<1x64xf32, #tpu.memory_space<vmem>>, vector<1x64xf32>
    %c0_11 = arith.constant 0 : index
    %c0_12 = arith.constant 0 : index
    %6 = vector.load %arg13[%c0_11, %c0_12] : memref<64x32xf32, #tpu.memory_space<vmem>>, vector<64x32xf32>
    %c0_13 = arith.constant 0 : index
    %c0_14 = arith.constant 0 : index
    %7 = vector.load %arg14[%c0_13, %c0_14] : memref<1x32xf32, #tpu.memory_space<vmem>>, vector<1x32xf32>
    %c0_15 = arith.constant 0 : index
    %c0_16 = arith.constant 0 : index
    %8 = vector.load %arg15[%c0_15, %c0_16] : memref<32x64xf32, #tpu.memory_space<vmem>>, vector<32x64xf32>
    %c0_17 = arith.constant 0 : index
    %c0_18 = arith.constant 0 : index
    %9 = vector.load %arg16[%c0_17, %c0_18] : memref<1x64xf32, #tpu.memory_space<vmem>>, vector<1x64xf32>
    %c0_19 = arith.constant 0 : index
    %c0_20 = arith.constant 0 : index
    %10 = vector.load %arg17[%c0_19, %c0_20] : memref<64x32xf32, #tpu.memory_space<vmem>>, vector<64x32xf32>
    %c0_21 = arith.constant 0 : index
    %c0_22 = arith.constant 0 : index
    %11 = vector.load %arg18[%c0_21, %c0_22] : memref<1x32xf32, #tpu.memory_space<vmem>>, vector<1x32xf32>
    %c0_23 = arith.constant 0 : index
    %c0_24 = arith.constant 0 : index
    %12 = vector.load %arg19[%c0_23, %c0_24] : memref<32x64xf32, #tpu.memory_space<vmem>>, vector<32x64xf32>
    %c0_25 = arith.constant 0 : index
    %c0_26 = arith.constant 0 : index
    %13 = vector.load %arg20[%c0_25, %c0_26] : memref<1x64xf32, #tpu.memory_space<vmem>>, vector<1x64xf32>
    %c0_27 = arith.constant 0 : index
    %c0_28 = arith.constant 0 : index
    %14 = vector.load %arg21[%c0_27, %c0_28] : memref<64x32xf32, #tpu.memory_space<vmem>>, vector<64x32xf32>
    %c0_29 = arith.constant 0 : index
    %c0_30 = arith.constant 0 : index
    %15 = vector.load %arg22[%c0_29, %c0_30] : memref<1x32xf32, #tpu.memory_space<vmem>>, vector<1x32xf32>
    %c0_31 = arith.constant 0 : index
    %c0_32 = arith.constant 0 : index
    %16 = vector.load %arg23[%c0_31, %c0_32] : memref<36x32xf32, #tpu.memory_space<vmem>>, vector<36x32xf32>
    %c0_33 = arith.constant 0 : index
    %c0_34 = arith.constant 0 : index
    %17 = vector.load %arg24[%c0_33, %c0_34] : memref<1x32xf32, #tpu.memory_space<vmem>>, vector<1x32xf32>
    %c0_35 = arith.constant 0 : index
    %c0_36 = arith.constant 0 : index
    %18 = vector.load %arg25[%c0_35, %c0_36] : memref<32x32xf32, #tpu.memory_space<vmem>>, vector<32x32xf32>
    %c0_37 = arith.constant 0 : index
    %c0_38 = arith.constant 0 : index
    %19 = vector.load %arg26[%c0_37, %c0_38] : memref<1x32xf32, #tpu.memory_space<vmem>>, vector<1x32xf32>
    %c0_39 = arith.constant 0 : index
    %c0_40 = arith.constant 0 : index
    %20 = vector.load %arg27[%c0_39, %c0_40] : memref<32x3xf32, #tpu.memory_space<vmem>>, vector<32x3xf32>
    %c0_41 = arith.constant 0 : index
    %c0_42 = arith.constant 0 : index
    %21 = vector.load %arg28[%c0_41, %c0_42] : memref<1x3xf32, #tpu.memory_space<vmem>>, vector<1x3xf32>
    %c0_43 = arith.constant 0 : index
    %c0_44 = arith.constant 0 : index
    %22 = vector.load %arg3[%c0_43, %c0_44] : memref<256x128xf32, #tpu.memory_space<vmem>>, vector<256x128xf32>
    %c0_45 = arith.constant 0 : index
    %c0_46 = arith.constant 0 : index
    %23 = vector.load %arg4[%c0_45, %c0_46] : memref<128x256xf32, #tpu.memory_space<vmem>>, vector<128x256xf32>
    %c0_47 = arith.constant 0 : index
    %c0_48 = arith.constant 0 : index
    %24 = vector.load %arg1[%c0_47, %c0_48] : memref<128x8xf32, #tpu.memory_space<vmem>>, vector<128x8xf32>
    %cst = arith.constant dense<0.000000e+00> : vector<128x32xf32>
    %25 = tpu.matmul %24, %0, %cst {dimension_numbers = #tpu.dot_dimension_numbers<[1], [0], [0], [1], [0, 0, 1, 1], [], []>} : vector<128x8xf32>, vector<8x32xf32>, vector<128x32xf32> -> vector<128x32xf32>
    %26 = vector.broadcast %1 : vector<1x32xf32> to vector<128x32xf32>
    %27 = arith.addf %25, %26 : vector<128x32xf32>
    %c0_49 = arith.constant 0 : index
    %c0_50 = arith.constant 0 : index
    %28 = vector.load %arg2[%c0_49, %c0_50] : memref<256x6xf32, #tpu.memory_space<vmem>>, vector<256x6xf32>
    %cst_51 = arith.constant dense<0.000000e+00> : vector<256x32xf32>
    %29 = tpu.matmul %28, %2, %cst_51 {dimension_numbers = #tpu.dot_dimension_numbers<[1], [0], [0], [1], [0, 0, 1, 1], [], []>} : vector<256x6xf32>, vector<6x32xf32>, vector<256x32xf32> -> vector<256x32xf32>
    %30 = vector.broadcast %3 : vector<1x32xf32> to vector<256x32xf32>
    %31 = arith.addf %29, %30 : vector<256x32xf32>
    %cst_52 = arith.constant dense<0.000000e+00> : vector<256x32xf32>
    %32 = tpu.matmul %22, %27, %cst_52 {dimension_numbers = #tpu.dot_dimension_numbers<[1], [0], [0], [1], [0, 0, 1, 1], [], []>} : vector<256x128xf32>, vector<128x32xf32>, vector<256x32xf32> -> vector<256x32xf32>
    %33 = arith.addf %32, %31 : vector<256x32xf32>
    %cst_53 = arith.constant 0.000000e+00 : f32
    %34 = vector.broadcast %cst_53 : f32 to vector<256x32xf32>
    %35 = arith.maximumf %33, %34 : vector<256x32xf32>
    %cst_54 = arith.constant 1.000000e-07 : f32
    %36 = vector.broadcast %cst_54 : f32 to vector<256x32xf32>
    %37 = arith.addf %35, %36 : vector<256x32xf32>
    %cst_55 = arith.constant dense<0xFF800000> : vector<32xf32>
    %38 = vector.multi_reduction <maximumf>, %37, %cst_55 [0] : vector<256x32xf32> to vector<32xf32>
    %39 = vector.shape_cast %38 : vector<32xf32> to vector<1x32xf32>
    %40 = vector.broadcast %39 : vector<1x32xf32> to vector<256x32xf32>
    %41 = arith.subf %37, %40 : vector<256x32xf32>
    %42 = math.exp %41 : vector<256x32xf32>
    %43 = arith.mulf %42, %37 : vector<256x32xf32>
    %44 = tpu.concatenate %42, %43 in 1 : vector<256x32xf32>, vector<256x32xf32> -> vector<256x64xf32>
    %cst_56 = arith.constant dense<0.000000e+00> : vector<128x64xf32>
    %45 = tpu.matmul %23, %44, %cst_56 {dimension_numbers = #tpu.dot_dimension_numbers<[1], [0], [0], [1], [0, 0, 1, 1], [], []>} : vector<128x256xf32>, vector<256x64xf32>, vector<128x64xf32> -> vector<128x64xf32>
    %46 = vector.extract_strided_slice %45 {offsets = [0, 0], sizes = [128, 32], strides = [1, 1]} : vector<128x64xf32> to vector<128x32xf32>
    %47 = vector.extract_strided_slice %45 {offsets = [0, 32], sizes = [128, 32], strides = [1, 1]} : vector<128x64xf32> to vector<128x32xf32>
    %cst_57 = arith.constant 9.99999968E-21 : f32
    %48 = vector.broadcast %cst_57 : f32 to vector<128x32xf32>
    %49 = arith.maximumf %46, %48 : vector<128x32xf32>
    %50 = tpu.reciprocal %49 {approx = true} : vector<128x32xf32> -> vector<128x32xf32>
    %cst_58 = arith.constant 0.000000e+00 : f32
    %51 = vector.broadcast %cst_58 : f32 to vector<128x32xf32>
    %52 = arith.cmpf ogt, %46, %51 : vector<128x32xf32>
    %53 = arith.mulf %47, %50 : vector<128x32xf32>
    %cst_59 = arith.constant 0.000000e+00 : f32
    %54 = vector.broadcast %cst_59 : f32 to vector<128x32xf32>
    %55 = arith.select %52, %53, %54 : vector<128x32xi1>, vector<128x32xf32>
    %56 = arith.addf %55, %27 : vector<128x32xf32>
    %cst_60 = arith.constant dense<0.000000e+00> : vector<128x64xf32>
    %57 = tpu.matmul %56, %4, %cst_60 {dimension_numbers = #tpu.dot_dimension_numbers<[1], [0], [0], [1], [0, 0, 1, 1], [], []>} : vector<128x32xf32>, vector<32x64xf32>, vector<128x64xf32> -> vector<128x64xf32>
    %58 = vector.broadcast %5 : vector<1x64xf32> to vector<128x64xf32>
    %59 = arith.addf %57, %58 : vector<128x64xf32>
    %cst_61 = arith.constant 0.000000e+00 : f32
    %60 = vector.broadcast %cst_61 : f32 to vector<128x64xf32>
    %61 = arith.maximumf %59, %60 : vector<128x64xf32>
    %cst_62 = arith.constant dense<0.000000e+00> : vector<128x32xf32>
    %62 = tpu.matmul %61, %6, %cst_62 {dimension_numbers = #tpu.dot_dimension_numbers<[1], [0], [0], [1], [0, 0, 1, 1], [], []>} : vector<128x64xf32>, vector<64x32xf32>, vector<128x32xf32> -> vector<128x32xf32>
    %63 = vector.broadcast %7 : vector<1x32xf32> to vector<128x32xf32>
    %64 = arith.addf %62, %63 : vector<128x32xf32>
    %cst_63 = arith.constant 0.000000e+00 : f32
    %65 = vector.broadcast %cst_63 : f32 to vector<128x32xf32>
    %66 = arith.maximumf %64, %65 : vector<128x32xf32>
    %cst_64 = arith.constant dense<0.000000e+00> : vector<256x32xf32>
    %67 = tpu.matmul %22, %66, %cst_64 {dimension_numbers = #tpu.dot_dimension_numbers<[1], [0], [0], [1], [0, 0, 1, 1], [], []>} : vector<256x128xf32>, vector<128x32xf32>, vector<256x32xf32> -> vector<256x32xf32>
    %68 = arith.addf %67, %31 : vector<256x32xf32>
    %cst_65 = arith.constant 0.000000e+00 : f32
    %69 = vector.broadcast %cst_65 : f32 to vector<256x32xf32>
    %70 = arith.maximumf %68, %69 : vector<256x32xf32>
    %cst_66 = arith.constant 1.000000e-07 : f32
    %71 = vector.broadcast %cst_66 : f32 to vector<256x32xf32>
    %72 = arith.addf %70, %71 : vector<256x32xf32>
    %cst_67 = arith.constant dense<0xFF800000> : vector<32xf32>
    %73 = vector.multi_reduction <maximumf>, %72, %cst_67 [0] : vector<256x32xf32> to vector<32xf32>
    %74 = vector.shape_cast %73 : vector<32xf32> to vector<1x32xf32>
    %75 = vector.broadcast %74 : vector<1x32xf32> to vector<256x32xf32>
    %76 = arith.subf %72, %75 : vector<256x32xf32>
    %77 = math.exp %76 : vector<256x32xf32>
    %78 = arith.mulf %77, %72 : vector<256x32xf32>
    %79 = tpu.concatenate %77, %78 in 1 : vector<256x32xf32>, vector<256x32xf32> -> vector<256x64xf32>
    %cst_68 = arith.constant dense<0.000000e+00> : vector<128x64xf32>
    %80 = tpu.matmul %23, %79, %cst_68 {dimension_numbers = #tpu.dot_dimension_numbers<[1], [0], [0], [1], [0, 0, 1, 1], [], []>} : vector<128x256xf32>, vector<256x64xf32>, vector<128x64xf32> -> vector<128x64xf32>
    %81 = vector.extract_strided_slice %80 {offsets = [0, 0], sizes = [128, 32], strides = [1, 1]} : vector<128x64xf32> to vector<128x32xf32>
    %82 = vector.extract_strided_slice %80 {offsets = [0, 32], sizes = [128, 32], strides = [1, 1]} : vector<128x64xf32> to vector<128x32xf32>
    %cst_69 = arith.constant 9.99999968E-21 : f32
    %83 = vector.broadcast %cst_69 : f32 to vector<128x32xf32>
    %84 = arith.maximumf %81, %83 : vector<128x32xf32>
    %85 = tpu.reciprocal %84 {approx = true} : vector<128x32xf32> -> vector<128x32xf32>
    %cst_70 = arith.constant 0.000000e+00 : f32
    %86 = vector.broadcast %cst_70 : f32 to vector<128x32xf32>
    %87 = arith.cmpf ogt, %81, %86 : vector<128x32xf32>
    %88 = arith.mulf %82, %85 : vector<128x32xf32>
    %cst_71 = arith.constant 0.000000e+00 : f32
    %89 = vector.broadcast %cst_71 : f32 to vector<128x32xf32>
    %90 = arith.select %87, %88, %89 : vector<128x32xi1>, vector<128x32xf32>
    %91 = arith.addf %90, %66 : vector<128x32xf32>
    %cst_72 = arith.constant dense<0.000000e+00> : vector<128x64xf32>
    %92 = tpu.matmul %91, %8, %cst_72 {dimension_numbers = #tpu.dot_dimension_numbers<[1], [0], [0], [1], [0, 0, 1, 1], [], []>} : vector<128x32xf32>, vector<32x64xf32>, vector<128x64xf32> -> vector<128x64xf32>
    %93 = vector.broadcast %9 : vector<1x64xf32> to vector<128x64xf32>
    %94 = arith.addf %92, %93 : vector<128x64xf32>
    %cst_73 = arith.constant 0.000000e+00 : f32
    %95 = vector.broadcast %cst_73 : f32 to vector<128x64xf32>
    %96 = arith.maximumf %94, %95 : vector<128x64xf32>
    %cst_74 = arith.constant dense<0.000000e+00> : vector<128x32xf32>
    %97 = tpu.matmul %96, %10, %cst_74 {dimension_numbers = #tpu.dot_dimension_numbers<[1], [0], [0], [1], [0, 0, 1, 1], [], []>} : vector<128x64xf32>, vector<64x32xf32>, vector<128x32xf32> -> vector<128x32xf32>
    %98 = vector.broadcast %11 : vector<1x32xf32> to vector<128x32xf32>
    %99 = arith.addf %97, %98 : vector<128x32xf32>
    %cst_75 = arith.constant 0.000000e+00 : f32
    %100 = vector.broadcast %cst_75 : f32 to vector<128x32xf32>
    %101 = arith.maximumf %99, %100 : vector<128x32xf32>
    %cst_76 = arith.constant dense<0.000000e+00> : vector<256x32xf32>
    %102 = tpu.matmul %22, %101, %cst_76 {dimension_numbers = #tpu.dot_dimension_numbers<[1], [0], [0], [1], [0, 0, 1, 1], [], []>} : vector<256x128xf32>, vector<128x32xf32>, vector<256x32xf32> -> vector<256x32xf32>
    %103 = arith.addf %102, %31 : vector<256x32xf32>
    %cst_77 = arith.constant 0.000000e+00 : f32
    %104 = vector.broadcast %cst_77 : f32 to vector<256x32xf32>
    %105 = arith.maximumf %103, %104 : vector<256x32xf32>
    %cst_78 = arith.constant 1.000000e-07 : f32
    %106 = vector.broadcast %cst_78 : f32 to vector<256x32xf32>
    %107 = arith.addf %105, %106 : vector<256x32xf32>
    %cst_79 = arith.constant dense<0xFF800000> : vector<32xf32>
    %108 = vector.multi_reduction <maximumf>, %107, %cst_79 [0] : vector<256x32xf32> to vector<32xf32>
    %109 = vector.shape_cast %108 : vector<32xf32> to vector<1x32xf32>
    %110 = vector.broadcast %109 : vector<1x32xf32> to vector<256x32xf32>
    %111 = arith.subf %107, %110 : vector<256x32xf32>
    %112 = math.exp %111 : vector<256x32xf32>
    %113 = arith.mulf %112, %107 : vector<256x32xf32>
    %114 = tpu.concatenate %112, %113 in 1 : vector<256x32xf32>, vector<256x32xf32> -> vector<256x64xf32>
    %cst_80 = arith.constant dense<0.000000e+00> : vector<128x64xf32>
    %115 = tpu.matmul %23, %114, %cst_80 {dimension_numbers = #tpu.dot_dimension_numbers<[1], [0], [0], [1], [0, 0, 1, 1], [], []>} : vector<128x256xf32>, vector<256x64xf32>, vector<128x64xf32> -> vector<128x64xf32>
    %116 = vector.extract_strided_slice %115 {offsets = [0, 0], sizes = [128, 32], strides = [1, 1]} : vector<128x64xf32> to vector<128x32xf32>
    %117 = vector.extract_strided_slice %115 {offsets = [0, 32], sizes = [128, 32], strides = [1, 1]} : vector<128x64xf32> to vector<128x32xf32>
    %cst_81 = arith.constant 9.99999968E-21 : f32
    %118 = vector.broadcast %cst_81 : f32 to vector<128x32xf32>
    %119 = arith.maximumf %116, %118 : vector<128x32xf32>
    %120 = tpu.reciprocal %119 {approx = true} : vector<128x32xf32> -> vector<128x32xf32>
    %cst_82 = arith.constant 0.000000e+00 : f32
    %121 = vector.broadcast %cst_82 : f32 to vector<128x32xf32>
    %122 = arith.cmpf ogt, %116, %121 : vector<128x32xf32>
    %123 = arith.mulf %117, %120 : vector<128x32xf32>
    %cst_83 = arith.constant 0.000000e+00 : f32
    %124 = vector.broadcast %cst_83 : f32 to vector<128x32xf32>
    %125 = arith.select %122, %123, %124 : vector<128x32xi1>, vector<128x32xf32>
    %126 = arith.addf %125, %101 : vector<128x32xf32>
    %cst_84 = arith.constant dense<0.000000e+00> : vector<128x64xf32>
    %127 = tpu.matmul %126, %12, %cst_84 {dimension_numbers = #tpu.dot_dimension_numbers<[1], [0], [0], [1], [0, 0, 1, 1], [], []>} : vector<128x32xf32>, vector<32x64xf32>, vector<128x64xf32> -> vector<128x64xf32>
    %128 = vector.broadcast %13 : vector<1x64xf32> to vector<128x64xf32>
    %129 = arith.addf %127, %128 : vector<128x64xf32>
    %cst_85 = arith.constant 0.000000e+00 : f32
    %130 = vector.broadcast %cst_85 : f32 to vector<128x64xf32>
    %131 = arith.maximumf %129, %130 : vector<128x64xf32>
    %cst_86 = arith.constant dense<0.000000e+00> : vector<128x32xf32>
    %132 = tpu.matmul %131, %14, %cst_86 {dimension_numbers = #tpu.dot_dimension_numbers<[1], [0], [0], [1], [0, 0, 1, 1], [], []>} : vector<128x64xf32>, vector<64x32xf32>, vector<128x32xf32> -> vector<128x32xf32>
    %133 = vector.broadcast %15 : vector<1x32xf32> to vector<128x32xf32>
    %134 = arith.addf %132, %133 : vector<128x32xf32>
    %cst_87 = arith.constant 0.000000e+00 : f32
    %135 = vector.broadcast %cst_87 : f32 to vector<128x32xf32>
    %136 = arith.maximumf %134, %135 : vector<128x32xf32>
    %c0_88 = arith.constant 0 : index
    %c0_89 = arith.constant 0 : index
    %137 = vector.load %arg5[%c0_88, %c0_89] : memref<8x128xf32, #tpu.memory_space<vmem>>, vector<8x128xf32>
    %cst_90 = arith.constant dense<0.000000e+00> : vector<8x32xf32>
    %138 = tpu.matmul %137, %136, %cst_90 {dimension_numbers = #tpu.dot_dimension_numbers<[1], [0], [0], [1], [0, 0, 1, 1], [], []>} : vector<8x128xf32>, vector<128x32xf32>, vector<8x32xf32> -> vector<8x32xf32>
    %c0_91 = arith.constant 0 : index
    %c0_92 = arith.constant 0 : index
    %139 = vector.load %arg6[%c0_91, %c0_92] : memref<8x4xf32, #tpu.memory_space<vmem>>, vector<8x4xf32>
    %140 = tpu.concatenate %138, %139 in 1 : vector<8x32xf32>, vector<8x4xf32> -> vector<8x36xf32>
    %cst_93 = arith.constant dense<0.000000e+00> : vector<8x32xf32>
    %141 = tpu.matmul %140, %16, %cst_93 {dimension_numbers = #tpu.dot_dimension_numbers<[1], [0], [0], [1], [0, 0, 1, 1], [], []>} : vector<8x36xf32>, vector<36x32xf32>, vector<8x32xf32> -> vector<8x32xf32>
    %142 = vector.broadcast %17 : vector<1x32xf32> to vector<8x32xf32>
    %143 = arith.addf %141, %142 : vector<8x32xf32>
    %cst_94 = arith.constant 0.000000e+00 : f32
    %144 = vector.broadcast %cst_94 : f32 to vector<8x32xf32>
    %145 = arith.maximumf %143, %144 : vector<8x32xf32>
    %cst_95 = arith.constant dense<0.000000e+00> : vector<8x32xf32>
    %146 = tpu.matmul %145, %18, %cst_95 {dimension_numbers = #tpu.dot_dimension_numbers<[1], [0], [0], [1], [0, 0, 1, 1], [], []>} : vector<8x32xf32>, vector<32x32xf32>, vector<8x32xf32> -> vector<8x32xf32>
    %147 = vector.broadcast %19 : vector<1x32xf32> to vector<8x32xf32>
    %148 = arith.addf %146, %147 : vector<8x32xf32>
    %cst_96 = arith.constant 0.000000e+00 : f32
    %149 = vector.broadcast %cst_96 : f32 to vector<8x32xf32>
    %150 = arith.maximumf %148, %149 : vector<8x32xf32>
    %cst_97 = arith.constant dense<0.000000e+00> : vector<8x3xf32>
    %151 = tpu.matmul %150, %20, %cst_97 {dimension_numbers = #tpu.dot_dimension_numbers<[1], [0], [0], [1], [0, 0, 1, 1], [], []>} : vector<8x32xf32>, vector<32x3xf32>, vector<8x3xf32> -> vector<8x3xf32>
    %152 = vector.broadcast %21 : vector<1x3xf32> to vector<8x3xf32>
    %153 = arith.addf %151, %152 : vector<8x3xf32>
    %154 = math.absf %153 : vector<8x3xf32>
    %cst_98 = arith.constant 0.000000e+00 : f32
    %155 = vector.broadcast %cst_98 : f32 to vector<8x3xf32>
    %156 = arith.subf %155, %154 : vector<8x3xf32>
    %157 = math.exp %156 : vector<8x3xf32>
    %cst_99 = arith.constant 0.000000e+00 : f32
    %158 = vector.broadcast %cst_99 : f32 to vector<8x3xf32>
    %159 = arith.cmpf oge, %153, %158 : vector<8x3xf32>
    %cst_100 = arith.constant 1.000000e+00 : f32
    %160 = vector.broadcast %cst_100 : f32 to vector<8x3xf32>
    %161 = arith.addf %160, %157 : vector<8x3xf32>
    %cst_101 = arith.constant 1.000000e+00 : f32
    %162 = vector.broadcast %cst_101 : f32 to vector<8x3xf32>
    %163 = arith.divf %162, %161 : vector<8x3xf32>
    %cst_102 = arith.constant 1.000000e+00 : f32
    %164 = vector.broadcast %cst_102 : f32 to vector<8x3xf32>
    %165 = arith.addf %164, %157 : vector<8x3xf32>
    %166 = arith.divf %157, %165 : vector<8x3xf32>
    %167 = arith.select %159, %163, %166 : vector<8x3xi1>, vector<8x3xf32>
    %c0_103 = arith.constant 0 : index
    %c0_104 = arith.constant 0 : index
    %168 = vector.load %arg29[%c0_103, %c0_104] : memref<8x3xf32, #tpu.memory_space<vmem>>, vector<8x3xf32>
    tpu.vector_store %arg29[%c0_103, %c0_104], %167 {strides = array<i32>} : memref<8x3xf32, #tpu.memory_space<vmem>>, vector<8x3xf32>,
    return
  }
  func.func @transform_0(%arg0: i32) -> (i32, i32) {
    %c0_i32 = arith.constant 0 : i32
    %c0_i32_0 = arith.constant 0 : i32
    return %arg0, %c0_i32 : i32, i32
  }
  func.func @transform_1(%arg0: i32) -> (i32, i32) {
    %c0_i32 = arith.constant 0 : i32
    %c0_i32_0 = arith.constant 0 : i32
    return %arg0, %c0_i32 : i32, i32
  }
  func.func @transform_2(%arg0: i32) -> (i32, i32) {
    %c0_i32 = arith.constant 0 : i32
    %c0_i32_0 = arith.constant 0 : i32
    return %arg0, %c0_i32 : i32, i32
  }
  func.func @transform_3(%arg0: i32) -> (i32, i32) {
    %c0_i32 = arith.constant 0 : i32
    %c0_i32_0 = arith.constant 0 : i32
    return %arg0, %c0_i32 : i32, i32
  }
  func.func @transform_4(%arg0: i32) -> (i32, i32) {
    %c0_i32 = arith.constant 0 : i32
    %c0_i32_0 = arith.constant 0 : i32
    return %arg0, %c0_i32 : i32, i32
  }
  func.func @transform_5(%arg0: i32) -> (i32, i32) {
    %c0_i32 = arith.constant 0 : i32
    %c0_i32_0 = arith.constant 0 : i32
    return %arg0, %c0_i32 : i32, i32
  }
  func.func @transform_6(%arg0: i32) -> (i32, i32) {
    %c0_i32 = arith.constant 0 : i32
    %c0_i32_0 = arith.constant 0 : i32
    %c0_i32_1 = arith.constant 0 : i32
    return %c0_i32, %c0_i32_0 : i32, i32
  }
  func.func @transform_7(%arg0: i32) -> (i32, i32) {
    %c0_i32 = arith.constant 0 : i32
    %c0_i32_0 = arith.constant 0 : i32
    %c0_i32_1 = arith.constant 0 : i32
    return %c0_i32, %c0_i32_0 : i32, i32
  }
  func.func @transform_8(%arg0: i32) -> (i32, i32) {
    %c0_i32 = arith.constant 0 : i32
    %c0_i32_0 = arith.constant 0 : i32
    %c0_i32_1 = arith.constant 0 : i32
    return %c0_i32, %c0_i32_0 : i32, i32
  }
  func.func @transform_9(%arg0: i32) -> (i32, i32) {
    %c0_i32 = arith.constant 0 : i32
    %c0_i32_0 = arith.constant 0 : i32
    %c0_i32_1 = arith.constant 0 : i32
    return %c0_i32, %c0_i32_0 : i32, i32
  }
  func.func @transform_10(%arg0: i32) -> (i32, i32) {
    %c0_i32 = arith.constant 0 : i32
    %c0_i32_0 = arith.constant 0 : i32
    %c0_i32_1 = arith.constant 0 : i32
    return %c0_i32, %c0_i32_0 : i32, i32
  }
  func.func @transform_11(%arg0: i32) -> (i32, i32) {
    %c0_i32 = arith.constant 0 : i32
    %c0_i32_0 = arith.constant 0 : i32
    %c0_i32_1 = arith.constant 0 : i32
    return %c0_i32, %c0_i32_0 : i32, i32
  }
  func.func @transform_12(%arg0: i32) -> (i32, i32) {
    %c0_i32 = arith.constant 0 : i32
    %c0_i32_0 = arith.constant 0 : i32
    %c0_i32_1 = arith.constant 0 : i32
    return %c0_i32, %c0_i32_0 : i32, i32
  }
  func.func @transform_13(%arg0: i32) -> (i32, i32) {
    %c0_i32 = arith.constant 0 : i32
    %c0_i32_0 = arith.constant 0 : i32
    %c0_i32_1 = arith.constant 0 : i32
    return %c0_i32, %c0_i32_0 : i32, i32
  }
  func.func @transform_14(%arg0: i32) -> (i32, i32) {
    %c0_i32 = arith.constant 0 : i32
    %c0_i32_0 = arith.constant 0 : i32
    %c0_i32_1 = arith.constant 0 : i32
    return %c0_i32, %c0_i32_0 : i32, i32
  }
  func.func @transform_15(%arg0: i32) -> (i32, i32) {
    %c0_i32 = arith.constant 0 : i32
    %c0_i32_0 = arith.constant 0 : i32
    %c0_i32_1 = arith.constant 0 : i32
    return %c0_i32, %c0_i32_0 : i32, i32
  }
  func.func @transform_16(%arg0: i32) -> (i32, i32) {
    %c0_i32 = arith.constant 0 : i32
    %c0_i32_0 = arith.constant 0 : i32
    %c0_i32_1 = arith.constant 0 : i32
    return %c0_i32, %c0_i32_0 : i32, i32
  }
  func.func @transform_17(%arg0: i32) -> (i32, i32) {
    %c0_i32 = arith.constant 0 : i32
    %c0_i32_0 = arith.constant 0 : i32
    %c0_i32_1 = arith.constant 0 : i32
    return %c0_i32, %c0_i32_0 : i32, i32
  }
  func.func @transform_18(%arg0: i32) -> (i32, i32) {
    %c0_i32 = arith.constant 0 : i32
    %c0_i32_0 = arith.constant 0 : i32
    %c0_i32_1 = arith.constant 0 : i32
    return %c0_i32, %c0_i32_0 : i32, i32
  }
  func.func @transform_19(%arg0: i32) -> (i32, i32) {
    %c0_i32 = arith.constant 0 : i32
    %c0_i32_0 = arith.constant 0 : i32
    %c0_i32_1 = arith.constant 0 : i32
    return %c0_i32, %c0_i32_0 : i32, i32
  }
  func.func @transform_20(%arg0: i32) -> (i32, i32) {
    %c0_i32 = arith.constant 0 : i32
    %c0_i32_0 = arith.constant 0 : i32
    %c0_i32_1 = arith.constant 0 : i32
    return %c0_i32, %c0_i32_0 : i32, i32
  }
  func.func @transform_21(%arg0: i32) -> (i32, i32) {
    %c0_i32 = arith.constant 0 : i32
    %c0_i32_0 = arith.constant 0 : i32
    %c0_i32_1 = arith.constant 0 : i32
    return %c0_i32, %c0_i32_0 : i32, i32
  }
  func.func @transform_22(%arg0: i32) -> (i32, i32) {
    %c0_i32 = arith.constant 0 : i32
    %c0_i32_0 = arith.constant 0 : i32
    %c0_i32_1 = arith.constant 0 : i32
    return %c0_i32, %c0_i32_0 : i32, i32
  }
  func.func @transform_23(%arg0: i32) -> (i32, i32) {
    %c0_i32 = arith.constant 0 : i32
    %c0_i32_0 = arith.constant 0 : i32
    %c0_i32_1 = arith.constant 0 : i32
    return %c0_i32, %c0_i32_0 : i32, i32
  }
  func.func @transform_24(%arg0: i32) -> (i32, i32) {
    %c0_i32 = arith.constant 0 : i32
    %c0_i32_0 = arith.constant 0 : i32
    %c0_i32_1 = arith.constant 0 : i32
    return %c0_i32, %c0_i32_0 : i32, i32
  }
  func.func @transform_25(%arg0: i32) -> (i32, i32) {
    %c0_i32 = arith.constant 0 : i32
    %c0_i32_0 = arith.constant 0 : i32
    %c0_i32_1 = arith.constant 0 : i32
    return %c0_i32, %c0_i32_0 : i32, i32
  }
  func.func @transform_26(%arg0: i32) -> (i32, i32) {
    %c0_i32 = arith.constant 0 : i32
    %c0_i32_0 = arith.constant 0 : i32
    %c0_i32_1 = arith.constant 0 : i32
    return %c0_i32, %c0_i32_0 : i32, i32
  }
  func.func @transform_27(%arg0: i32) -> (i32, i32) {
    %c0_i32 = arith.constant 0 : i32
    %c0_i32_0 = arith.constant 0 : i32
    %c0_i32_1 = arith.constant 0 : i32
    return %c0_i32, %c0_i32_0 : i32, i32
  }
  func.func @transform_28(%arg0: i32) -> (i32, i32) {
    %c0_i32 = arith.constant 0 : i32
    %c0_i32_0 = arith.constant 0 : i32
    return %arg0, %c0_i32 : i32, i32
  }
}

</mosaic_0001>

<llo_original>
// kernel: tpu_custom_call.1
$region0: #{tpu_custom_call.1}
  #allocation0 [shape = 'u32[]', space=smem, size = 0x4, offset = 0x4, fixed_abs, tag = 'smem constant byte address 0x4 - core index']
  #allocation1 [shape = 'u32[72,128]{1,0:T(1,128)}', space=vmem, size = 0x9000, scoped, tag = 'internal scratch']
  %s0 = inlined_call_operand.vmem [shape: f32[256,8], index: 0, kind: input, shape index: {}]
  %s1 = inlined_call_operand.vmem [shape: f32[512,6], index: 1, kind: input, shape index: {}]
  %s2 = inlined_call_operand.vmem [shape: f32[512,128], index: 2, kind: input, shape index: {}]
  %s3 = inlined_call_operand.hbm [shape: f32[256,256], index: 3, kind: input, shape index: {}]
  %s4 = inlined_call_operand.vmem [shape: f32[16,128], index: 4, kind: input, shape index: {}]
  %s5 = inlined_call_operand.vmem [shape: f32[16,4], index: 5, kind: input, shape index: {}]
  %s6 = inlined_call_operand.vmem [shape: f32[8,32], index: 6, kind: input, shape index: {}]
  %s7 = inlined_call_operand.vmem [shape: f32[1,32], index: 7, kind: input, shape index: {}]
  %s8 = inlined_call_operand.vmem [shape: f32[6,32], index: 8, kind: input, shape index: {}]
  %s9 = inlined_call_operand.vmem [shape: f32[1,32], index: 9, kind: input, shape index: {}]
  %s10 = inlined_call_operand.vmem [shape: f32[32,64], index: 10, kind: input, shape index: {}]
  %s11 = inlined_call_operand.vmem [shape: f32[1,64], index: 11, kind: input, shape index: {}]
  %s12 = inlined_call_operand.vmem [shape: f32[64,32], index: 12, kind: input, shape index: {}]
  %s13 = inlined_call_operand.vmem [shape: f32[1,32], index: 13, kind: input, shape index: {}]
  %s14 = inlined_call_operand.vmem [shape: f32[32,64], index: 14, kind: input, shape index: {}]
  %s15 = inlined_call_operand.vmem [shape: f32[1,64], index: 15, kind: input, shape index: {}]
  %s16 = inlined_call_operand.vmem [shape: f32[64,32], index: 16, kind: input, shape index: {}]
  %s17 = inlined_call_operand.vmem [shape: f32[1,32], index: 17, kind: input, shape index: {}]
  %s18 = inlined_call_operand.vmem [shape: f32[32,64], index: 18, kind: input, shape index: {}]
  %s19 = inlined_call_operand.vmem [shape: f32[1,64], index: 19, kind: input, shape index: {}]
  %s20 = inlined_call_operand.vmem [shape: f32[64,32], index: 20, kind: input, shape index: {}]
  %s21 = inlined_call_operand.vmem [shape: f32[1,32], index: 21, kind: input, shape index: {}]
  %s22 = inlined_call_operand.vmem [shape: f32[36,32], index: 22, kind: input, shape index: {}]
  %s23 = inlined_call_operand.vmem [shape: f32[1,32], index: 23, kind: input, shape index: {}]
  %s24 = inlined_call_operand.vmem [shape: f32[32,32], index: 24, kind: input, shape index: {}]
  %s25 = inlined_call_operand.vmem [shape: f32[1,32], index: 25, kind: input, shape index: {}]
  %s26 = inlined_call_operand.vmem [shape: f32[32,3], index: 26, kind: input, shape index: {}]
  %s27 = inlined_call_operand.vmem [shape: f32[1,3], index: 27, kind: input, shape index: {}]
  %s28 = inlined_call_operand.vmem [shape: f32[16,3], index: 28, kind: output, shape index: {}]
  %s29 = sld [smem:[#allocation0]]
  $region149: #{tpu_custom_call.1} parent=0
    _
  %s31 = ssub.s32 1, %s29
  %s32 = scalar_select 0, %s31, %s29
  $region1: #{tpu_custom_call.1} parent=0
    #allocation2 [shape = 'u8[262144]{0}', space=vmem, size = 0x40000, scoped, tag = 'input window, operand 3']
    #allocation3 [shape = 's32[2]{0}', space=sflag, size = 0x8, scoped, tag = 'scoped memory for tpu_custom_call.1']
    %33 = vsyncpa [#allocation3], 0
    %s34 = scalar_lea.sflag [#allocation3], 1
    %35 = vsyncpa %s34, 0
    loop: start=0, step=1, limit=4
    $region2: #{tpu_custom_call.1} parent=1 // loop_pre_header
      _
    $region3: #{tpu_custom_call.1} parent=1 // loop_header
      %s37 = sphi 0, %s41
      %p38 = scmp.ge.s32.totalorder %s37, 4
      %s47 = sphi 0, %s49
      %s50 = sphi 0, %s47
      %s51 = sphi 0, %s50
      %s67 = sphi 0, %s51
      %s73 = sphi 0, %s75
      %s76 = sphi 0, %s73
      %s77 = sphi 0, %s76
      %s93 = sphi 0, %s77
      %s99 = sphi 0, %s101
      %s102 = sphi 0, %s99
      %s103 = sphi 0, %s102
      %s119 = sphi 0, %s103
      %s125 = sphi 0, %s127
      %s128 = sphi 0, %s125
      %s129 = sphi 0, %s128
      %s145 = sphi 0, %s129
      %s151 = sphi 0, %s153
      %s154 = sphi 0, %s151
      %s155 = sphi 0, %s154
      %s171 = sphi 0, %s155
      %s177 = sphi 0, %s179
      %s180 = sphi 0, %s177
      %s181 = sphi 0, %s180
      %s197 = sphi 0, %s181
      %s201 = sphi 0, %s201
      %s203 = sphi 0, %s201
      %s204 = sphi 0, %s203
      %s218 = sphi 0, %s204
      %s222 = sphi 0, %s222
      %s224 = sphi 0, %s222
      %s225 = sphi 0, %s224
      %s239 = sphi 0, %s225
      %s243 = sphi 0, %s243
      %s245 = sphi 0, %s243
      %s246 = sphi 0, %s245
      %s260 = sphi 0, %s246
      %s264 = sphi 0, %s264
      %s266 = sphi 0, %s264
      %s267 = sphi 0, %s266
      %s281 = sphi 0, %s267
      %s285 = sphi 0, %s285
      %s287 = sphi 0, %s285
      %s288 = sphi 0, %s287
      %s302 = sphi 0, %s288
      %s306 = sphi 0, %s306
      %s308 = sphi 0, %s306
      %s309 = sphi 0, %s308
      %s323 = sphi 0, %s309
      %s327 = sphi 0, %s327
      %s329 = sphi 0, %s327
      %s330 = sphi 0, %s329
      %s344 = sphi 0, %s330
      %s348 = sphi 0, %s348
      %s350 = sphi 0, %s348
      %s351 = sphi 0, %s350
      %s365 = sphi 0, %s351
      %s369 = sphi 0, %s369
      %s371 = sphi 0, %s369
      %s372 = sphi 0, %s371
      %s386 = sphi 0, %s372
      %s390 = sphi 0, %s390
      %s392 = sphi 0, %s390
      %s393 = sphi 0, %s392
      %s407 = sphi 0, %s393
      %s411 = sphi 0, %s411
      %s413 = sphi 0, %s411
      %s414 = sphi 0, %s413
      %s428 = sphi 0, %s414
      %s432 = sphi 0, %s432
      %s434 = sphi 0, %s432
      %s435 = sphi 0, %s434
      %s449 = sphi 0, %s435
      %s453 = sphi 0, %s453
      %s455 = sphi 0, %s453
      %s456 = sphi 0, %s455
      %s470 = sphi 0, %s456
      %s474 = sphi 0, %s474
      %s476 = sphi 0, %s474
      %s477 = sphi 0, %s476
      %s491 = sphi 0, %s477
      %s495 = sphi 0, %s495
      %s497 = sphi 0, %s495
      %s498 = sphi 0, %s497
      %s512 = sphi 0, %s498
      %s516 = sphi 0, %s516
      %s518 = sphi 0, %s516
      %s519 = sphi 0, %s518
      %s533 = sphi 0, %s519
      %s537 = sphi 0, %s537
      %s539 = sphi 0, %s537
      %s540 = sphi 0, %s539
      %s554 = sphi 0, %s540
      %s558 = sphi 0, %s558
      %s560 = sphi 0, %s558
      %s561 = sphi 0, %s560
      %s575 = sphi 0, %s561
      %s579 = sphi 0, %s579
      %s581 = sphi 0, %s579
      %s582 = sphi 0, %s581
      %s596 = sphi 0, %s582
      %s600 = sphi 0, %s600
      %s602 = sphi 0, %s600
      %s603 = sphi 0, %s602
      %s617 = sphi 0, %s603
      %s621 = sphi 0, %s621
      %s623 = sphi 0, %s621
      %s624 = sphi 0, %s623
      %s638 = sphi 0, %s624
      %s642 = sphi 0, %s642
      %s644 = sphi 0, %s642
      %s645 = sphi 0, %s644
      %s659 = sphi 0, %s645
      %s665 = sphi 0, %s667
      %s668 = sphi 0, %s665
      %s669 = sphi 0, %s668
      %s685 = sphi 0, %s669
    $region4: #{tpu_custom_call.1} parent=1 // loop_header_branch
      %40 = sbr.rel (%p38) target = $region8
    $region5: #{tpu_custom_call.1} parent=1 // loop_body
      %s42 = ssub.s32 %s37, 1
      %s43 = ssub.s32 %s37, 2
      %s44 = sadd.s32 %s37, 1
      %s45 = ssub.s32 %s37, %s44
      %p46 = scmp.eq.s32.totalorder %s45, 0
      %s48 = sadd.s32 %s47, 1
      %s49 = scalar_select %p46, %s47, %s48
      %p52 = pneg %p46
      %p53 = scmp.eq.s32.totalorder %s37, 1
      %p54 = por %p52, %p53
      %p55 = scmp.ne.s32.totalorder %s47, %s50
      %p56 = scmp.eq.s32.totalorder %s37, 0
      %p57 = por %p55, %p56
      %p58 = scmp.ne.s32.totalorder %s47, %s50
      %p59 = scmp.eq.s32.totalorder %s42, 1
      %p60 = por %p58, %p59
      %p61 = scmp.ne.s32.totalorder %s50, %s51
      %p62 = scmp.eq.s32.totalorder %s42, 0
      %p63 = por %p61, %p62
      %p64 = scmp.ne.s32.totalorder %s50, %s51
      %p65 = scmp.eq.s32.totalorder %s43, 1
      %p66 = por %p64, %p65
      %p68 = scmp.ne.s32.totalorder %s51, %s67
      %p69 = scmp.eq.s32.totalorder %s43, 0
      %p70 = por %p68, %p69
      %s71 = ssub.s32 %s37, %s44
      %p72 = scmp.eq.s32.totalorder %s71, 0
      %s74 = sadd.s32 %s73, 1
      %s75 = scalar_select %p72, %s73, %s74
      %p78 = pneg %p72
      %p79 = scmp.eq.s32.totalorder %s37, 1
      %p80 = por %p78, %p79
      %p81 = scmp.ne.s32.totalorder %s73, %s76
      %p82 = scmp.eq.s32.totalorder %s37, 0
      %p83 = por %p81, %p82
      %p84 = scmp.ne.s32.totalorder %s73, %s76
      %p85 = scmp.eq.s32.totalorder %s42, 1
      %p86 = por %p84, %p85
      %p87 = scmp.ne.s32.totalorder %s76, %s77
      %p88 = scmp.eq.s32.totalorder %s42, 0
      %p89 = por %p87, %p88
      %p90 = scmp.ne.s32.totalorder %s76, %s77
      %p91 = scmp.eq.s32.totalorder %s43, 1
      %p92 = por %p90, %p91
      %p94 = scmp.ne.s32.totalorder %s77, %s93
      %p95 = scmp.eq.s32.totalorder %s43, 0
      %p96 = por %p94, %p95
      %s97 = ssub.s32 %s37, %s44
      %p98 = scmp.eq.s32.totalorder %s97, 0
      %s100 = sadd.s32 %s99, 1
      %s101 = scalar_select %p98, %s99, %s100
      %p104 = pneg %p98
      %p105 = scmp.eq.s32.totalorder %s37, 1
      %p106 = por %p104, %p105
      %p107 = scmp.ne.s32.totalorder %s99, %s102
      %p108 = scmp.eq.s32.totalorder %s37, 0
      %p109 = por %p107, %p108
      %p110 = scmp.ne.s32.totalorder %s99, %s102
      %p111 = scmp.eq.s32.totalorder %s42, 1
      %p112 = por %p110, %p111
      %p113 = scmp.ne.s32.totalorder %s102, %s103
      %p114 = scmp.eq.s32.totalorder %s42, 0
      %p115 = por %p113, %p114
      %p116 = scmp.ne.s32.totalorder %s102, %s103
      %p117 = scmp.eq.s32.totalorder %s43, 1
      %p118 = por %p116, %p117
      %p120 = scmp.ne.s32.totalorder %s103, %s119
      %p121 = scmp.eq.s32.totalorder %s43, 0
      %p122 = por %p120, %p121
      %s123 = ssub.s32 %s37, %s44
      %p124 = scmp.eq.s32.totalorder %s123, 0
      %s126 = sadd.s32 %s125, 1
      %s127 = scalar_select %p124, %s125, %s126
      %p130 = pneg %p124
      %p131 = scmp.eq.s32.totalorder %s37, 1
      %p132 = por %p130, %p131
      %p133 = scmp.ne.s32.totalorder %s125, %s128
      %p134 = scmp.eq.s32.totalorder %s37, 0
      %p135 = por %p133, %p134
      %p136 = scmp.ne.s32.totalorder %s125, %s128
      %p137 = scmp.eq.s32.totalorder %s42, 1
      %p138 = por %p136, %p137
      %p139 = scmp.ne.s32.totalorder %s128, %s129
      %p140 = scmp.eq.s32.totalorder %s42, 0
      %p141 = por %p139, %p140
      %p142 = scmp.ne.s32.totalorder %s128, %s129
      %p143 = scmp.eq.s32.totalorder %s43, 1
      %p144 = por %p142, %p143
      %p146 = scmp.ne.s32.totalorder %s129, %s145
      %p147 = scmp.eq.s32.totalorder %s43, 0
      %p148 = por %p146, %p147
      %s149 = ssub.s32 %s37, %s44
      %p150 = scmp.eq.s32.totalorder %s149, 0
      %s152 = sadd.s32 %s151, 1
      %s153 = scalar_select %p150, %s151, %s152
      %p156 = pneg %p150
      %p157 = scmp.eq.s32.totalorder %s37, 1
      %p158 = por %p156, %p157
      %p159 = scmp.ne.s32.totalorder %s151, %s154
      %p160 = scmp.eq.s32.totalorder %s37, 0
      %p161 = por %p159, %p160
      %p162 = scmp.ne.s32.totalorder %s151, %s154
      %p163 = scmp.eq.s32.totalorder %s42, 1
      %p164 = por %p162, %p163
      %p165 = scmp.ne.s32.totalorder %s154, %s155
      %p166 = scmp.eq.s32.totalorder %s42, 0
      %p167 = por %p165, %p166
      %p168 = scmp.ne.s32.totalorder %s154, %s155
      %p169 = scmp.eq.s32.totalorder %s43, 1
      %p170 = por %p168, %p169
      %p172 = scmp.ne.s32.totalorder %s155, %s171
      %p173 = scmp.eq.s32.totalorder %s43, 0
      %p174 = por %p172, %p173
      %s175 = ssub.s32 %s37, %s44
      %p176 = scmp.eq.s32.totalorder %s175, 0
      %s178 = sadd.s32 %s177, 1
      %s179 = scalar_select %p176, %s177, %s178
      %p182 = pneg %p176
      %p183 = scmp.eq.s32.totalorder %s37, 1
      %p184 = por %p182, %p183
      %p185 = scmp.ne.s32.totalorder %s177, %s180
      %p186 = scmp.eq.s32.totalorder %s37, 0
      %p187 = por %p185, %p186
      %p188 = scmp.ne.s32.totalorder %s177, %s180
      %p189 = scmp.eq.s32.totalorder %s42, 1
      %p190 = por %p188, %p189
      %p191 = scmp.ne.s32.totalorder %s180, %s181
      %p192 = scmp.eq.s32.totalorder %s42, 0
      %p193 = por %p191, %p192
      %p194 = scmp.ne.s32.totalorder %s180, %s181
      %p195 = scmp.eq.s32.totalorder %s43, 1
      %p196 = por %p194, %p195
      %p198 = scmp.ne.s32.totalorder %s181, %s197
      %p199 = scmp.eq.s32.totalorder %s43, 0
      %p200 = por %p198, %p199
      %s202 = sadd.s32 %s201, 1
      %p205 = scmp.eq.s32.totalorder %s37, 1
      %p206 = scmp.ne.s32.totalorder %s201, %s203
      %p207 = scmp.eq.s32.totalorder %s37, 0
      %p208 = por %p206, %p207
      %p209 = scmp.ne.s32.totalorder %s201, %s203
      %p210 = scmp.eq.s32.totalorder %s42, 1
      %p211 = por %p209, %p210
      %p212 = scmp.ne.s32.totalorder %s203, %s204
      %p213 = scmp.eq.s32.totalorder %s42, 0
      %p214 = por %p212, %p213
      %p215 = scmp.ne.s32.totalorder %s203, %s204
      %p216 = scmp.eq.s32.totalorder %s43, 1
      %p217 = por %p215, %p216
      %p219 = scmp.ne.s32.totalorder %s204, %s218
      %p220 = scmp.eq.s32.totalorder %s43, 0
      %p221 = por %p219, %p220
      %s223 = sadd.s32 %s222, 1
      %p226 = scmp.eq.s32.totalorder %s37, 1
      %p227 = scmp.ne.s32.totalorder %s222, %s224
      %p228 = scmp.eq.s32.totalorder %s37, 0
      %p229 = por %p227, %p228
      %p230 = scmp.ne.s32.totalorder %s222, %s224
      %p231 = scmp.eq.s32.totalorder %s42, 1
      %p232 = por %p230, %p231
      %p233 = scmp.ne.s32.totalorder %s224, %s225
      %p234 = scmp.eq.s32.totalorder %s42, 0
      %p235 = por %p233, %p234
      %p236 = scmp.ne.s32.totalorder %s224, %s225
      %p237 = scmp.eq.s32.totalorder %s43, 1
      %p238 = por %p236, %p237
      %p240 = scmp.ne.s32.totalorder %s225, %s239
      %p241 = scmp.eq.s32.totalorder %s43, 0
      %p242 = por %p240, %p241
      %s244 = sadd.s32 %s243, 1
      %p247 = scmp.eq.s32.totalorder %s37, 1
      %p248 = scmp.ne.s32.totalorder %s243, %s245
      %p249 = scmp.eq.s32.totalorder %s37, 0
      %p250 = por %p248, %p249
      %p251 = scmp.ne.s32.totalorder %s243, %s245
      %p252 = scmp.eq.s32.totalorder %s42, 1
      %p253 = por %p251, %p252
      %p254 = scmp.ne.s32.totalorder %s245, %s246
      %p255 = scmp.eq.s32.totalorder %s42, 0
      %p256 = por %p254, %p255
      %p257 = scmp.ne.s32.totalorder %s245, %s246
      %p258 = scmp.eq.s32.totalorder %s43, 1
      %p259 = por %p257, %p258
      %p261 = scmp.ne.s32.totalorder %s246, %s260
      %p262 = scmp.eq.s32.totalorder %s43, 0
      %p263 = por %p261, %p262
      %s265 = sadd.s32 %s264, 1
      %p268 = scmp.eq.s32.totalorder %s37, 1
      %p269 = scmp.ne.s32.totalorder %s264, %s266
      %p270 = scmp.eq.s32.totalorder %s37, 0
      %p271 = por %p269, %p270
      %p272 = scmp.ne.s32.totalorder %s264, %s266
      %p273 = scmp.eq.s32.totalorder %s42, 1
      %p274 = por %p272, %p273
      %p275 = scmp.ne.s32.totalorder %s266, %s267
      %p276 = scmp.eq.s32.totalorder %s42, 0
      %p277 = por %p275, %p276
      %p278 = scmp.ne.s32.totalorder %s266, %s267
      %p279 = scmp.eq.s32.totalorder %s43, 1
      %p280 = por %p278, %p279
      %p282 = scmp.ne.s32.totalorder %s267, %s281
      %p283 = scmp.eq.s32.totalorder %s43, 0
      %p284 = por %p282, %p283
      %s286 = sadd.s32 %s285, 1
      %p289 = scmp.eq.s32.totalorder %s37, 1
      %p290 = scmp.ne.s32.totalorder %s285, %s287
      %p291 = scmp.eq.s32.totalorder %s37, 0
      %p292 = por %p290, %p291
      %p293 = scmp.ne.s32.totalorder %s285, %s287
      %p294 = scmp.eq.s32.totalorder %s42, 1
      %p295 = por %p293, %p294
      %p296 = scmp.ne.s32.totalorder %s287, %s288
      %p297 = scmp.eq.s32.totalorder %s42, 0
      %p298 = por %p296, %p297
      %p299 = scmp.ne.s32.totalorder %s287, %s288
      %p300 = scmp.eq.s32.totalorder %s43, 1
      %p301 = por %p299, %p300
      %p303 = scmp.ne.s32.totalorder %s288, %s302
      %p304 = scmp.eq.s32.totalorder %s43, 0
      %p305 = por %p303, %p304
      %s307 = sadd.s32 %s306, 1
      %p310 = scmp.eq.s32.totalorder %s37, 1
      %p311 = scmp.ne.s32.totalorder %s306, %s308
      %p312 = scmp.eq.s32.totalorder %s37, 0
      %p313 = por %p311, %p312
      %p314 = scmp.ne.s32.totalorder %s306, %s308
      %p315 = scmp.eq.s32.totalorder %s42, 1
      %p316 = por %p314, %p315
      %p317 = scmp.ne.s32.totalorder %s308, %s309
      %p318 = scmp.eq.s32.totalorder %s42, 0
      %p319 = por %p317, %p318
      %p320 = scmp.ne.s32.totalorder %s308, %s309
      %p321 = scmp.eq.s32.totalorder %s43, 1
      %p322 = por %p320, %p321
      %p324 = scmp.ne.s32.totalorder %s309, %s323
      %p325 = scmp.eq.s32.totalorder %s43, 0
      %p326 = por %p324, %p325
      %s328 = sadd.s32 %s327, 1
      %p331 = scmp.eq.s32.totalorder %s37, 1
      %p332 = scmp.ne.s32.totalorder %s327, %s329
      %p333 = scmp.eq.s32.totalorder %s37, 0
      %p334 = por %p332, %p333
      %p335 = scmp.ne.s32.totalorder %s327, %s329
      %p336 = scmp.eq.s32.totalorder %s42, 1
      %p337 = por %p335, %p336
      %p338 = scmp.ne.s32.totalorder %s329, %s330
      %p339 = scmp.eq.s32.totalorder %s42, 0
      %p340 = por %p338, %p339
      %p341 = scmp.ne.s32.totalorder %s329, %s330
      %p342 = scmp.eq.s32.totalorder %s43, 1
      %p343 = por %p341, %p342
      %p345 = scmp.ne.s32.totalorder %s330, %s344
      %p346 = scmp.eq.s32.totalorder %s43, 0
      %p347 = por %p345, %p346
      %s349 = sadd.s32 %s348, 1
      %p352 = scmp.eq.s32.totalorder %s37, 1
      %p353 = scmp.ne.s32.totalorder %s348, %s350
      %p354 = scmp.eq.s32.totalorder %s37, 0
      %p355 = por %p353, %p354
      %p356 = scmp.ne.s32.totalorder %s348, %s350
      %p357 = scmp.eq.s32.totalorder %s42, 1
      %p358 = por %p356, %p357
      %p359 = scmp.ne.s32.totalorder %s350, %s351
      %p360 = scmp.eq.s32.totalorder %s42, 0
      %p361 = por %p359, %p360
      %p362 = scmp.ne.s32.totalorder %s350, %s351
      %p363 = scmp.eq.s32.totalorder %s43, 1
      %p364 = por %p362, %p363
      %p366 = scmp.ne.s32.totalorder %s351, %s365
      %p367 = scmp.eq.s32.totalorder %s43, 0
      %p368 = por %p366, %p367
      %s370 = sadd.s32 %s369, 1
      %p373 = scmp.eq.s32.totalorder %s37, 1
      %p374 = scmp.ne.s32.totalorder %s369, %s371
      %p375 = scmp.eq.s32.totalorder %s37, 0
      %p376 = por %p374, %p375
      %p377 = scmp.ne.s32.totalorder %s369, %s371
      %p378 = scmp.eq.s32.totalorder %s42, 1
      %p379 = por %p377, %p378
      %p380 = scmp.ne.s32.totalorder %s371, %s372
      %p381 = scmp.eq.s32.totalorder %s42, 0
      %p382 = por %p380, %p381
      %p383 = scmp.ne.s32.totalorder %s371, %s372
      %p384 = scmp.eq.s32.totalorder %s43, 1
      %p385 = por %p383, %p384
      %p387 = scmp.ne.s32.totalorder %s372, %s386
      %p388 = scmp.eq.s32.totalorder %s43, 0
      %p389 = por %p387, %p388
      %s391 = sadd.s32 %s390, 1
      %p394 = scmp.eq.s32.totalorder %s37, 1
      %p395 = scmp.ne.s32.totalorder %s390, %s392
      %p396 = scmp.eq.s32.totalorder %s37, 0
      %p397 = por %p395, %p396
      %p398 = scmp.ne.s32.totalorder %s390, %s392
      %p399 = scmp.eq.s32.totalorder %s42, 1
      %p400 = por %p398, %p399
      %p401 = scmp.ne.s32.totalorder %s392, %s393
      %p402 = scmp.eq.s32.totalorder %s42, 0
      %p403 = por %p401, %p402
      %p404 = scmp.ne.s32.totalorder %s392, %s393
      %p405 = scmp.eq.s32.totalorder %s43, 1
      %p406 = por %p404, %p405
      %p408 = scmp.ne.s32.totalorder %s393, %s407
      %p409 = scmp.eq.s32.totalorder %s43, 0
      %p410 = por %p408, %p409
      %s412 = sadd.s32 %s411, 1
      %p415 = scmp.eq.s32.totalorder %s37, 1
      %p416 = scmp.ne.s32.totalorder %s411, %s413
      %p417 = scmp.eq.s32.totalorder %s37, 0
      %p418 = por %p416, %p417
      %p419 = scmp.ne.s32.totalorder %s411, %s413
      %p420 = scmp.eq.s32.totalorder %s42, 1
      %p421 = por %p419, %p420
      %p422 = scmp.ne.s32.totalorder %s413, %s414
      %p423 = scmp.eq.s32.totalorder %s42, 0
      %p424 = por %p422, %p423
      %p425 = scmp.ne.s32.totalorder %s413, %s414
      %p426 = scmp.eq.s32.totalorder %s43, 1
      %p427 = por %p425, %p426
      %p429 = scmp.ne.s32.totalorder %s414, %s428
      %p430 = scmp.eq.s32.totalorder %s43, 0
      %p431 = por %p429, %p430
      %s433 = sadd.s32 %s432, 1
      %p436 = scmp.eq.s32.totalorder %s37, 1
      %p437 = scmp.ne.s32.totalorder %s432, %s434
      %p438 = scmp.eq.s32.totalorder %s37, 0
      %p439 = por %p437, %p438
      %p440 = scmp.ne.s32.totalorder %s432, %s434
      %p441 = scmp.eq.s32.totalorder %s42, 1
      %p442 = por %p440, %p441
      %p443 = scmp.ne.s32.totalorder %s434, %s435
      %p444 = scmp.eq.s32.totalorder %s42, 0
      %p445 = por %p443, %p444
      %p446 = scmp.ne.s32.totalorder %s434, %s435
      %p447 = scmp.eq.s32.totalorder %s43, 1
      %p448 = por %p446, %p447
      %p450 = scmp.ne.s32.totalorder %s435, %s449
      %p451 = scmp.eq.s32.totalorder %s43, 0
      %p452 = por %p450, %p451
      %s454 = sadd.s32 %s453, 1
      %p457 = scmp.eq.s32.totalorder %s37, 1
      %p458 = scmp.ne.s32.totalorder %s453, %s455
      %p459 = scmp.eq.s32.totalorder %s37, 0
      %p460 = por %p458, %p459
      %p461 = scmp.ne.s32.totalorder %s453, %s455
      %p462 = scmp.eq.s32.totalorder %s42, 1
      %p463 = por %p461, %p462
      %p464 = scmp.ne.s32.totalorder %s455, %s456
      %p465 = scmp.eq.s32.totalorder %s42, 0
      %p466 = por %p464, %p465
      %p467 = scmp.ne.s32.totalorder %s455, %s456
      %p468 = scmp.eq.s32.totalorder %s43, 1
      %p469 = por %p467, %p468
      %p471 = scmp.ne.s32.totalorder %s456, %s470
      %p472 = scmp.eq.s32.totalorder %s43, 0
      %p473 = por %p471, %p472
      %s475 = sadd.s32 %s474, 1
      %p478 = scmp.eq.s32.totalorder %s37, 1
      %p479 = scmp.ne.s32.totalorder %s474, %s476
      %p480 = scmp.eq.s32.totalorder %s37, 0
      %p481 = por %p479, %p480
      %p482 = scmp.ne.s32.totalorder %s474, %s476
      %p483 = scmp.eq.s32.totalorder %s42, 1
      %p484 = por %p482, %p483
      %p485 = scmp.ne.s32.totalorder %s476, %s477
      %p486 = scmp.eq.s32.totalorder %s42, 0
      %p487 = por %p485, %p486
      %p488 = scmp.ne.s32.totalorder %s476, %s477
      %p489 = scmp.eq.s32.totalorder %s43, 1
      %p490 = por %p488, %p489
      %p492 = scmp.ne.s32.totalorder %s477, %s491
      %p493 = scmp.eq.s32.totalorder %s43, 0
      %p494 = por %p492, %p493
      %s496 = sadd.s32 %s495, 1
      %p499 = scmp.eq.s32.totalorder %s37, 1
      %p500 = scmp.ne.s32.totalorder %s495, %s497
      %p501 = scmp.eq.s32.totalorder %s37, 0
      %p502 = por %p500, %p501
      %p503 = scmp.ne.s32.totalorder %s495, %s497
      %p504 = scmp.eq.s32.totalorder %s42, 1
      %p505 = por %p503, %p504
      %p506 = scmp.ne.s32.totalorder %s497, %s498
      %p507 = scmp.eq.s32.totalorder %s42, 0
      %p508 = por %p506, %p507
      %p509 = scmp.ne.s32.totalorder %s497, %s498
      %p510 = scmp.eq.s32.totalorder %s43, 1
      %p511 = por %p509, %p510
      %p513 = scmp.ne.s32.totalorder %s498, %s512
      %p514 = scmp.eq.s32.totalorder %s43, 0
      %p515 = por %p513, %p514
      %s517 = sadd.s32 %s516, 1
      %p520 = scmp.eq.s32.totalorder %s37, 1
      %p521 = scmp.ne.s32.totalorder %s516, %s518
      %p522 = scmp.eq.s32.totalorder %s37, 0
      %p523 = por %p521, %p522
      %p524 = scmp.ne.s32.totalorder %s516, %s518
      %p525 = scmp.eq.s32.totalorder %s42, 1
      %p526 = por %p524, %p525
      %p527 = scmp.ne.s32.totalorder %s518, %s519
      %p528 = scmp.eq.s32.totalorder %s42, 0
      %p529 = por %p527, %p528
      %p530 = scmp.ne.s32.totalorder %s518, %s519
      %p531 = scmp.eq.s32.totalorder %s43, 1
      %p532 = por %p530, %p531
      %p534 = scmp.ne.s32.totalorder %s519, %s533
      %p535 = scmp.eq.s32.totalorder %s43, 0
      %p536 = por %p534, %p535
      %s538 = sadd.s32 %s537, 1
      %p541 = scmp.eq.s32.totalorder %s37, 1
      %p542 = scmp.ne.s32.totalorder %s537, %s539
      %p543 = scmp.eq.s32.totalorder %s37, 0
      %p544 = por %p542, %p543
      %p545 = scmp.ne.s32.totalorder %s537, %s539
      %p546 = scmp.eq.s32.totalorder %s42, 1
      %p547 = por %p545, %p546
      %p548 = scmp.ne.s32.totalorder %s539, %s540
      %p549 = scmp.eq.s32.totalorder %s42, 0
      %p550 = por %p548, %p549
      %p551 = scmp.ne.s32.totalorder %s539, %s540
      %p552 = scmp.eq.s32.totalorder %s43, 1
      %p553 = por %p551, %p552
      %p555 = scmp.ne.s32.totalorder %s540, %s554
      %p556 = scmp.eq.s32.totalorder %s43, 0
      %p557 = por %p555, %p556
      %s559 = sadd.s32 %s558, 1
      %p562 = scmp.eq.s32.totalorder %s37, 1
      %p563 = scmp.ne.s32.totalorder %s558, %s560
      %p564 = scmp.eq.s32.totalorder %s37, 0
      %p565 = por %p563, %p564
      %p566 = scmp.ne.s32.totalorder %s558, %s560
      %p567 = scmp.eq.s32.totalorder %s42, 1
      %p568 = por %p566, %p567
      %p569 = scmp.ne.s32.totalorder %s560, %s561
      %p570 = scmp.eq.s32.totalorder %s42, 0
      %p571 = por %p569, %p570
      %p572 = scmp.ne.s32.totalorder %s560, %s561
      %p573 = scmp.eq.s32.totalorder %s43, 1
      %p574 = por %p572, %p573
      %p576 = scmp.ne.s32.totalorder %s561, %s575
      %p577 = scmp.eq.s32.totalorder %s43, 0
      %p578 = por %p576, %p577
      %s580 = sadd.s32 %s579, 1
      %p583 = scmp.eq.s32.totalorder %s37, 1
      %p584 = scmp.ne.s32.totalorder %s579, %s581
      %p585 = scmp.eq.s32.totalorder %s37, 0
      %p586 = por %p584, %p585
      %p587 = scmp.ne.s32.totalorder %s579, %s581
      %p588 = scmp.eq.s32.totalorder %s42, 1
      %p589 = por %p587, %p588
      %p590 = scmp.ne.s32.totalorder %s581, %s582
      %p591 = scmp.eq.s32.totalorder %s42, 0
      %p592 = por %p590, %p591
      %p593 = scmp.ne.s32.totalorder %s581, %s582
      %p594 = scmp.eq.s32.totalorder %s43, 1
      %p595 = por %p593, %p594
      %p597 = scmp.ne.s32.totalorder %s582, %s596
      %p598 = scmp.eq.s32.totalorder %s43, 0
      %p599 = por %p597, %p598
      %s601 = sadd.s32 %s600, 1
      %p604 = scmp.eq.s32.totalorder %s37, 1
      %p605 = scmp.ne.s32.totalorder %s600, %s602
      %p606 = scmp.eq.s32.totalorder %s37, 0
      %p607 = por %p605, %p606
      %p608 = scmp.ne.s32.totalorder %s600, %s602
      %p609 = scmp.eq.s32.totalorder %s42, 1
      %p610 = por %p608, %p609
      %p611 = scmp.ne.s32.totalorder %s602, %s603
      %p612 = scmp.eq.s32.totalorder %s42, 0
      %p613 = por %p611, %p612
      %p614 = scmp.ne.s32.totalorder %s602, %s603
      %p615 = scmp.eq.s32.totalorder %s43, 1
      %p616 = por %p614, %p615
      %p618 = scmp.ne.s32.totalorder %s603, %s617
      %p619 = scmp.eq.s32.totalorder %s43, 0
      %p620 = por %p618, %p619
      %s622 = sadd.s32 %s621, 1
      %p625 = scmp.eq.s32.totalorder %s37, 1
      %p626 = scmp.ne.s32.totalorder %s621, %s623
      %p627 = scmp.eq.s32.totalorder %s37, 0
      %p628 = por %p626, %p627
      %p629 = scmp.ne.s32.totalorder %s621, %s623
      %p630 = scmp.eq.s32.totalorder %s42, 1
      %p631 = por %p629, %p630
      %p632 = scmp.ne.s32.totalorder %s623, %s624
      %p633 = scmp.eq.s32.totalorder %s42, 0
      %p634 = por %p632, %p633
      %p635 = scmp.ne.s32.totalorder %s623, %s624
      %p636 = scmp.eq.s32.totalorder %s43, 1
      %p637 = por %p635, %p636
      %p639 = scmp.ne.s32.totalorder %s624, %s638
      %p640 = scmp.eq.s32.totalorder %s43, 0
      %p641 = por %p639, %p640
      %s643 = sadd.s32 %s642, 1
      %p646 = scmp.eq.s32.totalorder %s37, 1
      %p647 = scmp.ne.s32.totalorder %s642, %s644
      %p648 = scmp.eq.s32.totalorder %s37, 0
      %p649 = por %p647, %p648
      %p650 = scmp.ne.s32.totalorder %s642, %s644
      %p651 = scmp.eq.s32.totalorder %s42, 1
      %p652 = por %p650, %p651
      %p653 = scmp.ne.s32.totalorder %s644, %s645
      %p654 = scmp.eq.s32.totalorder %s42, 0
      %p655 = por %p653, %p654
      %p656 = scmp.ne.s32.totalorder %s644, %s645
      %p657 = scmp.eq.s32.totalorder %s43, 1
      %p658 = por %p656, %p657
      %p660 = scmp.ne.s32.totalorder %s645, %s659
      %p661 = scmp.eq.s32.totalorder %s43, 0
      %p662 = por %p660, %p661
      %s663 = ssub.s32 %s37, %s44
      %p664 = scmp.eq.s32.totalorder %s663, 0
      %s666 = sadd.s32 %s665, 1
      %s667 = scalar_select %p664, %s665, %s666
      %p670 = pneg %p664
      %p671 = scmp.eq.s32.totalorder %s37, 1
      %p672 = por %p670, %p671
      %p673 = scmp.ne.s32.totalorder %s665, %s668
      %p674 = scmp.eq.s32.totalorder %s37, 0
      %p675 = por %p673, %p674
      %p676 = scmp.ne.s32.totalorder %s665, %s668
      %p677 = scmp.eq.s32.totalorder %s42, 1
      %p678 = por %p676, %p677
      %p679 = scmp.ne.s32.totalorder %s668, %s669
      %p680 = scmp.eq.s32.totalorder %s42, 0
      %p681 = por %p679, %p680
      %p682 = scmp.ne.s32.totalorder %s668, %s669
      %p683 = scmp.eq.s32.totalorder %s43, 1
      %p684 = por %p682, %p683
      %p686 = scmp.ne.s32.totalorder %s669, %s685
      %p687 = scmp.eq.s32.totalorder %s43, 0
      %p688 = por %p686, %p687
      %p689 = scmp.le.s32.totalorder 1, %s37
      %p690 = scmp.lt.s32.totalorder %s37, 3
      %p691 = pnand %p689, %p690
      %p692 = pneg %p691
      // Predicated region
      $region9: #{tpu_custom_call.1} parent=5 // pred_check
        _
      $region10: #{tpu_custom_call.1} parent=5 // pred_check_branch
        %694 = sbr.rel (%p691) target = $region12
      $region11: #{tpu_custom_call.1} parent=5 // pred_region
        %s695 = ssub.s32 %s37, 1
        // Predicated region
        $region13: #{tpu_custom_call.1} parent=11 // pred_check
          %p696 = pneg %p214
        $region14: #{tpu_custom_call.1} parent=11 // pred_check_branch
          %698 = sbr.rel (%p696) target = $region16
        $region15: #{tpu_custom_call.1} parent=11 // pred_region
          _
        $region16: #{tpu_custom_call.1} parent=11 // pred_fallthru
          _
        // Predicated region
        $region17: #{tpu_custom_call.1} parent=11 // pred_check
          %p699 = pneg %p235
        $region18: #{tpu_custom_call.1} parent=11 // pred_check_branch
          %701 = sbr.rel (%p699) target = $region20
        $region19: #{tpu_custom_call.1} parent=11 // pred_region
          _
        $region20: #{tpu_custom_call.1} parent=11 // pred_fallthru
          _
        // Predicated region
        $region21: #{tpu_custom_call.1} parent=11 // pred_check
          %p702 = pneg %p256
        $region22: #{tpu_custom_call.1} parent=11 // pred_check_branch
          %704 = sbr.rel (%p702) target = $region24
        $region23: #{tpu_custom_call.1} parent=11 // pred_region
          _
        $region24: #{tpu_custom_call.1} parent=11 // pred_fallthru
          _
        // Predicated region
        $region25: #{tpu_custom_call.1} parent=11 // pred_check
          %p705 = pneg %p277
        $region26: #{tpu_custom_call.1} parent=11 // pred_check_branch
          %707 = sbr.rel (%p705) target = $region28
        $region27: #{tpu_custom_call.1} parent=11 // pred_region
          _
        $region28: #{tpu_custom_call.1} parent=11 // pred_fallthru
          _
        // Predicated region
        $region29: #{tpu_custom_call.1} parent=11 // pred_check
          %p708 = pneg %p298
        $region30: #{tpu_custom_call.1} parent=11 // pred_check_branch
          %710 = sbr.rel (%p708) target = $region32
        $region31: #{tpu_custom_call.1} parent=11 // pred_region
          _
        $region32: #{tpu_custom_call.1} parent=11 // pred_fallthru
          _
        // Predicated region
        $region33: #{tpu_custom_call.1} parent=11 // pred_check
          %p711 = pneg %p319
        $region34: #{tpu_custom_call.1} parent=11 // pred_check_branch
          %713 = sbr.rel (%p711) target = $region36
        $region35: #{tpu_custom_call.1} parent=11 // pred_region
          _
        $region36: #{tpu_custom_call.1} parent=11 // pred_fallthru
          _
        // Predicated region
        $region37: #{tpu_custom_call.1} parent=11 // pred_check
          %p714 = pneg %p340
        $region38: #{tpu_custom_call.1} parent=11 // pred_check_branch
          %716 = sbr.rel (%p714) target = $region40
        $region39: #{tpu_custom_call.1} parent=11 // pred_region
          _
        $region40: #{tpu_custom_call.1} parent=11 // pred_fallthru
          _
        // Predicated region
        $region41: #{tpu_custom_call.1} parent=11 // pred_check
          %p717 = pneg %p361
        $region42: #{tpu_custom_call.1} parent=11 // pred_check_branch
          %719 = sbr.rel (%p717) target = $region44
        $region43: #{tpu_custom_call.1} parent=11 // pred_region
          _
        $region44: #{tpu_custom_call.1} parent=11 // pred_fallthru
          _
        // Predicated region
        $region45: #{tpu_custom_call.1} parent=11 // pred_check
          %p720 = pneg %p382
        $region46: #{tpu_custom_call.1} parent=11 // pred_check_branch
          %722 = sbr.rel (%p720) target = $region48
        $region47: #{tpu_custom_call.1} parent=11 // pred_region
          _
        $region48: #{tpu_custom_call.1} parent=11 // pred_fallthru
          _
        // Predicated region
        $region49: #{tpu_custom_call.1} parent=11 // pred_check
          %p723 = pneg %p403
        $region50: #{tpu_custom_call.1} parent=11 // pred_check_branch
          %725 = sbr.rel (%p723) target = $region52
        $region51: #{tpu_custom_call.1} parent=11 // pred_region
          _
        $region52: #{tpu_custom_call.1} parent=11 // pred_fallthru
          _
        // Predicated region
        $region53: #{tpu_custom_call.1} parent=11 // pred_check
          %p726 = pneg %p424
        $region54: #{tpu_custom_call.1} parent=11 // pred_check_branch
          %728 = sbr.rel (%p726) target = $region56
        $region55: #{tpu_custom_call.1} parent=11 // pred_region
          _
        $region56: #{tpu_custom_call.1} parent=11 // pred_fallthru
          _
        // Predicated region
        $region57: #{tpu_custom_call.1} parent=11 // pred_check
          %p729 = pneg %p445
        $region58: #{tpu_custom_call.1} parent=11 // pred_check_branch
          %731 = sbr.rel (%p729) target = $region60
        $region59: #{tpu_custom_call.1} parent=11 // pred_region
          _
        $region60: #{tpu_custom_call.1} parent=11 // pred_fallthru
          _
        // Predicated region
        $region61: #{tpu_custom_call.1} parent=11 // pred_check
          %p732 = pneg %p466
        $region62: #{tpu_custom_call.1} parent=11 // pred_check_branch
          %734 = sbr.rel (%p732) target = $region64
        $region63: #{tpu_custom_call.1} parent=11 // pred_region
          _
        $region64: #{tpu_custom_call.1} parent=11 // pred_fallthru
          _
        // Predicated region
        $region65: #{tpu_custom_call.1} parent=11 // pred_check
          %p735 = pneg %p487
        $region66: #{tpu_custom_call.1} parent=11 // pred_check_branch
          %737 = sbr.rel (%p735) target = $region68
        $region67: #{tpu_custom_call.1} parent=11 // pred_region
          _
        $region68: #{tpu_custom_call.1} parent=11 // pred_fallthru
          _
        // Predicated region
        $region69: #{tpu_custom_call.1} parent=11 // pred_check
          %p738 = pneg %p508
        $region70: #{tpu_custom_call.1} parent=11 // pred_check_branch
          %740 = sbr.rel (%p738) target = $region72
        $region71: #{tpu_custom_call.1} parent=11 // pred_region
          _
        $region72: #{tpu_custom_call.1} parent=11 // pred_fallthru
          _
        // Predicated region
        $region73: #{tpu_custom_call.1} parent=11 // pred_check
          %p741 = pneg %p529
        $region74: #{tpu_custom_call.1} parent=11 // pred_check_branch
          %743 = sbr.rel (%p741) target = $region76
        $region75: #{tpu_custom_call.1} parent=11 // pred_region
          _
        $region76: #{tpu_custom_call.1} parent=11 // pred_fallthru
          _
        // Predicated region
        $region77: #{tpu_custom_call.1} parent=11 // pred_check
          %p744 = pneg %p550
        $region78: #{tpu_custom_call.1} parent=11 // pred_check_branch
          %746 = sbr.rel (%p744) target = $region80
        $region79: #{tpu_custom_call.1} parent=11 // pred_region
          _
        $region80: #{tpu_custom_call.1} parent=11 // pred_fallthru
          _
        // Predicated region
        $region81: #{tpu_custom_call.1} parent=11 // pred_check
          %p747 = pneg %p571
        $region82: #{tpu_custom_call.1} parent=11 // pred_check_branch
          %749 = sbr.rel (%p747) target = $region84
        $region83: #{tpu_custom_call.1} parent=11 // pred_region
          _
        $region84: #{tpu_custom_call.1} parent=11 // pred_fallthru
          _
        // Predicated region
        $region85: #{tpu_custom_call.1} parent=11 // pred_check
          %p750 = pneg %p592
        $region86: #{tpu_custom_call.1} parent=11 // pred_check_branch
          %752 = sbr.rel (%p750) target = $region88
        $region87: #{tpu_custom_call.1} parent=11 // pred_region
          _
        $region88: #{tpu_custom_call.1} parent=11 // pred_fallthru
          _
        // Predicated region
        $region89: #{tpu_custom_call.1} parent=11 // pred_check
          %p753 = pneg %p613
        $region90: #{tpu_custom_call.1} parent=11 // pred_check_branch
          %755 = sbr.rel (%p753) target = $region92
        $region91: #{tpu_custom_call.1} parent=11 // pred_region
          _
        $region92: #{tpu_custom_call.1} parent=11 // pred_fallthru
          _
        // Predicated region
        $region93: #{tpu_custom_call.1} parent=11 // pred_check
          %p756 = pneg %p634
        $region94: #{tpu_custom_call.1} parent=11 // pred_check_branch
          %758 = sbr.rel (%p756) target = $region96
        $region95: #{tpu_custom_call.1} parent=11 // pred_region
          _
        $region96: #{tpu_custom_call.1} parent=11 // pred_fallthru
          _
        // Predicated region
        $region97: #{tpu_custom_call.1} parent=11 // pred_check
          %p759 = pneg %p655
        $region98: #{tpu_custom_call.1} parent=11 // pred_check_branch
          %761 = sbr.rel (%p759) target = $region100
        $region99: #{tpu_custom_call.1} parent=11 // pred_region
          _
        $region100: #{tpu_custom_call.1} parent=11 // pred_fallthru
          _
      $region12: #{tpu_custom_call.1} parent=5 // pred_fallthru
        _
      %p762 = scmp.lt.s32.totalorder %s37, 2
      // Predicated region
      $region101: #{tpu_custom_call.1} parent=5 // pred_check
        %p763 = pneg %p762
      $region102: #{tpu_custom_call.1} parent=5 // pred_check_branch
        %765 = sbr.rel (%p763) target = $region104
      $region103: #{tpu_custom_call.1} parent=5 // pred_region
        // Predicated region
        $region105: #{tpu_custom_call.1} parent=103 // pred_check
          %p766 = pneg %p57
        $region106: #{tpu_custom_call.1} parent=103 // pred_check_branch
          %768 = sbr.rel (%p766) target = $region108
        $region107: #{tpu_custom_call.1} parent=103 // pred_region
          %s769 = smul.u32 16, %s37
          %p770 = scmp.lt.s32.totalorder %s769, 31
          %s771 = scalar_select %p770, %s769, 31
          %s772 = smul.addr %s771, 8
          %s773 = scalar_lea.vmem %s0, %s772
          %s774 = smul.u32 16, %s37
        $region108: #{tpu_custom_call.1} parent=103 // pred_fallthru
          _
        // Predicated region
        $region109: #{tpu_custom_call.1} parent=103 // pred_check
          %p775 = pneg %p83
        $region110: #{tpu_custom_call.1} parent=103 // pred_check_branch
          %777 = sbr.rel (%p775) target = $region112
        $region111: #{tpu_custom_call.1} parent=103 // pred_region
          %s778 = smul.u32 32, %s37
          %p779 = scmp.lt.s32.totalorder %s778, 63
          %s780 = scalar_select %p779, %s778, 63
          %s781 = smul.addr %s780, 8
          %s782 = scalar_lea.vmem %s1, %s781
          %s783 = smul.u32 32, %s37
        $region112: #{tpu_custom_call.1} parent=103 // pred_fallthru
          _
        // Predicated region
        $region113: #{tpu_custom_call.1} parent=103 // pred_check
          %p784 = pneg %p109
        $region114: #{tpu_custom_call.1} parent=103 // pred_check_branch
          %786 = sbr.rel (%p784) target = $region116
        $region115: #{tpu_custom_call.1} parent=103 // pred_region
          %s787 = smul.u32 32, %s37
          %p788 = scmp.lt.s32.totalorder %s787, 63
          %s789 = scalar_select %p788, %s787, 63
          %s790 = smul.addr %s789, 8
          %s791 = scalar_lea.vmem %s2, %s790
          %s792 = smul.u32 32, %s37
        $region116: #{tpu_custom_call.1} parent=103 // pred_fallthru
          _
        // Predicated region
        $region117: #{tpu_custom_call.1} parent=103 // pred_check
          %p793 = pneg %p135
        $region118: #{tpu_custom_call.1} parent=103 // pred_check_branch
          %795 = sbr.rel (%p793) target = $region120
        $region119: #{tpu_custom_call.1} parent=103 // pred_region
          %s796 = sand.u32 %s125, 1
          %s797 = scalar_lea.sflag [#allocation3], %s796
          %s798 = sand.u32 %s125, 1
          %s799 = smul.addr %s798, 256
          %s800 = scalar_lea.vmem [#allocation2], %s799
          %s801 = smul.u32 16, %s37
          %803 = vsyncadd %s797, 0
          %s804 = smul.addr %s801, 2
          %s805 = smul.addr %s804, 8
          %s806 = scalar_lea.hbm %s3, %s805
          %s807 = sshll.u32 %s806, 4
          %s808 = int_to_ptr.hbm [resolvable:$true] %s807
          %s809 = sshll.u32 %s800, 4
          %s810 = int_to_ptr.vmem [resolvable:$true] %s809
          %815 = dma.hbm_to_vmem [thread:$0]  %s808, 4096, %s810, %s797, 256, 256, 16
        $region120: #{tpu_custom_call.1} parent=103 // pred_fallthru
          _
        // Predicated region
        $region121: #{tpu_custom_call.1} parent=103 // pred_check
          %p816 = pneg %p161
        $region122: #{tpu_custom_call.1} parent=103 // pred_check_branch
          %818 = sbr.rel (%p816) target = $region124
        $region123: #{tpu_custom_call.1} parent=103 // pred_region
          %p819 = scmp.lt.s32.totalorder %s37, 1
          %s820 = scalar_select %p819, %s37, 1
          %s821 = smul.addr %s820, 8
          %s822 = scalar_lea.vmem %s4, %s821
        $region124: #{tpu_custom_call.1} parent=103 // pred_fallthru
          _
        // Predicated region
        $region125: #{tpu_custom_call.1} parent=103 // pred_check
          %p823 = pneg %p187
        $region126: #{tpu_custom_call.1} parent=103 // pred_check_branch
          %825 = sbr.rel (%p823) target = $region128
        $region127: #{tpu_custom_call.1} parent=103 // pred_region
          %p826 = scmp.lt.s32.totalorder %s37, 1
          %s827 = scalar_select %p826, %s37, 1
          %s828 = smul.addr %s827, 8
          %s829 = scalar_lea.vmem %s5, %s828
        $region128: #{tpu_custom_call.1} parent=103 // pred_fallthru
          _
      $region104: #{tpu_custom_call.1} parent=5 // pred_fallthru
        _
      %p830 = scmp.le.s32.totalorder 1, %s37
      %p831 = scmp.lt.s32.totalorder %s37, 3
      %p832 = pnand %p830, %p831
      %p833 = pneg %p832
      // Predicated region
      $region129: #{tpu_custom_call.1} parent=5 // pred_check
        _
      $region130: #{tpu_custom_call.1} parent=5 // pred_check_branch
        %835 = sbr.rel (%p832) target = $region132
      $region131: #{tpu_custom_call.1} parent=5 // pred_region
        %s836 = ssub.s32 %s37, 1
        %s837 = sand.u32 %s128, 1
        %s838 = scalar_lea.sflag [#allocation3], %s837
        %s839 = sand.u32 %s128, 1
        %s840 = smul.addr %s839, 256
        %s841 = scalar_lea.vmem [#allocation2], %s840
        // Predicated region
        $region133: #{tpu_custom_call.1} parent=131 // pred_check
          %p842 = pneg %p141
        $region134: #{tpu_custom_call.1} parent=131 // pred_check_branch
          %844 = sbr.rel (%p842) target = $region136
        $region135: #{tpu_custom_call.1} parent=131 // pred_region
          %846 = dma.done %s838, 4096
        $region136: #{tpu_custom_call.1} parent=131 // pred_fallthru
          _
        %s847 = smul.u32 16, %s42
        %p848 = scmp.lt.s32.totalorder %s847, 31
        %s849 = scalar_select %p848, %s847, 31
        %s850 = smul.addr %s849, 8
        %s851 = scalar_lea.vmem %s0, %s850
        %p852 = pneg %p63
        %p853 = pneg %p60
        %s854 = smul.u32 32, %s42
        %p855 = scmp.lt.s32.totalorder %s854, 63
        %s856 = scalar_select %p855, %s854, 63
        %s857 = smul.addr %s856, 8
        %s858 = scalar_lea.vmem %s1, %s857
        %p859 = pneg %p89
        %p860 = pneg %p86
        %s861 = smul.u32 32, %s42
        %p862 = scmp.lt.s32.totalorder %s861, 63
        %s863 = scalar_select %p862, %s861, 63
        %s864 = smul.addr %s863, 8
        %s865 = scalar_lea.vmem %s2, %s864
        %p866 = pneg %p115
        %p867 = pneg %p112
        %s868 = sand.u32 %s128, 1
        %s869 = scalar_lea.sflag [#allocation3], %s868
        %s870 = sand.u32 %s128, 1
        %s871 = smul.addr %s870, 256
        %s872 = scalar_lea.vmem [#allocation2], %s871
        %p873 = pneg %p141
        %p874 = pneg %p138
        %p875 = scmp.lt.s32.totalorder %s42, 1
        %s876 = scalar_select %p875, %s42, 1
        %s877 = smul.addr %s876, 8
        %s878 = scalar_lea.vmem %s4, %s877
        %p879 = pneg %p167
        %p880 = pneg %p164
        %p881 = scmp.lt.s32.totalorder %s42, 1
        %s882 = scalar_select %p881, %s42, 1
        %s883 = smul.addr %s882, 8
        %s884 = scalar_lea.vmem %s5, %s883
        %p885 = pneg %p193
        %p886 = pneg %p190
        %p887 = pneg %p214
        %p888 = pneg %p211
        %p889 = pneg %p235
        %p890 = pneg %p232
        %p891 = pneg %p256
        %p892 = pneg %p253
        %p893 = pneg %p277
        %p894 = pneg %p274
        %p895 = pneg %p298
        %p896 = pneg %p295
        %p897 = pneg %p319
        %p898 = pneg %p316
        %p899 = pneg %p340
        %p900 = pneg %p337
        %p901 = pneg %p361
        %p902 = pneg %p358
        %p903 = pneg %p382
        %p904 = pneg %p379
        %p905 = pneg %p403
        %p906 = pneg %p400
        %p907 = pneg %p424
        %p908 = pneg %p421
        %p909 = pneg %p445
        %p910 = pneg %p442
        %p911 = pneg %p466
        %p912 = pneg %p463
        %p913 = pneg %p487
        %p914 = pneg %p484
        %p915 = pneg %p508
        %p916 = pneg %p505
        %p917 = pneg %p529
        %p918 = pneg %p526
        %p919 = pneg %p550
        %p920 = pneg %p547
        %p921 = pneg %p571
        %p922 = pneg %p568
        %p923 = pneg %p592
        %p924 = pneg %p589
        %p925 = pneg %p613
        %p926 = pneg %p610
        %p927 = pneg %p634
        %p928 = pneg %p631
        %p929 = pneg %p655
        %p930 = pneg %p652
        %p931 = pneg %p681
        %p932 = pneg %p678
        %p933 = scmp.lt.s32.totalorder %s42, 1
        %s934 = scalar_select %p933, %s42, 1
        %s935 = smul.addr %s934, 8
        %s936 = scalar_lea.vmem %s28, %s935
        %s937 = smul.u32 16, %s42
        %p938 = scmp.lt.s32.totalorder %s937, 31
        %s939 = scalar_select %p938, %s937, 31
        %s940 = smul.addr %s939, 8
        %s941 = scalar_lea.vmem %s0, %s940
        %s942 = smul.u32 16, %s42
        %s943 = smul.u32 32, %s42
        %p944 = scmp.lt.s32.totalorder %s943, 63
        %s945 = scalar_select %p944, %s943, 63
        %s946 = smul.addr %s945, 8
        %s947 = scalar_lea.vmem %s1, %s946
        %s948 = smul.u32 32, %s42
        %s949 = smul.u32 32, %s42
        %p950 = scmp.lt.s32.totalorder %s949, 63
        %s951 = scalar_select %p950, %s949, 63
        %s952 = smul.addr %s951, 8
        %s953 = scalar_lea.vmem %s2, %s952
        %s954 = smul.u32 32, %s42
        %s955 = smul.u32 16, %s42
        %p956 = scmp.lt.s32.totalorder %s42, 1
        %s957 = scalar_select %p956, %s42, 1
        %s958 = smul.addr %s957, 8
        %s959 = scalar_lea.vmem %s4, %s958
        %p960 = scmp.lt.s32.totalorder %s42, 1
        %s961 = scalar_select %p960, %s42, 1
        %s962 = smul.addr %s961, 8
        %s963 = scalar_lea.vmem %s5, %s962
        %p964 = scmp.lt.s32.totalorder %s42, 1
        %s965 = scalar_select %p964, %s42, 1
        %s966 = smul.addr %s965, 8
        %s967 = scalar_lea.vmem %s28, %s966
        %v968 = vld [vmem:[%s6] sm:$0xff]
        %v969 = vld [vmem:[%s7] sm:$0x1]
        %v970 = vld [vmem:[%s8] sm:$0x3f]
        %v971 = vld [vmem:[%s9] sm:$0x1]
        %v972 = vld [vmem:[%s10] sm:$0xff]
        %v973 = vld [vmem:[%s10 + $0x8] sm:$0xff]
        %v974 = vld [vmem:[%s10 + $0x10] sm:$0xff]
        %v975 = vld [vmem:[%s10 + $0x18] sm:$0xff]
        %v976 = vld [vmem:[%s11] sm:$0x1]
        %v977 = vld [vmem:[%s12] sm:$0xff]
        %v978 = vld [vmem:[%s12 + $0x8] sm:$0xff]
        %v979 = vld [vmem:[%s12 + $0x10] sm:$0xff]
        %v980 = vld [vmem:[%s12 + $0x18] sm:$0xff]
        %v981 = vld [vmem:[%s12 + $0x20] sm:$0xff]
        %v982 = vld [vmem:[%s12 + $0x28] sm:$0xff]
        %v983 = vld [vmem:[%s12 + $0x30] sm:$0xff]
        %v984 = vld [vmem:[%s12 + $0x38] sm:$0xff]
        %v985 = vld [vmem:[%s13] sm:$0x1]
        %v986 = vld [vmem:[%s14] sm:$0xff]
        %v987 = vld [vmem:[%s14 + $0x8] sm:$0xff]
        %v988 = vld [vmem:[%s14 + $0x10] sm:$0xff]
        %v989 = vld [vmem:[%s14 + $0x18] sm:$0xff]
        %v990 = vld [vmem:[%s15] sm:$0x1]
        %v991 = vld [vmem:[%s16] sm:$0xff]
        %v992 = vld [vmem:[%s16 + $0x8] sm:$0xff]
        %v993 = vld [vmem:[%s16 + $0x10] sm:$0xff]
        %v994 = vld [vmem:[%s16 + $0x18] sm:$0xff]
        %v995 = vld [vmem:[%s16 + $0x20] sm:$0xff]
        %v996 = vld [vmem:[%s16 + $0x28] sm:$0xff]
        %v997 = vld [vmem:[%s16 + $0x30] sm:$0xff]
        %v998 = vld [vmem:[%s16 + $0x38] sm:$0xff]
        %v999 = vld [vmem:[%s17] sm:$0x1]
        %v1000 = vld [vmem:[%s18] sm:$0xff]
        %v1001 = vld [vmem:[%s18 + $0x8] sm:$0xff]
        %v1002 = vld [vmem:[%s18 + $0x10] sm:$0xff]
        %v1003 = vld [vmem:[%s18 + $0x18] sm:$0xff]
        %v1004 = vld [vmem:[%s19] sm:$0x1]
        %v1005 = vld [vmem:[%s20] sm:$0xff]
        %v1006 = vld [vmem:[%s20 + $0x8] sm:$0xff]
        %v1007 = vld [vmem:[%s20 + $0x10] sm:$0xff]
        %v1008 = vld [vmem:[%s20 + $0x18] sm:$0xff]
        %v1009 = vld [vmem:[%s20 + $0x20] sm:$0xff]
        %v1010 = vld [vmem:[%s20 + $0x28] sm:$0xff]
        %v1011 = vld [vmem:[%s20 + $0x30] sm:$0xff]
        %v1012 = vld [vmem:[%s20 + $0x38] sm:$0xff]
        %v1013 = vld [vmem:[%s21] sm:$0x1]
        %v1014 = vld [vmem:[%s22] sm:$0xff]
        %v1015 = vld [vmem:[%s22 + $0x8] sm:$0xff]
        %v1016 = vld [vmem:[%s22 + $0x10] sm:$0xff]
        %v1017 = vld [vmem:[%s22 + $0x18] sm:$0xff]
        %v1018 = vld [vmem:[%s22 + $0x20] sm:$0xf]
        %v1019 = vld [vmem:[%s23] sm:$0x1]
        %v1020 = vld [vmem:[%s24] sm:$0xff]
        %v1021 = vld [vmem:[%s24 + $0x8] sm:$0xff]
        %v1022 = vld [vmem:[%s24 + $0x10] sm:$0xff]
        %v1023 = vld [vmem:[%s24 + $0x18] sm:$0xff]
        %v1024 = vld [vmem:[%s25] sm:$0x1]
        %v1025 = vld [vmem:[%s26] sm:$0xff]
        %v1026 = vld [vmem:[%s26 + $0x8] sm:$0xff]
        %v1027 = vld [vmem:[%s26 + $0x10] sm:$0xff]
        %v1028 = vld [vmem:[%s26 + $0x18] sm:$0xff]
        %v1029 = vld [vmem:[%s27] sm:$0x1]
        %v1030 = vld [vmem:[%s953] sm:$0xff]
        %v1031 = vld [vmem:[%s953 + $0x8] sm:$0xff]
        %v1032 = vld [vmem:[%s953 + $0x10] sm:$0xff]
        %v1033 = vld [vmem:[%s953 + $0x18] sm:$0xff]
        %v1034 = vld [vmem:[%s953 + $0x20] sm:$0xff]
        %v1035 = vld [vmem:[%s953 + $0x28] sm:$0xff]
        %v1036 = vld [vmem:[%s953 + $0x30] sm:$0xff]
        %v1037 = vld [vmem:[%s953 + $0x38] sm:$0xff]
        %v1038 = vld [vmem:[%s953 + $0x40] sm:$0xff]
        %v1039 = vld [vmem:[%s953 + $0x48] sm:$0xff]
        %v1040 = vld [vmem:[%s953 + $0x50] sm:$0xff]
        %v1041 = vld [vmem:[%s953 + $0x58] sm:$0xff]
        %v1042 = vld [vmem:[%s953 + $0x60] sm:$0xff]
        %v1043 = vld [vmem:[%s953 + $0x68] sm:$0xff]
        %v1044 = vld [vmem:[%s953 + $0x70] sm:$0xff]
        %v1045 = vld [vmem:[%s953 + $0x78] sm:$0xff]
        %v1046 = vld [vmem:[%s953 + $0x80] sm:$0xff]
        %v1047 = vld [vmem:[%s953 + $0x88] sm:$0xff]
        %v1048 = vld [vmem:[%s953 + $0x90] sm:$0xff]
        %v1049 = vld [vmem:[%s953 + $0x98] sm:$0xff]
        %v1050 = vld [vmem:[%s953 + $0xa0] sm:$0xff]
        %v1051 = vld [vmem:[%s953 + $0xa8] sm:$0xff]
        %v1052 = vld [vmem:[%s953 + $0xb0] sm:$0xff]
        %v1053 = vld [vmem:[%s953 + $0xb8] sm:$0xff]
        %v1054 = vld [vmem:[%s953 + $0xc0] sm:$0xff]
        %v1055 = vld [vmem:[%s953 + $0xc8] sm:$0xff]
        %v1056 = vld [vmem:[%s953 + $0xd0] sm:$0xff]
        %v1057 = vld [vmem:[%s953 + $0xd8] sm:$0xff]
        %v1058 = vld [vmem:[%s953 + $0xe0] sm:$0xff]
        %v1059 = vld [vmem:[%s953 + $0xe8] sm:$0xff]
        %v1060 = vld [vmem:[%s953 + $0xf0] sm:$0xff]
        %v1061 = vld [vmem:[%s953 + $0xf8] sm:$0xff]
        %v1062 = vld [vmem:[%s841] sm:$0xff]
        %v1063 = vld [vmem:[%s841 + $0x8] sm:$0xff]
        %v1064 = vld [vmem:[%s841 + $0x10] sm:$0xff]
        %v1065 = vld [vmem:[%s841 + $0x18] sm:$0xff]
        %v1066 = vld [vmem:[%s841 + $0x20] sm:$0xff]
        %v1067 = vld [vmem:[%s841 + $0x28] sm:$0xff]
        %v1068 = vld [vmem:[%s841 + $0x30] sm:$0xff]
        %v1069 = vld [vmem:[%s841 + $0x38] sm:$0xff]
        %v1070 = vld [vmem:[%s841 + $0x40] sm:$0xff]
        %v1071 = vld [vmem:[%s841 + $0x48] sm:$0xff]
        %v1072 = vld [vmem:[%s841 + $0x50] sm:$0xff]
        %v1073 = vld [vmem:[%s841 + $0x58] sm:$0xff]
        %v1074 = vld [vmem:[%s841 + $0x60] sm:$0xff]
        %v1075 = vld [vmem:[%s841 + $0x68] sm:$0xff]
        %v1076 = vld [vmem:[%s841 + $0x70] sm:$0xff]
        %v1077 = vld [vmem:[%s841 + $0x78] sm:$0xff]
        %v1078 = vld [vmem:[%s841 + $0x80] sm:$0xff]
        %v1079 = vld [vmem:[%s841 + $0x88] sm:$0xff]
        %v1080 = vld [vmem:[%s841 + $0x90] sm:$0xff]
        %v1081 = vld [vmem:[%s841 + $0x98] sm:$0xff]
        %v1082 = vld [vmem:[%s841 + $0xa0] sm:$0xff]
        %v1083 = vld [vmem:[%s841 + $0xa8] sm:$0xff]
        %v1084 = vld [vmem:[%s841 + $0xb0] sm:$0xff]
        %v1085 = vld [vmem:[%s841 + $0xb8] sm:$0xff]
        %v1086 = vld [vmem:[%s841 + $0xc0] sm:$0xff]
        %v1087 = vld [vmem:[%s841 + $0xc8] sm:$0xff]
        %v1088 = vld [vmem:[%s841 + $0xd0] sm:$0xff]
        %v1089 = vld [vmem:[%s841 + $0xd8] sm:$0xff]
        %v1090 = vld [vmem:[%s841 + $0xe0] sm:$0xff]
        %v1091 = vld [vmem:[%s841 + $0xe8] sm:$0xff]
        %v1092 = vld [vmem:[%s841 + $0xf0] sm:$0xff]
        %v1093 = vld [vmem:[%s841 + $0xf8] sm:$0xff]
        %v1094 = vld [vmem:[%s941] sm:$0xff]
        %v1095 = vld [vmem:[%s941 + $0x8] sm:$0xff]
        %v1096 = vld [vmem:[%s941 + $0x10] sm:$0xff]
        %v1097 = vld [vmem:[%s941 + $0x18] sm:$0xff]
        %v1098 = vld [vmem:[%s941 + $0x20] sm:$0xff]
        %v1099 = vld [vmem:[%s941 + $0x28] sm:$0xff]
        %v1100 = vld [vmem:[%s941 + $0x30] sm:$0xff]
        %v1101 = vld [vmem:[%s941 + $0x38] sm:$0xff]
        %v1102 = vld [vmem:[%s941 + $0x40] sm:$0xff]
        %v1103 = vld [vmem:[%s941 + $0x48] sm:$0xff]
        %v1104 = vld [vmem:[%s941 + $0x50] sm:$0xff]
        %v1105 = vld [vmem:[%s941 + $0x58] sm:$0xff]
        %v1106 = vld [vmem:[%s941 + $0x60] sm:$0xff]
        %v1107 = vld [vmem:[%s941 + $0x68] sm:$0xff]
        %v1108 = vld [vmem:[%s941 + $0x70] sm:$0xff]
        %v1109 = vld [vmem:[%s941 + $0x78] sm:$0xff]
        %v1111 = vperm.slane %v969, 0
        %vm1113 = vcmask 64512
        %v1115 = vsel %vm1113, %v1094, 0
        %v1118 = vsel %vm1113, %v1095, 0
        %v1121 = vsel %vm1113, %v1096, 0
        %v1124 = vsel %vm1113, %v1097, 0
        %v1127 = vsel %vm1113, %v1098, 0
        %v1130 = vsel %vm1113, %v1099, 0
        %v1133 = vsel %vm1113, %v1100, 0
        %v1136 = vsel %vm1113, %v1101, 0
        %v1139 = vsel %vm1113, %v1102, 0
        %v1142 = vsel %vm1113, %v1103, 0
        %v1145 = vsel %vm1113, %v1104, 0
        %v1148 = vsel %vm1113, %v1105, 0
        %v1151 = vsel %vm1113, %v1106, 0
        %v1154 = vsel %vm1113, %v1107, 0
        %v1157 = vsel %vm1113, %v1108, 0
        %v1160 = vsel %vm1113, %v1109, 0
        %1162 = vmatpush.msra.mxu0 0.0
        %1163 = vmatpush.msra.mxu0 0.0
        %1164 = vmatpush.msra.mxu0 0.0
        %1165 = vmatpush.msra.mxu0 0.0
        %1166 = vmatpush.msra.mxu0 0.0
        %1167 = vmatpush.msra.mxu0 0.0
        %1168 = vmatpush.msra.mxu0 0.0
        %1169 = vmatpush.msra.mxu0 0.0
        %1170 = vmatpush.msra.mxu0 0.0
        %1171 = vmatpush.msra.mxu0 0.0
        %1172 = vmatpush.msra.mxu0 0.0
        %1173 = vmatpush.msra.mxu0 0.0
        %1174 = vmatpush.msra.mxu0 0.0
        %1175 = vmatpush.msra.mxu0 0.0
        %1176 = vmatpush.msra.mxu0 0.0
        %1177 = vmatpush.msra.mxu0 %v968
        %1178 = vmatmul.f32.gmra.mxu0 %v1115
        %v1179 = vpop.f32.mrf.mxu0
        %v1180 = vadd.f32 %v1111, %v1179
        %1181 = vmatmul.f32.gmra.mxu0 %v1118
        %v1182 = vpop.f32.mrf.mxu0
        %v1183 = vadd.f32 %v1111, %v1182
        %1184 = vmatmul.f32.gmra.mxu0 %v1121
        %v1185 = vpop.f32.mrf.mxu0
        %v1186 = vadd.f32 %v1111, %v1185
        %1187 = vmatmul.f32.gmra.mxu0 %v1124
        %v1188 = vpop.f32.mrf.mxu0
        %v1189 = vadd.f32 %v1111, %v1188
        %1190 = vmatmul.f32.gmra.mxu0 %v1127
        %v1191 = vpop.f32.mrf.mxu0
        %v1192 = vadd.f32 %v1111, %v1191
        %1193 = vmatmul.f32.gmra.mxu0 %v1130
        %v1194 = vpop.f32.mrf.mxu0
        %v1195 = vadd.f32 %v1111, %v1194
        %1196 = vmatmul.f32.gmra.mxu0 %v1133
        %v1197 = vpop.f32.mrf.mxu0
        %v1198 = vadd.f32 %v1111, %v1197
        %1199 = vmatmul.f32.gmra.mxu0 %v1136
        %v1200 = vpop.f32.mrf.mxu0
        %v1201 = vadd.f32 %v1111, %v1200
        %1202 = vmatmul.f32.gmra.mxu0 %v1139
        %v1203 = vpop.f32.mrf.mxu0
        %v1204 = vadd.f32 %v1111, %v1203
        %1205 = vmatmul.f32.gmra.mxu0 %v1142
        %v1206 = vpop.f32.mrf.mxu0
        %v1207 = vadd.f32 %v1111, %v1206
        %1208 = vmatmul.f32.gmra.mxu0 %v1145
        %v1209 = vpop.f32.mrf.mxu0
        %v1210 = vadd.f32 %v1111, %v1209
        %1211 = vmatmul.f32.gmra.mxu0 %v1148
        %v1212 = vpop.f32.mrf.mxu0
        %v1213 = vadd.f32 %v1111, %v1212
        %1214 = vmatmul.f32.gmra.mxu0 %v1151
        %v1215 = vpop.f32.mrf.mxu0
        %v1216 = vadd.f32 %v1111, %v1215
        %1217 = vmatmul.f32.gmra.mxu0 %v1154
        %v1218 = vpop.f32.mrf.mxu0
        %v1219 = vadd.f32 %v1111, %v1218
        %1220 = vmatmul.f32.gmra.mxu0 %v1157
        %v1221 = vpop.f32.mrf.mxu0
        %v1222 = vadd.f32 %v1111, %v1221
        %1223 = vmatmul.f32.gmra.mxu0 %v1160
        %v1224 = vpop.f32.mrf.mxu0
        %v1225 = vadd.f32 %v1111, %v1224
        %1226 = vdwg.mxu0
        %v1227 = vld [vmem:[%s947] sm:$0xff]
        %v1228 = vld [vmem:[%s947 + $0x8] sm:$0xff]
        %v1229 = vld [vmem:[%s947 + $0x10] sm:$0xff]
        %v1230 = vld [vmem:[%s947 + $0x18] sm:$0xff]
        %v1231 = vld [vmem:[%s947 + $0x20] sm:$0xff]
        %v1232 = vld [vmem:[%s947 + $0x28] sm:$0xff]
        %v1233 = vld [vmem:[%s947 + $0x30] sm:$0xff]
        %v1234 = vld [vmem:[%s947 + $0x38] sm:$0xff]
        %v1235 = vld [vmem:[%s947 + $0x40] sm:$0xff]
        %v1236 = vld [vmem:[%s947 + $0x48] sm:$0xff]
        %v1237 = vld [vmem:[%s947 + $0x50] sm:$0xff]
        %v1238 = vld [vmem:[%s947 + $0x58] sm:$0xff]
        %v1239 = vld [vmem:[%s947 + $0x60] sm:$0xff]
        %v1240 = vld [vmem:[%s947 + $0x68] sm:$0xff]
        %v1241 = vld [vmem:[%s947 + $0x70] sm:$0xff]
        %v1242 = vld [vmem:[%s947 + $0x78] sm:$0xff]
        %v1243 = vld [vmem:[%s947 + $0x80] sm:$0xff]
        %v1244 = vld [vmem:[%s947 + $0x88] sm:$0xff]
        %v1245 = vld [vmem:[%s947 + $0x90] sm:$0xff]
        %v1246 = vld [vmem:[%s947 + $0x98] sm:$0xff]
        %v1247 = vld [vmem:[%s947 + $0xa0] sm:$0xff]
        %v1248 = vld [vmem:[%s947 + $0xa8] sm:$0xff]
        %v1249 = vld [vmem:[%s947 + $0xb0] sm:$0xff]
        %v1250 = vld [vmem:[%s947 + $0xb8] sm:$0xff]
        %v1251 = vld [vmem:[%s947 + $0xc0] sm:$0xff]
        %v1252 = vld [vmem:[%s947 + $0xc8] sm:$0xff]
        %v1253 = vld [vmem:[%s947 + $0xd0] sm:$0xff]
        %v1254 = vld [vmem:[%s947 + $0xd8] sm:$0xff]
        %v1255 = vld [vmem:[%s947 + $0xe0] sm:$0xff]
        %v1256 = vld [vmem:[%s947 + $0xe8] sm:$0xff]
        %v1257 = vld [vmem:[%s947 + $0xf0] sm:$0xff]
        %v1258 = vld [vmem:[%s947 + $0xf8] sm:$0xff]
        %v1260 = vperm.slane %v971, 0
        %vm1262 = vcmask 48128
        %v1264 = vsel %vm1262, %v1227, 0
        %v1267 = vsel %vm1262, %v1228, 0
        %v1270 = vsel %vm1262, %v1229, 0
        %v1273 = vsel %vm1262, %v1230, 0
        %v1276 = vsel %vm1262, %v1231, 0
        %v1279 = vsel %vm1262, %v1232, 0
        %v1282 = vsel %vm1262, %v1233, 0
        %v1285 = vsel %vm1262, %v1234, 0
        %v1288 = vsel %vm1262, %v1235, 0
        %v1291 = vsel %vm1262, %v1236, 0
        %v1294 = vsel %vm1262, %v1237, 0
        %v1297 = vsel %vm1262, %v1238, 0
        %v1300 = vsel %vm1262, %v1239, 0
        %v1303 = vsel %vm1262, %v1240, 0
        %v1306 = vsel %vm1262, %v1241, 0
        %v1309 = vsel %vm1262, %v1242, 0
        %v1312 = vsel %vm1262, %v1243, 0
        %v1315 = vsel %vm1262, %v1244, 0
        %v1318 = vsel %vm1262, %v1245, 0
        %v1321 = vsel %vm1262, %v1246, 0
        %v1324 = vsel %vm1262, %v1247, 0
        %v1327 = vsel %vm1262, %v1248, 0
        %v1330 = vsel %vm1262, %v1249, 0
        %v1333 = vsel %vm1262, %v1250, 0
        %v1336 = vsel %vm1262, %v1251, 0
        %v1339 = vsel %vm1262, %v1252, 0
        %v1342 = vsel %vm1262, %v1253, 0
        %v1345 = vsel %vm1262, %v1254, 0
        %v1348 = vsel %vm1262, %v1255, 0
        %v1351 = vsel %vm1262, %v1256, 0
        %v1354 = vsel %vm1262, %v1257, 0
        %v1357 = vsel %vm1262, %v1258, 0
        %vm1359 = vcmask 1045504
        %v1361 = vsel %vm1359, %v970, 0
        %1363 = vmatpush.msra.mxu0 0.0
        %1364 = vmatpush.msra.mxu0 0.0
        %1365 = vmatpush.msra.mxu0 0.0
        %1366 = vmatpush.msra.mxu0 0.0
        %1367 = vmatpush.msra.mxu0 0.0
        %1368 = vmatpush.msra.mxu0 0.0
        %1369 = vmatpush.msra.mxu0 0.0
        %1370 = vmatpush.msra.mxu0 0.0
        %1371 = vmatpush.msra.mxu0 0.0
        %1372 = vmatpush.msra.mxu0 0.0
        %1373 = vmatpush.msra.mxu0 0.0
        %1374 = vmatpush.msra.mxu0 0.0
        %1375 = vmatpush.msra.mxu0 0.0
        %1376 = vmatpush.msra.mxu0 0.0
        %1377 = vmatpush.msra.mxu0 0.0
        %1378 = vmatpush.msra.mxu0 %v1361
        %1379 = vmatmul.f32.gmra.mxu0 %v1264
        %v1380 = vpop.f32.mrf.mxu0
        %v1381 = vadd.f32 %v1260, %v1380
        %1382 = vmatmul.f32.gmra.mxu0 %v1267
        %v1383 = vpop.f32.mrf.mxu0
        %v1384 = vadd.f32 %v1260, %v1383
        %1385 = vmatmul.f32.gmra.mxu0 %v1270
        %v1386 = vpop.f32.mrf.mxu0
        %v1387 = vadd.f32 %v1260, %v1386
        %1388 = vmatmul.f32.gmra.mxu0 %v1273
        %v1389 = vpop.f32.mrf.mxu0
        %v1390 = vadd.f32 %v1260, %v1389
        %1391 = vmatmul.f32.gmra.mxu0 %v1276
        %v1392 = vpop.f32.mrf.mxu0
        %v1393 = vadd.f32 %v1260, %v1392
        %1394 = vmatmul.f32.gmra.mxu0 %v1279
        %v1395 = vpop.f32.mrf.mxu0
        %v1396 = vadd.f32 %v1260, %v1395
        %1397 = vmatmul.f32.gmra.mxu0 %v1282
        %v1398 = vpop.f32.mrf.mxu0
        %v1399 = vadd.f32 %v1260, %v1398
        %1400 = vmatmul.f32.gmra.mxu0 %v1285
        %v1401 = vpop.f32.mrf.mxu0
        %v1402 = vadd.f32 %v1260, %v1401
        %1403 = vmatmul.f32.gmra.mxu0 %v1288
        %v1404 = vpop.f32.mrf.mxu0
        %v1405 = vadd.f32 %v1260, %v1404
        %1406 = vmatmul.f32.gmra.mxu0 %v1291
        %v1407 = vpop.f32.mrf.mxu0
        %v1408 = vadd.f32 %v1260, %v1407
        %1409 = vmatmul.f32.gmra.mxu0 %v1294
        %v1410 = vpop.f32.mrf.mxu0
        %v1411 = vadd.f32 %v1260, %v1410
        %1412 = vmatmul.f32.gmra.mxu0 %v1297
        %v1413 = vpop.f32.mrf.mxu0
        %v1414 = vadd.f32 %v1260, %v1413
        %1415 = vmatmul.f32.gmra.mxu0 %v1300
        %v1416 = vpop.f32.mrf.mxu0
        %v1417 = vadd.f32 %v1260, %v1416
        %1418 = vmatmul.f32.gmra.mxu0 %v1303
        %v1419 = vpop.f32.mrf.mxu0
        %v1420 = vadd.f32 %v1260, %v1419
        %1421 = vmatmul.f32.gmra.mxu0 %v1306
        %v1422 = vpop.f32.mrf.mxu0
        %v1423 = vadd.f32 %v1260, %v1422
        %1424 = vmatmul.f32.gmra.mxu0 %v1309
        %v1425 = vpop.f32.mrf.mxu0
        %v1426 = vadd.f32 %v1260, %v1425
        %1427 = vmatmul.f32.gmra.mxu0 %v1312
        %v1428 = vpop.f32.mrf.mxu0
        %v1429 = vadd.f32 %v1260, %v1428
        %1430 = vmatmul.f32.gmra.mxu0 %v1315
        %v1431 = vpop.f32.mrf.mxu0
        %v1432 = vadd.f32 %v1260, %v1431
        %1433 = vmatmul.f32.gmra.mxu0 %v1318
        %v1434 = vpop.f32.mrf.mxu0
        %v1435 = vadd.f32 %v1260, %v1434
        %1436 = vmatmul.f32.gmra.mxu0 %v1321
        %v1437 = vpop.f32.mrf.mxu0
        %v1438 = vadd.f32 %v1260, %v1437
        %1439 = vmatmul.f32.gmra.mxu0 %v1324
        %v1440 = vpop.f32.mrf.mxu0
        %v1441 = vadd.f32 %v1260, %v1440
        %1442 = vmatmul.f32.gmra.mxu0 %v1327
        %v1443 = vpop.f32.mrf.mxu0
        %v1444 = vadd.f32 %v1260, %v1443
        %1445 = vmatmul.f32.gmra.mxu0 %v1330
        %v1446 = vpop.f32.mrf.mxu0
        %v1447 = vadd.f32 %v1260, %v1446
        %1448 = vmatmul.f32.gmra.mxu0 %v1333
        %v1449 = vpop.f32.mrf.mxu0
        %v1450 = vadd.f32 %v1260, %v1449
        %1451 = vmatmul.f32.gmra.mxu0 %v1336
        %v1452 = vpop.f32.mrf.mxu0
        %v1453 = vadd.f32 %v1260, %v1452
        %1454 = vmatmul.f32.gmra.mxu0 %v1339
        %v1455 = vpop.f32.mrf.mxu0
        %v1456 = vadd.f32 %v1260, %v1455
        %1457 = vmatmul.f32.gmra.mxu0 %v1342
        %v1458 = vpop.f32.mrf.mxu0
        %v1459 = vadd.f32 %v1260, %v1458
        %1460 = vmatmul.f32.gmra.mxu0 %v1345
        %v1461 = vpop.f32.mrf.mxu0
        %v1462 = vadd.f32 %v1260, %v1461
        %1463 = vmatmul.f32.gmra.mxu0 %v1348
        %v1464 = vpop.f32.mrf.mxu0
        %v1465 = vadd.f32 %v1260, %v1464
        %1466 = vmatmul.f32.gmra.mxu0 %v1351
        %v1467 = vpop.f32.mrf.mxu0
        %v1468 = vadd.f32 %v1260, %v1467
        %1469 = vmatmul.f32.gmra.mxu0 %v1354
        %v1470 = vpop.f32.mrf.mxu0
        %v1471 = vadd.f32 %v1260, %v1470
        %1472 = vmatmul.f32.gmra.mxu0 %v1357
        %v1473 = vpop.f32.mrf.mxu0
        %v1474 = vadd.f32 %v1260, %v1473
        %1475 = vdwg.mxu0
        %1476 = vmatpush.msra.mxu0 %v1225
        %1477 = vmatpush.msra.mxu0 %v1222
        %1478 = vmatpush.msra.mxu0 %v1219
        %1479 = vmatpush.msra.mxu0 %v1216
        %1480 = vmatpush.msra.mxu0 %v1213
        %1481 = vmatpush.msra.mxu0 %v1210
        %1482 = vmatpush.msra.mxu0 %v1207
        %1483 = vmatpush.msra.mxu0 %v1204
        %1484 = vmatpush.msra.mxu0 %v1201
        %1485 = vmatpush.msra.mxu0 %v1198
        %1486 = vmatpush.msra.mxu0 %v1195
        %1487 = vmatpush.msra.mxu0 %v1192
        %1488 = vmatpush.msra.mxu0 %v1189
        %1489 = vmatpush.msra.mxu0 %v1186
        %1490 = vmatpush.msra.mxu0 %v1183
        %1491 = vmatpush.msra.mxu0 %v1180
        %1492 = vmatmul.f32.gmra.mxu0 %v1030
        %v1493 = vpop.f32.mrf.mxu0
        %v1494 = vadd.f32 %v1381, %v1493
        %1495 = vmatmul.f32.gmra.mxu0 %v1031
        %v1496 = vpop.f32.mrf.mxu0
        %v1497 = vadd.f32 %v1384, %v1496
        %1498 = vmatmul.f32.gmra.mxu0 %v1032
        %v1499 = vpop.f32.mrf.mxu0
        %v1500 = vadd.f32 %v1387, %v1499
        %1501 = vmatmul.f32.gmra.mxu0 %v1033
        %v1502 = vpop.f32.mrf.mxu0
        %v1503 = vadd.f32 %v1390, %v1502
        %1504 = vmatmul.f32.gmra.mxu0 %v1034
        %v1505 = vpop.f32.mrf.mxu0
        %v1506 = vadd.f32 %v1393, %v1505
        %1507 = vmatmul.f32.gmra.mxu0 %v1035
        %v1508 = vpop.f32.mrf.mxu0
        %v1509 = vadd.f32 %v1396, %v1508
        %1510 = vmatmul.f32.gmra.mxu0 %v1036
        %v1511 = vpop.f32.mrf.mxu0
        %v1512 = vadd.f32 %v1399, %v1511
        %1513 = vmatmul.f32.gmra.mxu0 %v1037
        %v1514 = vpop.f32.mrf.mxu0
        %v1515 = vadd.f32 %v1402, %v1514
        %1516 = vmatmul.f32.gmra.mxu0 %v1038
        %v1517 = vpop.f32.mrf.mxu0
        %v1518 = vadd.f32 %v1405, %v1517
        %1519 = vmatmul.f32.gmra.mxu0 %v1039
        %v1520 = vpop.f32.mrf.mxu0
        %v1521 = vadd.f32 %v1408, %v1520
        %1522 = vmatmul.f32.gmra.mxu0 %v1040
        %v1523 = vpop.f32.mrf.mxu0
        %v1524 = vadd.f32 %v1411, %v1523
        %1525 = vmatmul.f32.gmra.mxu0 %v1041
        %v1526 = vpop.f32.mrf.mxu0
        %v1527 = vadd.f32 %v1414, %v1526
        %1528 = vmatmul.f32.gmra.mxu0 %v1042
        %v1529 = vpop.f32.mrf.mxu0
        %v1530 = vadd.f32 %v1417, %v1529
        %1531 = vmatmul.f32.gmra.mxu0 %v1043
        %v1532 = vpop.f32.mrf.mxu0
        %v1533 = vadd.f32 %v1420, %v1532
        %1534 = vmatmul.f32.gmra.mxu0 %v1044
        %v1535 = vpop.f32.mrf.mxu0
        %v1536 = vadd.f32 %v1423, %v1535
        %1537 = vmatmul.f32.gmra.mxu0 %v1045
        %v1538 = vpop.f32.mrf.mxu0
        %v1539 = vadd.f32 %v1426, %v1538
        %1540 = vmatmul.f32.gmra.mxu0 %v1046
        %v1541 = vpop.f32.mrf.mxu0
        %v1542 = vadd.f32 %v1429, %v1541
        %1543 = vmatmul.f32.gmra.mxu0 %v1047
        %v1544 = vpop.f32.mrf.mxu0
        %v1545 = vadd.f32 %v1432, %v1544
        %1546 = vmatmul.f32.gmra.mxu0 %v1048
        %v1547 = vpop.f32.mrf.mxu0
        %v1548 = vadd.f32 %v1435, %v1547
        %1549 = vmatmul.f32.gmra.mxu0 %v1049
        %v1550 = vpop.f32.mrf.mxu0
        %v1551 = vadd.f32 %v1438, %v1550
        %1552 = vmatmul.f32.gmra.mxu0 %v1050
        %v1553 = vpop.f32.mrf.mxu0
        %v1554 = vadd.f32 %v1441, %v1553
        %1555 = vmatmul.f32.gmra.mxu0 %v1051
        %v1556 = vpop.f32.mrf.mxu0
        %v1557 = vadd.f32 %v1444, %v1556
        %1558 = vmatmul.f32.gmra.mxu0 %v1052
        %v1559 = vpop.f32.mrf.mxu0
        %v1560 = vadd.f32 %v1447, %v1559
        %1561 = vmatmul.f32.gmra.mxu0 %v1053
        %v1562 = vpop.f32.mrf.mxu0
        %v1563 = vadd.f32 %v1450, %v1562
        %1564 = vmatmul.f32.gmra.mxu0 %v1054
        %v1565 = vpop.f32.mrf.mxu0
        %v1566 = vadd.f32 %v1453, %v1565
        %1567 = vmatmul.f32.gmra.mxu0 %v1055
        %v1568 = vpop.f32.mrf.mxu0
        %v1569 = vadd.f32 %v1456, %v1568
        %1570 = vmatmul.f32.gmra.mxu0 %v1056
        %v1571 = vpop.f32.mrf.mxu0
        %v1572 = vadd.f32 %v1459, %v1571
        %1573 = vmatmul.f32.gmra.mxu0 %v1057
        %v1574 = vpop.f32.mrf.mxu0
        %v1575 = vadd.f32 %v1462, %v1574
        %1576 = vmatmul.f32.gmra.mxu0 %v1058
        %v1577 = vpop.f32.mrf.mxu0
        %v1578 = vadd.f32 %v1465, %v1577
        %1579 = vmatmul.f32.gmra.mxu0 %v1059
        %v1580 = vpop.f32.mrf.mxu0
        %v1581 = vadd.f32 %v1468, %v1580
        %1582 = vmatmul.f32.gmra.mxu0 %v1060
        %v1583 = vpop.f32.mrf.mxu0
        %v1584 = vadd.f32 %v1471, %v1583
        %1585 = vmatmul.f32.gmra.mxu0 %v1061
        %v1586 = vpop.f32.mrf.mxu0
        %v1587 = vadd.f32 %v1474, %v1586
        %1588 = vdwg.mxu0
        %v1589 = vmax.f32 %v1494, 0.0
        %v1590 = vmax.f32 %v1497, 0.0
        %v1591 = vmax.f32 %v1500, 0.0
        %v1592 = vmax.f32 %v1503, 0.0
        %v1593 = vmax.f32 %v1506, 0.0
        %v1594 = vmax.f32 %v1509, 0.0
        %v1595 = vmax.f32 %v1512, 0.0
        %v1596 = vmax.f32 %v1515, 0.0
        %v1597 = vmax.f32 %v1518, 0.0
        %v1598 = vmax.f32 %v1521, 0.0
        %v1599 = vmax.f32 %v1524, 0.0
        %v1600 = vmax.f32 %v1527, 0.0
        %v1601 = vmax.f32 %v1530, 0.0
        %v1602 = vmax.f32 %v1533, 0.0
        %v1603 = vmax.f32 %v1536, 0.0
        %v1604 = vmax.f32 %v1539, 0.0
        %v1605 = vmax.f32 %v1542, 0.0
        %v1606 = vmax.f32 %v1545, 0.0
        %v1607 = vmax.f32 %v1548, 0.0
        %v1608 = vmax.f32 %v1551, 0.0
        %v1609 = vmax.f32 %v1554, 0.0
        %v1610 = vmax.f32 %v1557, 0.0
        %v1611 = vmax.f32 %v1560, 0.0
        %v1612 = vmax.f32 %v1563, 0.0
        %v1613 = vmax.f32 %v1566, 0.0
        %v1614 = vmax.f32 %v1569, 0.0
        %v1615 = vmax.f32 %v1572, 0.0
        %v1616 = vmax.f32 %v1575, 0.0
        %v1617 = vmax.f32 %v1578, 0.0
        %v1618 = vmax.f32 %v1581, 0.0
        %v1619 = vmax.f32 %v1584, 0.0
        %v1620 = vmax.f32 %v1587, 0.0
        %v1621 = vadd.f32 %v1589, 1e-07
        %v1622 = vadd.f32 %v1590, 1e-07
        %v1623 = vadd.f32 %v1591, 1e-07
        %v1624 = vadd.f32 %v1592, 1e-07
        %v1625 = vadd.f32 %v1593, 1e-07
        %v1626 = vadd.f32 %v1594, 1e-07
        %v1627 = vadd.f32 %v1595, 1e-07
        %v1628 = vadd.f32 %v1596, 1e-07
        %v1629 = vadd.f32 %v1597, 1e-07
        %v1630 = vadd.f32 %v1598, 1e-07
        %v1631 = vadd.f32 %v1599, 1e-07
        %v1632 = vadd.f32 %v1600, 1e-07
        %v1633 = vadd.f32 %v1601, 1e-07
        %v1634 = vadd.f32 %v1602, 1e-07
        %v1635 = vadd.f32 %v1603, 1e-07
        %v1636 = vadd.f32 %v1604, 1e-07
        %v1637 = vadd.f32 %v1605, 1e-07
        %v1638 = vadd.f32 %v1606, 1e-07
        %v1639 = vadd.f32 %v1607, 1e-07
        %v1640 = vadd.f32 %v1608, 1e-07
        %v1641 = vadd.f32 %v1609, 1e-07
        %v1642 = vadd.f32 %v1610, 1e-07
        %v1643 = vadd.f32 %v1611, 1e-07
        %v1644 = vadd.f32 %v1612, 1e-07
        %v1645 = vadd.f32 %v1613, 1e-07
        %v1646 = vadd.f32 %v1614, 1e-07
        %v1647 = vadd.f32 %v1615, 1e-07
        %v1648 = vadd.f32 %v1616, 1e-07
        %v1649 = vadd.f32 %v1617, 1e-07
        %v1650 = vadd.f32 %v1618, 1e-07
        %v1651 = vadd.f32 %v1619, 1e-07
        %v1652 = vadd.f32 %v1620, 1e-07
        %vm1653 = vcmask 261120
        %v1654 = vsel %vm1653, %v1621, -inf
        %v1655 = vsel %vm1653, %v1622, -inf
        %v1656 = vsel %vm1653, %v1623, -inf
        %v1657 = vsel %vm1653, %v1624, -inf
        %v1658 = vsel %vm1653, %v1625, -inf
        %v1659 = vmax.f32 %v1654, %v1658
        %v1660 = vsel %vm1653, %v1626, -inf
        %v1661 = vmax.f32 %v1655, %v1660
        %v1662 = vsel %vm1653, %v1627, -inf
        %v1663 = vmax.f32 %v1656, %v1662
        %v1664 = vsel %vm1653, %v1628, -inf
        %v1665 = vmax.f32 %v1657, %v1664
        %v1666 = vsel %vm1653, %v1629, -inf
        %v1667 = vmax.f32 %v1659, %v1666
        %v1668 = vsel %vm1653, %v1630, -inf
        %v1669 = vmax.f32 %v1661, %v1668
        %v1670 = vsel %vm1653, %v1631, -inf
        %v1671 = vmax.f32 %v1663, %v1670
        %v1672 = vsel %vm1653, %v1632, -inf
        %v1673 = vmax.f32 %v1665, %v1672
        %v1674 = vsel %vm1653, %v1633, -inf
        %v1675 = vmax.f32 %v1667, %v1674
        %v1676 = vsel %vm1653, %v1634, -inf
        %v1677 = vmax.f32 %v1669, %v1676
        %v1678 = vsel %vm1653, %v1635, -inf
        %v1679 = vmax.f32 %v1671, %v1678
        %v1680 = vsel %vm1653, %v1636, -inf
        %v1681 = vmax.f32 %v1673, %v1680
        %v1682 = vsel %vm1653, %v1637, -inf
        %v1683 = vmax.f32 %v1675, %v1682
        %v1684 = vsel %vm1653, %v1638, -inf
        %v1685 = vmax.f32 %v1677, %v1684
        %v1686 = vsel %vm1653, %v1639, -inf
        %v1687 = vmax.f32 %v1679, %v1686
        %v1688 = vsel %vm1653, %v1640, -inf
        %v1689 = vmax.f32 %v1681, %v1688
        %v1690 = vsel %vm1653, %v1641, -inf
        %v1691 = vmax.f32 %v1683, %v1690
        %v1692 = vsel %vm1653, %v1642, -inf
        %v1693 = vmax.f32 %v1685, %v1692
        %v1694 = vsel %vm1653, %v1643, -inf
        %v1695 = vmax.f32 %v1687, %v1694
        %v1696 = vsel %vm1653, %v1644, -inf
        %v1697 = vmax.f32 %v1689, %v1696
        %v1698 = vsel %vm1653, %v1645, -inf
        %v1699 = vmax.f32 %v1691, %v1698
        %v1700 = vsel %vm1653, %v1646, -inf
        %v1701 = vmax.f32 %v1693, %v1700
        %v1702 = vsel %vm1653, %v1647, -inf
        %v1703 = vmax.f32 %v1695, %v1702
        %v1704 = vsel %vm1653, %v1648, -inf
        %v1705 = vmax.f32 %v1697, %v1704
        %v1706 = vsel %vm1653, %v1649, -inf
        %v1707 = vmax.f32 %v1699, %v1706
        %v1708 = vsel %vm1653, %v1650, -inf
        %v1709 = vmax.f32 %v1701, %v1708
        %v1710 = vsel %vm1653, %v1651, -inf
        %v1711 = vmax.f32 %v1703, %v1710
        %v1712 = vsel %vm1653, %v1652, -inf
        %v1713 = vmax.f32 %v1705, %v1712
        %v1714 = vmax.f32 %v1707, %v1709
        %v1715 = vmax.f32 %v1711, %v1713
        %v1716 = vmax.f32 %v1714, %v1715
        %v1717 = vrot.slane %v1716, 4
        %v1718 = vmax.f32 %v1716, %v1717
        %v1719 = vrot.slane %v1718, 2
        %v1720 = vmax.f32 %v1718, %v1719
        %v1721 = vrot.slane %v1720, 1
        %v1722 = vmax.f32 %v1720, %v1721
        %v1723 = vsub.f32 %v1621, %v1722
        %v1724 = vsub.f32 %v1622, %v1722
        %v1725 = vsub.f32 %v1623, %v1722
        %v1726 = vsub.f32 %v1624, %v1722
        %v1727 = vsub.f32 %v1625, %v1722
        %v1728 = vsub.f32 %v1626, %v1722
        %v1729 = vsub.f32 %v1627, %v1722
        %v1730 = vsub.f32 %v1628, %v1722
        %v1731 = vsub.f32 %v1629, %v1722
        %v1732 = vsub.f32 %v1630, %v1722
        %v1733 = vsub.f32 %v1631, %v1722
        %v1734 = vsub.f32 %v1632, %v1722
        %v1735 = vsub.f32 %v1633, %v1722
        %v1736 = vsub.f32 %v1634, %v1722
        %v1737 = vsub.f32 %v1635, %v1722
        %v1738 = vsub.f32 %v1636, %v1722
        %v1739 = vsub.f32 %v1637, %v1722
        %v1740 = vsub.f32 %v1638, %v1722
        %v1741 = vsub.f32 %v1639, %v1722
        %v1742 = vsub.f32 %v1640, %v1722
        %v1743 = vsub.f32 %v1641, %v1722
        %v1744 = vsub.f32 %v1642, %v1722
        %v1745 = vsub.f32 %v1643, %v1722
        %v1746 = vsub.f32 %v1644, %v1722
        %v1747 = vsub.f32 %v1645, %v1722
        %v1748 = vsub.f32 %v1646, %v1722
        %v1749 = vsub.f32 %v1647, %v1722
        %v1750 = vsub.f32 %v1648, %v1722
        %v1751 = vsub.f32 %v1649, %v1722
        %v1752 = vsub.f32 %v1650, %v1722
        %v1753 = vsub.f32 %v1651, %v1722
        %v1754 = vsub.f32 %v1652, %v1722
        %v1755 = vmul.f32 %v1723, 1.442695
        %v1756 = vpow.pop %v1755
        %v1757 = vmul.f32 %v1724, 1.442695
        %v1758 = vpow.pop %v1757
        %v1759 = vmul.f32 %v1725, 1.442695
        %v1760 = vpow.pop %v1759
        %v1761 = vmul.f32 %v1726, 1.442695
        %v1762 = vpow.pop %v1761
        %v1763 = vmul.f32 %v1727, 1.442695
        %v1764 = vpow.pop %v1763
        %v1765 = vmul.f32 %v1728, 1.442695
        %v1766 = vpow.pop %v1765
        %v1767 = vmul.f32 %v1729, 1.442695
        %v1768 = vpow.pop %v1767
        %v1769 = vmul.f32 %v1730, 1.442695
        %v1770 = vpow.pop %v1769
        %v1771 = vmul.f32 %v1731, 1.442695
        %v1772 = vpow.pop %v1771
        %v1773 = vmul.f32 %v1732, 1.442695
        %v1774 = vpow.pop %v1773
        %v1775 = vmul.f32 %v1733, 1.442695
        %v1776 = vpow.pop %v1775
        %v1777 = vmul.f32 %v1734, 1.442695
        %v1778 = vpow.pop %v1777
        %v1779 = vmul.f32 %v1735, 1.442695
        %v1780 = vpow.pop %v1779
        %v1781 = vmul.f32 %v1736, 1.442695
        %v1782 = vpow.pop %v1781
        %v1783 = vmul.f32 %v1737, 1.442695
        %v1784 = vpow.pop %v1783
        %v1785 = vmul.f32 %v1738, 1.442695
        %v1786 = vpow.pop %v1785
        %v1787 = vmul.f32 %v1739, 1.442695
        %v1788 = vpow.pop %v1787
        %v1789 = vmul.f32 %v1740, 1.442695
        %v1790 = vpow.pop %v1789
        %v1791 = vmul.f32 %v1741, 1.442695
        %v1792 = vpow.pop %v1791
        %v1793 = vmul.f32 %v1742, 1.442695
        %v1794 = vpow.pop %v1793
        %v1795 = vmul.f32 %v1743, 1.442695
        %v1796 = vpow.pop %v1795
        %v1797 = vmul.f32 %v1744, 1.442695
        %v1798 = vpow.pop %v1797
        %v1799 = vmul.f32 %v1745, 1.442695
        %v1800 = vpow.pop %v1799
        %v1801 = vmul.f32 %v1746, 1.442695
        %v1802 = vpow.pop %v1801
        %v1803 = vmul.f32 %v1747, 1.442695
        %v1804 = vpow.pop %v1803
        %v1805 = vmul.f32 %v1748, 1.442695
        %v1806 = vpow.pop %v1805
        %v1807 = vmul.f32 %v1749, 1.442695
        %v1808 = vpow.pop %v1807
        %v1809 = vmul.f32 %v1750, 1.442695
        %v1810 = vpow.pop %v1809
        %v1811 = vmul.f32 %v1751, 1.442695
        %v1812 = vpow.pop %v1811
        %v1813 = vmul.f32 %v1752, 1.442695
        %v1814 = vpow.pop %v1813
        %v1815 = vmul.f32 %v1753, 1.442695
        %v1816 = vpow.pop %v1815
        %v1817 = vmul.f32 %v1754, 1.442695
        %v1818 = vpow.pop %v1817
        %v1819 = vmul.f32 %v1756, %v1621
        %v1820 = vmul.f32 %v1758, %v1622
        %v1821 = vmul.f32 %v1760, %v1623
        %v1822 = vmul.f32 %v1762, %v1624
        %v1823 = vmul.f32 %v1764, %v1625
        %v1824 = vmul.f32 %v1766, %v1626
        %v1825 = vmul.f32 %v1768, %v1627
        %v1826 = vmul.f32 %v1770, %v1628
        %v1827 = vmul.f32 %v1772, %v1629
        %v1828 = vmul.f32 %v1774, %v1630
        %v1829 = vmul.f32 %v1776, %v1631
        %v1830 = vmul.f32 %v1778, %v1632
        %v1831 = vmul.f32 %v1780, %v1633
        %v1832 = vmul.f32 %v1782, %v1634
        %v1833 = vmul.f32 %v1784, %v1635
        %v1834 = vmul.f32 %v1786, %v1636
        %v1835 = vmul.f32 %v1788, %v1637
        %v1836 = vmul.f32 %v1790, %v1638
        %v1837 = vmul.f32 %v1792, %v1639
        %v1838 = vmul.f32 %v1794, %v1640
        %v1839 = vmul.f32 %v1796, %v1641
        %v1840 = vmul.f32 %v1798, %v1642
        %v1841 = vmul.f32 %v1800, %v1643
        %v1842 = vmul.f32 %v1802, %v1644
        %v1843 = vmul.f32 %v1804, %v1645
        %v1844 = vmul.f32 %v1806, %v1646
        %v1845 = vmul.f32 %v1808, %v1647
        %v1846 = vmul.f32 %v1810, %v1648
        %v1847 = vmul.f32 %v1812, %v1649
        %v1848 = vmul.f32 %v1814, %v1650
        %v1849 = vmul.f32 %v1816, %v1651
        %v1850 = vmul.f32 %v1818, %v1652
        %1883 = vrot.lane.b32.xlu0 %v1819, 32
        %v1884 = vpop.permute.xlu0 %1883
        %1885 = vrot.lane.b32.xlu0 %v1820, 32
        %v1886 = vpop.permute.xlu0 %1885
        %1887 = vrot.lane.b32.xlu0 %v1821, 32
        %v1888 = vpop.permute.xlu0 %1887
        %1889 = vrot.lane.b32.xlu0 %v1822, 32
        %v1890 = vpop.permute.xlu0 %1889
        %1891 = vrot.lane.b32.xlu0 %v1823, 32
        %v1892 = vpop.permute.xlu0 %1891
        %1893 = vrot.lane.b32.xlu0 %v1824, 32
        %v1894 = vpop.permute.xlu0 %1893
        %1895 = vrot.lane.b32.xlu0 %v1825, 32
        %v1896 = vpop.permute.xlu0 %1895
        %1897 = vrot.lane.b32.xlu0 %v1826, 32
        %v1898 = vpop.permute.xlu0 %1897
        %1899 = vrot.lane.b32.xlu0 %v1827, 32
        %v1900 = vpop.permute.xlu0 %1899
        %1901 = vrot.lane.b32.xlu0 %v1828, 32
        %v1902 = vpop.permute.xlu0 %1901
        %1903 = vrot.lane.b32.xlu0 %v1829, 32
        %v1904 = vpop.permute.xlu0 %1903
        %1905 = vrot.lane.b32.xlu0 %v1830, 32
        %v1906 = vpop.permute.xlu0 %1905
        %1907 = vrot.lane.b32.xlu0 %v1831, 32
        %v1908 = vpop.permute.xlu0 %1907
        %1909 = vrot.lane.b32.xlu0 %v1832, 32
        %v1910 = vpop.permute.xlu0 %1909
        %1911 = vrot.lane.b32.xlu0 %v1833, 32
        %v1912 = vpop.permute.xlu0 %1911
        %1913 = vrot.lane.b32.xlu0 %v1834, 32
        %v1914 = vpop.permute.xlu0 %1913
        %1915 = vrot.lane.b32.xlu0 %v1835, 32
        %v1916 = vpop.permute.xlu0 %1915
        %1917 = vrot.lane.b32.xlu0 %v1836, 32
        %v1918 = vpop.permute.xlu0 %1917
        %1919 = vrot.lane.b32.xlu0 %v1837, 32
        %v1920 = vpop.permute.xlu0 %1919
        %1921 = vrot.lane.b32.xlu0 %v1838, 32
        %v1922 = vpop.permute.xlu0 %1921
        %1923 = vrot.lane.b32.xlu0 %v1839, 32
        %v1924 = vpop.permute.xlu0 %1923
        %1925 = vrot.lane.b32.xlu0 %v1840, 32
        %v1926 = vpop.permute.xlu0 %1925
        %1927 = vrot.lane.b32.xlu0 %v1841, 32
        %v1928 = vpop.permute.xlu0 %1927
        %1929 = vrot.lane.b32.xlu0 %v1842, 32
        %v1930 = vpop.permute.xlu0 %1929
        %1931 = vrot.lane.b32.xlu0 %v1843, 32
        %v1932 = vpop.permute.xlu0 %1931
        %1933 = vrot.lane.b32.xlu0 %v1844, 32
        %v1934 = vpop.permute.xlu0 %1933
        %1935 = vrot.lane.b32.xlu0 %v1845, 32
        %v1936 = vpop.permute.xlu0 %1935
        %1937 = vrot.lane.b32.xlu0 %v1846, 32
        %v1938 = vpop.permute.xlu0 %1937
        %1939 = vrot.lane.b32.xlu0 %v1847, 32
        %v1940 = vpop.permute.xlu0 %1939
        %1941 = vrot.lane.b32.xlu0 %v1848, 32
        %v1942 = vpop.permute.xlu0 %1941
        %1943 = vrot.lane.b32.xlu0 %v1849, 32
        %v1944 = vpop.permute.xlu0 %1943
        %1945 = vrot.lane.b32.xlu0 %v1850, 32
        %v1946 = vpop.permute.xlu0 %1945
        %v1979 = vsel %vm1653, %v1756, %v1884
        %v1980 = vsel %vm1653, %v1758, %v1886
        %v1981 = vsel %vm1653, %v1760, %v1888
        %v1982 = vsel %vm1653, %v1762, %v1890
        %v1983 = vsel %vm1653, %v1764, %v1892
        %v1984 = vsel %vm1653, %v1766, %v1894
        %v1985 = vsel %vm1653, %v1768, %v1896
        %v1986 = vsel %vm1653, %v1770, %v1898
        %v1987 = vsel %vm1653, %v1772, %v1900
        %v1988 = vsel %vm1653, %v1774, %v1902
        %v1989 = vsel %vm1653, %v1776, %v1904
        %v1990 = vsel %vm1653, %v1778, %v1906
        %v1991 = vsel %vm1653, %v1780, %v1908
        %v1992 = vsel %vm1653, %v1782, %v1910
        %v1993 = vsel %vm1653, %v1784, %v1912
        %v1994 = vsel %vm1653, %v1786, %v1914
        %v1995 = vsel %vm1653, %v1788, %v1916
        %v1996 = vsel %vm1653, %v1790, %v1918
        %v1997 = vsel %vm1653, %v1792, %v1920
        %v1998 = vsel %vm1653, %v1794, %v1922
        %v1999 = vsel %vm1653, %v1796, %v1924
        %v2000 = vsel %vm1653, %v1798, %v1926
        %v2001 = vsel %vm1653, %v1800, %v1928
        %v2002 = vsel %vm1653, %v1802, %v1930
        %v2003 = vsel %vm1653, %v1804, %v1932
        %v2004 = vsel %vm1653, %v1806, %v1934
        %v2005 = vsel %vm1653, %v1808, %v1936
        %v2006 = vsel %vm1653, %v1810, %v1938
        %v2007 = vsel %vm1653, %v1812, %v1940
        %v2008 = vsel %vm1653, %v1814, %v1942
        %v2009 = vsel %vm1653, %v1816, %v1944
        %v2010 = vsel %vm1653, %v1818, %v1946
        %2011 = vmatpush.msra.mxu0 %v1994
        %2012 = vmatpush.msra.mxu0 %v1993
        %2013 = vmatpush.msra.mxu0 %v1992
        %2014 = vmatpush.msra.mxu0 %v1991
        %2015 = vmatpush.msra.mxu0 %v1990
        %2016 = vmatpush.msra.mxu0 %v1989
        %2017 = vmatpush.msra.mxu0 %v1988
        %2018 = vmatpush.msra.mxu0 %v1987
        %2019 = vmatpush.msra.mxu0 %v1986
        %2020 = vmatpush.msra.mxu0 %v1985
        %2021 = vmatpush.msra.mxu0 %v1984
        %2022 = vmatpush.msra.mxu0 %v1983
        %2023 = vmatpush.msra.mxu0 %v1982
        %2024 = vmatpush.msra.mxu0 %v1981
        %2025 = vmatpush.msra.mxu0 %v1980
        %2026 = vmatpush.msra.mxu0 %v1979
        %2027 = vmatmul.f32.gmra.mxu0 %v1062
        %v2028 = vpop.f32.mrf.mxu0
        %v2029 = vadd.f32 0.0, %v2028
        %2030 = vmatmul.f32.gmra.mxu0 %v1064
        %v2031 = vpop.f32.mrf.mxu0
        %v2032 = vadd.f32 0.0, %v2031
        %2033 = vmatmul.f32.gmra.mxu0 %v1066
        %v2034 = vpop.f32.mrf.mxu0
        %v2035 = vadd.f32 0.0, %v2034
        %2036 = vmatmul.f32.gmra.mxu0 %v1068
        %v2037 = vpop.f32.mrf.mxu0
        %v2038 = vadd.f32 0.0, %v2037
        %2039 = vmatmul.f32.gmra.mxu0 %v1070
        %v2040 = vpop.f32.mrf.mxu0
        %v2041 = vadd.f32 0.0, %v2040
        %2042 = vmatmul.f32.gmra.mxu0 %v1072
        %v2043 = vpop.f32.mrf.mxu0
        %v2044 = vadd.f32 0.0, %v2043
        %2045 = vmatmul.f32.gmra.mxu0 %v1074
        %v2046 = vpop.f32.mrf.mxu0
        %v2047 = vadd.f32 0.0, %v2046
        %2048 = vmatmul.f32.gmra.mxu0 %v1076
        %v2049 = vpop.f32.mrf.mxu0
        %v2050 = vadd.f32 0.0, %v2049
        %2051 = vmatmul.f32.gmra.mxu0 %v1078
        %v2052 = vpop.f32.mrf.mxu0
        %v2053 = vadd.f32 0.0, %v2052
        %2054 = vmatmul.f32.gmra.mxu0 %v1080
        %v2055 = vpop.f32.mrf.mxu0
        %v2056 = vadd.f32 0.0, %v2055
        %2057 = vmatmul.f32.gmra.mxu0 %v1082
        %v2058 = vpop.f32.mrf.mxu0
        %v2059 = vadd.f32 0.0, %v2058
        %2060 = vmatmul.f32.gmra.mxu0 %v1084
        %v2061 = vpop.f32.mrf.mxu0
        %v2062 = vadd.f32 0.0, %v2061
        %2063 = vmatmul.f32.gmra.mxu0 %v1086
        %v2064 = vpop.f32.mrf.mxu0
        %v2065 = vadd.f32 0.0, %v2064
        %2066 = vmatmul.f32.gmra.mxu0 %v1088
        %v2067 = vpop.f32.mrf.mxu0
        %v2068 = vadd.f32 0.0, %v2067
        %2069 = vmatmul.f32.gmra.mxu0 %v1090
        %v2070 = vpop.f32.mrf.mxu0
        %v2071 = vadd.f32 0.0, %v2070
        %2072 = vmatmul.f32.gmra.mxu0 %v1092
        %v2073 = vpop.f32.mrf.mxu0
        %v2074 = vadd.f32 0.0, %v2073
        %2075 = vdwg.mxu0
        %2076 = vmatpush.msra.mxu0 %v2010
        %2077 = vmatpush.msra.mxu0 %v2009
        %2078 = vmatpush.msra.mxu0 %v2008
        %2079 = vmatpush.msra.mxu0 %v2007
        %2080 = vmatpush.msra.mxu0 %v2006
        %2081 = vmatpush.msra.mxu0 %v2005
        %2082 = vmatpush.msra.mxu0 %v2004
        %2083 = vmatpush.msra.mxu0 %v2003
        %2084 = vmatpush.msra.mxu0 %v2002
        %2085 = vmatpush.msra.mxu0 %v2001
        %2086 = vmatpush.msra.mxu0 %v2000
        %2087 = vmatpush.msra.mxu0 %v1999
        %2088 = vmatpush.msra.mxu0 %v1998
        %2089 = vmatpush.msra.mxu0 %v1997
        %2090 = vmatpush.msra.mxu0 %v1996
        %2091 = vmatpush.msra.mxu0 %v1995
        %2092 = vmatmul.f32.gmra.mxu0 %v1063
        %v2093 = vpop.f32.mrf.mxu0
        %v2094 = vadd.f32 %v2029, %v2093
        %2095 = vmatmul.f32.gmra.mxu0 %v1065
        %v2096 = vpop.f32.mrf.mxu0
        %v2097 = vadd.f32 %v2032, %v2096
        %2098 = vmatmul.f32.gmra.mxu0 %v1067
        %v2099 = vpop.f32.mrf.mxu0
        %v2100 = vadd.f32 %v2035, %v2099
        %2101 = vmatmul.f32.gmra.mxu0 %v1069
        %v2102 = vpop.f32.mrf.mxu0
        %v2103 = vadd.f32 %v2038, %v2102
        %2104 = vmatmul.f32.gmra.mxu0 %v1071
        %v2105 = vpop.f32.mrf.mxu0
        %v2106 = vadd.f32 %v2041, %v2105
        %2107 = vmatmul.f32.gmra.mxu0 %v1073
        %v2108 = vpop.f32.mrf.mxu0
        %v2109 = vadd.f32 %v2044, %v2108
        %2110 = vmatmul.f32.gmra.mxu0 %v1075
        %v2111 = vpop.f32.mrf.mxu0
        %v2112 = vadd.f32 %v2047, %v2111
        %2113 = vmatmul.f32.gmra.mxu0 %v1077
        %v2114 = vpop.f32.mrf.mxu0
        %v2115 = vadd.f32 %v2050, %v2114
        %2116 = vmatmul.f32.gmra.mxu0 %v1079
        %v2117 = vpop.f32.mrf.mxu0
        %v2118 = vadd.f32 %v2053, %v2117
        %2119 = vmatmul.f32.gmra.mxu0 %v1081
        %v2120 = vpop.f32.mrf.mxu0
        %v2121 = vadd.f32 %v2056, %v2120
        %2122 = vmatmul.f32.gmra.mxu0 %v1083
        %v2123 = vpop.f32.mrf.mxu0
        %v2124 = vadd.f32 %v2059, %v2123
        %2125 = vmatmul.f32.gmra.mxu0 %v1085
        %v2126 = vpop.f32.mrf.mxu0
        %v2127 = vadd.f32 %v2062, %v2126
        %2128 = vmatmul.f32.gmra.mxu0 %v1087
        %v2129 = vpop.f32.mrf.mxu0
        %v2130 = vadd.f32 %v2065, %v2129
        %2131 = vmatmul.f32.gmra.mxu0 %v1089
        %v2132 = vpop.f32.mrf.mxu0
        %v2133 = vadd.f32 %v2068, %v2132
        %2134 = vmatmul.f32.gmra.mxu0 %v1091
        %v2135 = vpop.f32.mrf.mxu0
        %v2136 = vadd.f32 %v2071, %v2135
        %2137 = vmatmul.f32.gmra.mxu0 %v1093
        %v2138 = vpop.f32.mrf.mxu0
        %v2139 = vadd.f32 %v2074, %v2138
        %2140 = vdwg.mxu0
        %v2141 = vmax.f32 %v2094, 1e-20
        %v2142 = vmax.f32 %v2097, 1e-20
        %v2143 = vmax.f32 %v2100, 1e-20
        %v2144 = vmax.f32 %v2103, 1e-20
        %v2145 = vmax.f32 %v2106, 1e-20
        %v2146 = vmax.f32 %v2109, 1e-20
        %v2147 = vmax.f32 %v2112, 1e-20
        %v2148 = vmax.f32 %v2115, 1e-20
        %v2149 = vmax.f32 %v2118, 1e-20
        %v2150 = vmax.f32 %v2121, 1e-20
        %v2151 = vmax.f32 %v2124, 1e-20
        %v2152 = vmax.f32 %v2127, 1e-20
        %v2153 = vmax.f32 %v2130, 1e-20
        %v2154 = vmax.f32 %v2133, 1e-20
        %v2155 = vmax.f32 %v2136, 1e-20
        %v2156 = vmax.f32 %v2139, 1e-20
        %v2157 = vrcp.pop %v2141
        %v2158 = vrcp.pop %v2142
        %v2159 = vrcp.pop %v2143
        %v2160 = vrcp.pop %v2144
        %v2161 = vrcp.pop %v2145
        %v2162 = vrcp.pop %v2146
        %v2163 = vrcp.pop %v2147
        %v2164 = vrcp.pop %v2148
        %v2165 = vrcp.pop %v2149
        %v2166 = vrcp.pop %v2150
        %v2167 = vrcp.pop %v2151
        %v2168 = vrcp.pop %v2152
        %v2169 = vrcp.pop %v2153
        %v2170 = vrcp.pop %v2154
        %v2171 = vrcp.pop %v2155
        %v2172 = vrcp.pop %v2156
        %vm2173 = vcmp.gt.f32.partialorder %v2094, 0.0
        %vm2174 = vcmp.gt.f32.partialorder %v2097, 0.0
        %vm2175 = vcmp.gt.f32.partialorder %v2100, 0.0
        %vm2176 = vcmp.gt.f32.partialorder %v2103, 0.0
        %vm2177 = vcmp.gt.f32.partialorder %v2106, 0.0
        %vm2178 = vcmp.gt.f32.partialorder %v2109, 0.0
        %vm2179 = vcmp.gt.f32.partialorder %v2112, 0.0
        %vm2180 = vcmp.gt.f32.partialorder %v2115, 0.0
        %vm2181 = vcmp.gt.f32.partialorder %v2118, 0.0
        %vm2182 = vcmp.gt.f32.partialorder %v2121, 0.0
        %vm2183 = vcmp.gt.f32.partialorder %v2124, 0.0
        %vm2184 = vcmp.gt.f32.partialorder %v2127, 0.0
        %vm2185 = vcmp.gt.f32.partialorder %v2130, 0.0
        %vm2186 = vcmp.gt.f32.partialorder %v2133, 0.0
        %vm2187 = vcmp.gt.f32.partialorder %v2136, 0.0
        %vm2188 = vcmp.gt.f32.partialorder %v2139, 0.0
        %2205 = vrot.lane.b32.xlu0 %v2157, 32
        %v2206 = vpop.permute.xlu0 %2205
        %2207 = vrot.lane.b32.xlu0 %v2158, 32
        %v2208 = vpop.permute.xlu0 %2207
        %2209 = vrot.lane.b32.xlu0 %v2159, 32
        %v2210 = vpop.permute.xlu0 %2209
        %2211 = vrot.lane.b32.xlu0 %v2160, 32
        %v2212 = vpop.permute.xlu0 %2211
        %2213 = vrot.lane.b32.xlu0 %v2161, 32
        %v2214 = vpop.permute.xlu0 %2213
        %2215 = vrot.lane.b32.xlu0 %v2162, 32
        %v2216 = vpop.permute.xlu0 %2215
        %2217 = vrot.lane.b32.xlu0 %v2163, 32
        %v2218 = vpop.permute.xlu0 %2217
        %2219 = vrot.lane.b32.xlu0 %v2164, 32
        %v2220 = vpop.permute.xlu0 %2219
        %2221 = vrot.lane.b32.xlu0 %v2165, 32
        %v2222 = vpop.permute.xlu0 %2221
        %2223 = vrot.lane.b32.xlu0 %v2166, 32
        %v2224 = vpop.permute.xlu0 %2223
        %2225 = vrot.lane.b32.xlu0 %v2167, 32
        %v2226 = vpop.permute.xlu0 %2225
        %2227 = vrot.lane.b32.xlu0 %v2168, 32
        %v2228 = vpop.permute.xlu0 %2227
        %2229 = vrot.lane.b32.xlu0 %v2169, 32
        %v2230 = vpop.permute.xlu0 %2229
        %2231 = vrot.lane.b32.xlu0 %v2170, 32
        %v2232 = vpop.permute.xlu0 %2231
        %2233 = vrot.lane.b32.xlu0 %v2171, 32
        %v2234 = vpop.permute.xlu0 %2233
        %2235 = vrot.lane.b32.xlu0 %v2172, 32
        %v2236 = vpop.permute.xlu0 %2235
        %v2253 = vmul.f32 %v2094, %v2206
        %v2254 = vmul.f32 %v2097, %v2208
        %v2255 = vmul.f32 %v2100, %v2210
        %v2256 = vmul.f32 %v2103, %v2212
        %v2257 = vmul.f32 %v2106, %v2214
        %v2258 = vmul.f32 %v2109, %v2216
        %v2259 = vmul.f32 %v2112, %v2218
        %v2260 = vmul.f32 %v2115, %v2220
        %v2261 = vmul.f32 %v2118, %v2222
        %v2262 = vmul.f32 %v2121, %v2224
        %v2263 = vmul.f32 %v2124, %v2226
        %v2264 = vmul.f32 %v2127, %v2228
        %v2265 = vmul.f32 %v2130, %v2230
        %v2266 = vmul.f32 %v2133, %v2232
        %v2267 = vmul.f32 %v2136, %v2234
        %v2268 = vmul.f32 %v2139, %v2236
        %2285 = vrot.lane.b32.xlu0 %v2253, 96
        %v2286 = vpop.permute.xlu0 %2285
        %2287 = vrot.lane.b32.xlu0 %v2254, 96
        %v2288 = vpop.permute.xlu0 %2287
        %2289 = vrot.lane.b32.xlu0 %v2255, 96
        %v2290 = vpop.permute.xlu0 %2289
        %2291 = vrot.lane.b32.xlu0 %v2256, 96
        %v2292 = vpop.permute.xlu0 %2291
        %2293 = vrot.lane.b32.xlu0 %v2257, 96
        %v2294 = vpop.permute.xlu0 %2293
        %2295 = vrot.lane.b32.xlu0 %v2258, 96
        %v2296 = vpop.permute.xlu0 %2295
        %2297 = vrot.lane.b32.xlu0 %v2259, 96
        %v2298 = vpop.permute.xlu0 %2297
        %2299 = vrot.lane.b32.xlu0 %v2260, 96
        %v2300 = vpop.permute.xlu0 %2299
        %2301 = vrot.lane.b32.xlu0 %v2261, 96
        %v2302 = vpop.permute.xlu0 %2301
        %2303 = vrot.lane.b32.xlu0 %v2262, 96
        %v2304 = vpop.permute.xlu0 %2303
        %2305 = vrot.lane.b32.xlu0 %v2263, 96
        %v2306 = vpop.permute.xlu0 %2305
        %2307 = vrot.lane.b32.xlu0 %v2264, 96
        %v2308 = vpop.permute.xlu0 %2307
        %2309 = vrot.lane.b32.xlu0 %v2265, 96
        %v2310 = vpop.permute.xlu0 %2309
        %2311 = vrot.lane.b32.xlu0 %v2266, 96
        %v2312 = vpop.permute.xlu0 %2311
        %2313 = vrot.lane.b32.xlu0 %v2267, 96
        %v2314 = vpop.permute.xlu0 %2313
        %2315 = vrot.lane.b32.xlu0 %v2268, 96
        %v2316 = vpop.permute.xlu0 %2315
        %v2333 = vsel %vm2173, %v2286, 0.0
        %v2334 = vsel %vm2174, %v2288, 0.0
        %v2335 = vsel %vm2175, %v2290, 0.0
        %v2336 = vsel %vm2176, %v2292, 0.0
        %v2337 = vsel %vm2177, %v2294, 0.0
        %v2338 = vsel %vm2178, %v2296, 0.0
        %v2339 = vsel %vm2179, %v2298, 0.0
        %v2340 = vsel %vm2180, %v2300, 0.0
        %v2341 = vsel %vm2181, %v2302, 0.0
        %v2342 = vsel %vm2182, %v2304, 0.0
        %v2343 = vsel %vm2183, %v2306, 0.0
        %v2344 = vsel %vm2184, %v2308, 0.0
        %v2345 = vsel %vm2185, %v2310, 0.0
        %v2346 = vsel %vm2186, %v2312, 0.0
        %v2347 = vsel %vm2187, %v2314, 0.0
        %v2348 = vsel %vm2188, %v2316, 0.0
        %v2349 = vadd.f32 %v2333, %v1180
        %v2350 = vadd.f32 %v2334, %v1183
        %v2351 = vadd.f32 %v2335, %v1186
        %v2352 = vadd.f32 %v2336, %v1189
        %v2353 = vadd.f32 %v2337, %v1192
        %v2354 = vadd.f32 %v2338, %v1195
        %v2355 = vadd.f32 %v2339, %v1198
        %v2356 = vadd.f32 %v2340, %v1201
        %v2357 = vadd.f32 %v2341, %v1204
        %v2358 = vadd.f32 %v2342, %v1207
        %v2359 = vadd.f32 %v2343, %v1210
        %v2360 = vadd.f32 %v2344, %v1213
        %v2361 = vadd.f32 %v2345, %v1216
        %v2362 = vadd.f32 %v2346, %v1219
        %v2363 = vadd.f32 %v2347, %v1222
        %v2364 = vadd.f32 %v2348, %v1225
        %v2366 = vperm.slane %v976, 0
        %v2369 = vsel %vm1653, %v2349, 0
        %v2372 = vsel %vm1653, %v2350, 0
        %v2375 = vsel %vm1653, %v2351, 0
        %v2378 = vsel %vm1653, %v2352, 0
        %v2381 = vsel %vm1653, %v2353, 0
        %v2384 = vsel %vm1653, %v2354, 0
        %v2387 = vsel %vm1653, %v2355, 0
        %v2390 = vsel %vm1653, %v2356, 0
        %v2393 = vsel %vm1653, %v2357, 0
        %v2396 = vsel %vm1653, %v2358, 0
        %v2399 = vsel %vm1653, %v2359, 0
        %v2402 = vsel %vm1653, %v2360, 0
        %v2405 = vsel %vm1653, %v2361, 0
        %v2408 = vsel %vm1653, %v2362, 0
        %v2411 = vsel %vm1653, %v2363, 0
        %v2414 = vsel %vm1653, %v2364, 0
        %2416 = vmatpush.msra.mxu0 0.0
        %2417 = vmatpush.msra.mxu0 0.0
        %2418 = vmatpush.msra.mxu0 0.0
        %2419 = vmatpush.msra.mxu0 0.0
        %2420 = vmatpush.msra.mxu0 0.0
        %2421 = vmatpush.msra.mxu0 0.0
        %2422 = vmatpush.msra.mxu0 0.0
        %2423 = vmatpush.msra.mxu0 0.0
        %2424 = vmatpush.msra.mxu0 0.0
        %2425 = vmatpush.msra.mxu0 0.0
        %2426 = vmatpush.msra.mxu0 0.0
        %2427 = vmatpush.msra.mxu0 0.0
        %2428 = vmatpush.msra.mxu0 %v975
        %2429 = vmatpush.msra.mxu0 %v974
        %2430 = vmatpush.msra.mxu0 %v973
        %2431 = vmatpush.msra.mxu0 %v972
        %2432 = vmatmul.f32.gmra.mxu0 %v2369
        %v2433 = vpop.f32.mrf.mxu0
        %v2434 = vadd.f32 %v2366, %v2433
        %2435 = vmatmul.f32.gmra.mxu0 %v2372
        %v2436 = vpop.f32.mrf.mxu0
        %v2437 = vadd.f32 %v2366, %v2436
        %2438 = vmatmul.f32.gmra.mxu0 %v2375
        %v2439 = vpop.f32.mrf.mxu0
        %v2440 = vadd.f32 %v2366, %v2439
        %2441 = vmatmul.f32.gmra.mxu0 %v2378
        %v2442 = vpop.f32.mrf.mxu0
        %v2443 = vadd.f32 %v2366, %v2442
        %2444 = vmatmul.f32.gmra.mxu0 %v2381
        %v2445 = vpop.f32.mrf.mxu0
        %v2446 = vadd.f32 %v2366, %v2445
        %2447 = vmatmul.f32.gmra.mxu0 %v2384
        %v2448 = vpop.f32.mrf.mxu0
        %v2449 = vadd.f32 %v2366, %v2448
        %2450 = vmatmul.f32.gmra.mxu0 %v2387
        %v2451 = vpop.f32.mrf.mxu0
        %v2452 = vadd.f32 %v2366, %v2451
        %2453 = vmatmul.f32.gmra.mxu0 %v2390
        %v2454 = vpop.f32.mrf.mxu0
        %v2455 = vadd.f32 %v2366, %v2454
        %2456 = vmatmul.f32.gmra.mxu0 %v2393
        %v2457 = vpop.f32.mrf.mxu0
        %v2458 = vadd.f32 %v2366, %v2457
        %2459 = vmatmul.f32.gmra.mxu0 %v2396
        %v2460 = vpop.f32.mrf.mxu0
        %v2461 = vadd.f32 %v2366, %v2460
        %2462 = vmatmul.f32.gmra.mxu0 %v2399
        %v2463 = vpop.f32.mrf.mxu0
        %v2464 = vadd.f32 %v2366, %v2463
        %2465 = vmatmul.f32.gmra.mxu0 %v2402
        %v2466 = vpop.f32.mrf.mxu0
        %v2467 = vadd.f32 %v2366, %v2466
        %2468 = vmatmul.f32.gmra.mxu0 %v2405
        %v2469 = vpop.f32.mrf.mxu0
        %v2470 = vadd.f32 %v2366, %v2469
        %2471 = vmatmul.f32.gmra.mxu0 %v2408
        %v2472 = vpop.f32.mrf.mxu0
        %v2473 = vadd.f32 %v2366, %v2472
        %2474 = vmatmul.f32.gmra.mxu0 %v2411
        %v2475 = vpop.f32.mrf.mxu0
        %v2476 = vadd.f32 %v2366, %v2475
        %2477 = vmatmul.f32.gmra.mxu0 %v2414
        %v2478 = vpop.f32.mrf.mxu0
        %v2479 = vadd.f32 %v2366, %v2478
        %2480 = vdwg.mxu0
        %v2481 = vmax.f32 %v2434, 0.0
        %v2482 = vmax.f32 %v2437, 0.0
        %v2483 = vmax.f32 %v2440, 0.0
        %v2484 = vmax.f32 %v2443, 0.0
        %v2485 = vmax.f32 %v2446, 0.0
        %v2486 = vmax.f32 %v2449, 0.0
        %v2487 = vmax.f32 %v2452, 0.0
        %v2488 = vmax.f32 %v2455, 0.0
        %v2489 = vmax.f32 %v2458, 0.0
        %v2490 = vmax.f32 %v2461, 0.0
        %v2491 = vmax.f32 %v2464, 0.0
        %v2492 = vmax.f32 %v2467, 0.0
        %v2493 = vmax.f32 %v2470, 0.0
        %v2494 = vmax.f32 %v2473, 0.0
        %v2495 = vmax.f32 %v2476, 0.0
        %v2496 = vmax.f32 %v2479, 0.0
        %v2498 = vperm.slane %v985, 0
        %vm2500 = vcmask 523264
        %v2502 = vsel %vm2500, %v2481, 0
        %v2505 = vsel %vm2500, %v2482, 0
        %v2508 = vsel %vm2500, %v2483, 0
        %v2511 = vsel %vm2500, %v2484, 0
        %v2514 = vsel %vm2500, %v2485, 0
        %v2517 = vsel %vm2500, %v2486, 0
        %v2520 = vsel %vm2500, %v2487, 0
        %v2523 = vsel %vm2500, %v2488, 0
        %v2526 = vsel %vm2500, %v2489, 0
        %v2529 = vsel %vm2500, %v2490, 0
        %v2532 = vsel %vm2500, %v2491, 0
        %v2535 = vsel %vm2500, %v2492, 0
        %v2538 = vsel %vm2500, %v2493, 0
        %v2541 = vsel %vm2500, %v2494, 0
        %v2544 = vsel %vm2500, %v2495, 0
        %v2547 = vsel %vm2500, %v2496, 0
        %2549 = vmatpush.msra.mxu0 0.0
        %2550 = vmatpush.msra.mxu0 0.0
        %2551 = vmatpush.msra.mxu0 0.0
        %2552 = vmatpush.msra.mxu0 0.0
        %2553 = vmatpush.msra.mxu0 0.0
        %2554 = vmatpush.msra.mxu0 0.0
        %2555 = vmatpush.msra.mxu0 0.0
        %2556 = vmatpush.msra.mxu0 0.0
        %2557 = vmatpush.msra.mxu0 %v984
        %2558 = vmatpush.msra.mxu0 %v983
        %2559 = vmatpush.msra.mxu0 %v982
        %2560 = vmatpush.msra.mxu0 %v981
        %2561 = vmatpush.msra.mxu0 %v980
        %2562 = vmatpush.msra.mxu0 %v979
        %2563 = vmatpush.msra.mxu0 %v978
        %2564 = vmatpush.msra.mxu0 %v977
        %2565 = vmatmul.f32.gmra.mxu0 %v2502
        %v2566 = vpop.f32.mrf.mxu0
        %v2567 = vadd.f32 %v2498, %v2566
        %2568 = vmatmul.f32.gmra.mxu0 %v2505
        %v2569 = vpop.f32.mrf.mxu0
        %v2570 = vadd.f32 %v2498, %v2569
        %2571 = vmatmul.f32.gmra.mxu0 %v2508
        %v2572 = vpop.f32.mrf.mxu0
        %v2573 = vadd.f32 %v2498, %v2572
        %2574 = vmatmul.f32.gmra.mxu0 %v2511
        %v2575 = vpop.f32.mrf.mxu0
        %v2576 = vadd.f32 %v2498, %v2575
        %2577 = vmatmul.f32.gmra.mxu0 %v2514
        %v2578 = vpop.f32.mrf.mxu0
        %v2579 = vadd.f32 %v2498, %v2578
        %2580 = vmatmul.f32.gmra.mxu0 %v2517
        %v2581 = vpop.f32.mrf.mxu0
        %v2582 = vadd.f32 %v2498, %v2581
        %2583 = vmatmul.f32.gmra.mxu0 %v2520
        %v2584 = vpop.f32.mrf.mxu0
        %v2585 = vadd.f32 %v2498, %v2584
        %2586 = vmatmul.f32.gmra.mxu0 %v2523
        %v2587 = vpop.f32.mrf.mxu0
        %v2588 = vadd.f32 %v2498, %v2587
        %2589 = vmatmul.f32.gmra.mxu0 %v2526
        %v2590 = vpop.f32.mrf.mxu0
        %v2591 = vadd.f32 %v2498, %v2590
        %2592 = vmatmul.f32.gmra.mxu0 %v2529
        %v2593 = vpop.f32.mrf.mxu0
        %v2594 = vadd.f32 %v2498, %v2593
        %2595 = vmatmul.f32.gmra.mxu0 %v2532
        %v2596 = vpop.f32.mrf.mxu0
        %v2597 = vadd.f32 %v2498, %v2596
        %2598 = vmatmul.f32.gmra.mxu0 %v2535
        %v2599 = vpop.f32.mrf.mxu0
        %v2600 = vadd.f32 %v2498, %v2599
        %2601 = vmatmul.f32.gmra.mxu0 %v2538
        %v2602 = vpop.f32.mrf.mxu0
        %v2603 = vadd.f32 %v2498, %v2602
        %2604 = vmatmul.f32.gmra.mxu0 %v2541
        %v2605 = vpop.f32.mrf.mxu0
        %v2606 = vadd.f32 %v2498, %v2605
        %2607 = vmatmul.f32.gmra.mxu0 %v2544
        %v2608 = vpop.f32.mrf.mxu0
        %v2609 = vadd.f32 %v2498, %v2608
        %2610 = vmatmul.f32.gmra.mxu0 %v2547
        %v2611 = vpop.f32.mrf.mxu0
        %v2612 = vadd.f32 %v2498, %v2611
        %2613 = vdwg.mxu0
        %v2614 = vmax.f32 %v2567, 0.0
        %v2615 = vmax.f32 %v2570, 0.0
        %v2616 = vmax.f32 %v2573, 0.0
        %v2617 = vmax.f32 %v2576, 0.0
        %v2618 = vmax.f32 %v2579, 0.0
        %v2619 = vmax.f32 %v2582, 0.0
        %v2620 = vmax.f32 %v2585, 0.0
        %v2621 = vmax.f32 %v2588, 0.0
        %v2622 = vmax.f32 %v2591, 0.0
        %v2623 = vmax.f32 %v2594, 0.0
        %v2624 = vmax.f32 %v2597, 0.0
        %v2625 = vmax.f32 %v2600, 0.0
        %v2626 = vmax.f32 %v2603, 0.0
        %v2627 = vmax.f32 %v2606, 0.0
        %v2628 = vmax.f32 %v2609, 0.0
        %v2629 = vmax.f32 %v2612, 0.0
        %2630 = vmatpush.msra.mxu0 %v2629
        %2631 = vmatpush.msra.mxu0 %v2628
        %2632 = vmatpush.msra.mxu0 %v2627
        %2633 = vmatpush.msra.mxu0 %v2626
        %2634 = vmatpush.msra.mxu0 %v2625
        %2635 = vmatpush.msra.mxu0 %v2624
        %2636 = vmatpush.msra.mxu0 %v2623
        %2637 = vmatpush.msra.mxu0 %v2622
        %2638 = vmatpush.msra.mxu0 %v2621
        %2639 = vmatpush.msra.mxu0 %v2620
        %2640 = vmatpush.msra.mxu0 %v2619
        %2641 = vmatpush.msra.mxu0 %v2618
        %2642 = vmatpush.msra.mxu0 %v2617
        %2643 = vmatpush.msra.mxu0 %v2616
        %2644 = vmatpush.msra.mxu0 %v2615
        %2645 = vmatpush.msra.mxu0 %v2614
        %2646 = vmatmul.f32.gmra.mxu0 %v1030
        %v2647 = vpop.f32.mrf.mxu0
        %v2648 = vadd.f32 %v1381, %v2647
        %2649 = vmatmul.f32.gmra.mxu0 %v1031
        %v2650 = vpop.f32.mrf.mxu0
        %v2651 = vadd.f32 %v1384, %v2650
        %2652 = vmatmul.f32.gmra.mxu0 %v1032
        %v2653 = vpop.f32.mrf.mxu0
        %v2654 = vadd.f32 %v1387, %v2653
        %2655 = vmatmul.f32.gmra.mxu0 %v1033
        %v2656 = vpop.f32.mrf.mxu0
        %v2657 = vadd.f32 %v1390, %v2656
        %2658 = vmatmul.f32.gmra.mxu0 %v1034
        %v2659 = vpop.f32.mrf.mxu0
        %v2660 = vadd.f32 %v1393, %v2659
        %2661 = vmatmul.f32.gmra.mxu0 %v1035
        %v2662 = vpop.f32.mrf.mxu0
        %v2663 = vadd.f32 %v1396, %v2662
        %2664 = vmatmul.f32.gmra.mxu0 %v1036
        %v2665 = vpop.f32.mrf.mxu0
        %v2666 = vadd.f32 %v1399, %v2665
        %2667 = vmatmul.f32.gmra.mxu0 %v1037
        %v2668 = vpop.f32.mrf.mxu0
        %v2669 = vadd.f32 %v1402, %v2668
        %2670 = vmatmul.f32.gmra.mxu0 %v1038
        %v2671 = vpop.f32.mrf.mxu0
        %v2672 = vadd.f32 %v1405, %v2671
        %2673 = vmatmul.f32.gmra.mxu0 %v1039
        %v2674 = vpop.f32.mrf.mxu0
        %v2675 = vadd.f32 %v1408, %v2674
        %2676 = vmatmul.f32.gmra.mxu0 %v1040
        %v2677 = vpop.f32.mrf.mxu0
        %v2678 = vadd.f32 %v1411, %v2677
        %2679 = vmatmul.f32.gmra.mxu0 %v1041
        %v2680 = vpop.f32.mrf.mxu0
        %v2681 = vadd.f32 %v1414, %v2680
        %2682 = vmatmul.f32.gmra.mxu0 %v1042
        %v2683 = vpop.f32.mrf.mxu0
        %v2684 = vadd.f32 %v1417, %v2683
        %2685 = vmatmul.f32.gmra.mxu0 %v1043
        %v2686 = vpop.f32.mrf.mxu0
        %v2687 = vadd.f32 %v1420, %v2686
        %2688 = vmatmul.f32.gmra.mxu0 %v1044
        %v2689 = vpop.f32.mrf.mxu0
        %v2690 = vadd.f32 %v1423, %v2689
        %2691 = vmatmul.f32.gmra.mxu0 %v1045
        %v2692 = vpop.f32.mrf.mxu0
        %v2693 = vadd.f32 %v1426, %v2692
        %2694 = vmatmul.f32.gmra.mxu0 %v1046
        %v2695 = vpop.f32.mrf.mxu0
        %v2696 = vadd.f32 %v1429, %v2695
        %2697 = vmatmul.f32.gmra.mxu0 %v1047
        %v2698 = vpop.f32.mrf.mxu0
        %v2699 = vadd.f32 %v1432, %v2698
        %2700 = vmatmul.f32.gmra.mxu0 %v1048
        %v2701 = vpop.f32.mrf.mxu0
        %v2702 = vadd.f32 %v1435, %v2701
        %2703 = vmatmul.f32.gmra.mxu0 %v1049
        %v2704 = vpop.f32.mrf.mxu0
        %v2705 = vadd.f32 %v1438, %v2704
        %2706 = vmatmul.f32.gmra.mxu0 %v1050
        %v2707 = vpop.f32.mrf.mxu0
        %v2708 = vadd.f32 %v1441, %v2707
        %2709 = vmatmul.f32.gmra.mxu0 %v1051
        %v2710 = vpop.f32.mrf.mxu0
        %v2711 = vadd.f32 %v1444, %v2710
        %2712 = vmatmul.f32.gmra.mxu0 %v1052
        %v2713 = vpop.f32.mrf.mxu0
        %v2714 = vadd.f32 %v1447, %v2713
        %2715 = vmatmul.f32.gmra.mxu0 %v1053
        %v2716 = vpop.f32.mrf.mxu0
        %v2717 = vadd.f32 %v1450, %v2716
        %2718 = vmatmul.f32.gmra.mxu0 %v1054
        %v2719 = vpop.f32.mrf.mxu0
        %v2720 = vadd.f32 %v1453, %v2719
        %2721 = vmatmul.f32.gmra.mxu0 %v1055
        %v2722 = vpop.f32.mrf.mxu0
        %v2723 = vadd.f32 %v1456, %v2722
        %2724 = vmatmul.f32.gmra.mxu0 %v1056
        %v2725 = vpop.f32.mrf.mxu0
        %v2726 = vadd.f32 %v1459, %v2725
        %2727 = vmatmul.f32.gmra.mxu0 %v1057
        %v2728 = vpop.f32.mrf.mxu0
        %v2729 = vadd.f32 %v1462, %v2728
        %2730 = vmatmul.f32.gmra.mxu0 %v1058
        %v2731 = vpop.f32.mrf.mxu0
        %v2732 = vadd.f32 %v1465, %v2731
        %2733 = vmatmul.f32.gmra.mxu0 %v1059
        %v2734 = vpop.f32.mrf.mxu0
        %v2735 = vadd.f32 %v1468, %v2734
        %2736 = vmatmul.f32.gmra.mxu0 %v1060
        %v2737 = vpop.f32.mrf.mxu0
        %v2738 = vadd.f32 %v1471, %v2737
        %2739 = vmatmul.f32.gmra.mxu0 %v1061
        %v2740 = vpop.f32.mrf.mxu0
        %v2741 = vadd.f32 %v1474, %v2740
        %2742 = vdwg.mxu0
        %v2743 = vmax.f32 %v2648, 0.0
        %v2744 = vmax.f32 %v2651, 0.0
        %v2745 = vmax.f32 %v2654, 0.0
        %v2746 = vmax.f32 %v2657, 0.0
        %v2747 = vmax.f32 %v2660, 0.0
        %v2748 = vmax.f32 %v2663, 0.0
        %v2749 = vmax.f32 %v2666, 0.0
        %v2750 = vmax.f32 %v2669, 0.0
        %v2751 = vmax.f32 %v2672, 0.0
        %v2752 = vmax.f32 %v2675, 0.0
        %v2753 = vmax.f32 %v2678, 0.0
        %v2754 = vmax.f32 %v2681, 0.0
        %v2755 = vmax.f32 %v2684, 0.0
        %v2756 = vmax.f32 %v2687, 0.0
        %v2757 = vmax.f32 %v2690, 0.0
        %v2758 = vmax.f32 %v2693, 0.0
        %v2759 = vmax.f32 %v2696, 0.0
        %v2760 = vmax.f32 %v2699, 0.0
        %v2761 = vmax.f32 %v2702, 0.0
        %v2762 = vmax.f32 %v2705, 0.0
        %v2763 = vmax.f32 %v2708, 0.0
        %v2764 = vmax.f32 %v2711, 0.0
        %v2765 = vmax.f32 %v2714, 0.0
        %v2766 = vmax.f32 %v2717, 0.0
        %v2767 = vmax.f32 %v2720, 0.0
        %v2768 = vmax.f32 %v2723, 0.0
        %v2769 = vmax.f32 %v2726, 0.0
        %v2770 = vmax.f32 %v2729, 0.0
        %v2771 = vmax.f32 %v2732, 0.0
        %v2772 = vmax.f32 %v2735, 0.0
        %v2773 = vmax.f32 %v2738, 0.0
        %v2774 = vmax.f32 %v2741, 0.0
        %v2775 = vadd.f32 %v2743, 1e-07
        %v2776 = vadd.f32 %v2744, 1e-07
        %v2777 = vadd.f32 %v2745, 1e-07
        %v2778 = vadd.f32 %v2746, 1e-07
        %v2779 = vadd.f32 %v2747, 1e-07
        %v2780 = vadd.f32 %v2748, 1e-07
        %v2781 = vadd.f32 %v2749, 1e-07
        %v2782 = vadd.f32 %v2750, 1e-07
        %v2783 = vadd.f32 %v2751, 1e-07
        %v2784 = vadd.f32 %v2752, 1e-07
        %v2785 = vadd.f32 %v2753, 1e-07
        %v2786 = vadd.f32 %v2754, 1e-07
        %v2787 = vadd.f32 %v2755, 1e-07
        %v2788 = vadd.f32 %v2756, 1e-07
        %v2789 = vadd.f32 %v2757, 1e-07
        %v2790 = vadd.f32 %v2758, 1e-07
        %v2791 = vadd.f32 %v2759, 1e-07
        %v2792 = vadd.f32 %v2760, 1e-07
        %v2793 = vadd.f32 %v2761, 1e-07
        %v2794 = vadd.f32 %v2762, 1e-07
        %v2795 = vadd.f32 %v2763, 1e-07
        %v2796 = vadd.f32 %v2764, 1e-07
        %v2797 = vadd.f32 %v2765, 1e-07
        %v2798 = vadd.f32 %v2766, 1e-07
        %v2799 = vadd.f32 %v2767, 1e-07
        %v2800 = vadd.f32 %v2768, 1e-07
        %v2801 = vadd.f32 %v2769, 1e-07
        %v2802 = vadd.f32 %v2770, 1e-07
        %v2803 = vadd.f32 %v2771, 1e-07
        %v2804 = vadd.f32 %v2772, 1e-07
        %v2805 = vadd.f32 %v2773, 1e-07
        %v2806 = vadd.f32 %v2774, 1e-07
        %v2807 = vsel %vm1653, %v2775, -inf
        %v2808 = vsel %vm1653, %v2776, -inf
        %v2809 = vsel %vm1653, %v2777, -inf
        %v2810 = vsel %vm1653, %v2778, -inf
        %v2811 = vsel %vm1653, %v2779, -inf
        %v2812 = vmax.f32 %v2807, %v2811
        %v2813 = vsel %vm1653, %v2780, -inf
        %v2814 = vmax.f32 %v2808, %v2813
        %v2815 = vsel %vm1653, %v2781, -inf
        %v2816 = vmax.f32 %v2809, %v2815
        %v2817 = vsel %vm1653, %v2782, -inf
        %v2818 = vmax.f32 %v2810, %v2817
        %v2819 = vsel %vm1653, %v2783, -inf
        %v2820 = vmax.f32 %v2812, %v2819
        %v2821 = vsel %vm1653, %v2784, -inf
        %v2822 = vmax.f32 %v2814, %v2821
        %v2823 = vsel %vm1653, %v2785, -inf
        %v2824 = vmax.f32 %v2816, %v2823
        %v2825 = vsel %vm1653, %v2786, -inf
        %v2826 = vmax.f32 %v2818, %v2825
        %v2827 = vsel %vm1653, %v2787, -inf
        %v2828 = vmax.f32 %v2820, %v2827
        %v2829 = vsel %vm1653, %v2788, -inf
        %v2830 = vmax.f32 %v2822, %v2829
        %v2831 = vsel %vm1653, %v2789, -inf
        %v2832 = vmax.f32 %v2824, %v2831
        %v2833 = vsel %vm1653, %v2790, -inf
        %v2834 = vmax.f32 %v2826, %v2833
        %v2835 = vsel %vm1653, %v2791, -inf
        %v2836 = vmax.f32 %v2828, %v2835
        %v2837 = vsel %vm1653, %v2792, -inf
        %v2838 = vmax.f32 %v2830, %v2837
        %v2839 = vsel %vm1653, %v2793, -inf
        %v2840 = vmax.f32 %v2832, %v2839
        %v2841 = vsel %vm1653, %v2794, -inf
        %v2842 = vmax.f32 %v2834, %v2841
        %v2843 = vsel %vm1653, %v2795, -inf
        %v2844 = vmax.f32 %v2836, %v2843
        %v2845 = vsel %vm1653, %v2796, -inf
        %v2846 = vmax.f32 %v2838, %v2845
        %v2847 = vsel %vm1653, %v2797, -inf
        %v2848 = vmax.f32 %v2840, %v2847
        %v2849 = vsel %vm1653, %v2798, -inf
        %v2850 = vmax.f32 %v2842, %v2849
        %v2851 = vsel %vm1653, %v2799, -inf
        %v2852 = vmax.f32 %v2844, %v2851
        %v2853 = vsel %vm1653, %v2800, -inf
        %v2854 = vmax.f32 %v2846, %v2853
        %v2855 = vsel %vm1653, %v2801, -inf
        %v2856 = vmax.f32 %v2848, %v2855
        %v2857 = vsel %vm1653, %v2802, -inf
        %v2858 = vmax.f32 %v2850, %v2857
        %v2859 = vsel %vm1653, %v2803, -inf
        %v2860 = vmax.f32 %v2852, %v2859
        %v2861 = vsel %vm1653, %v2804, -inf
        %v2862 = vmax.f32 %v2854, %v2861
        %v2863 = vsel %vm1653, %v2805, -inf
        %v2864 = vmax.f32 %v2856, %v2863
        %v2865 = vsel %vm1653, %v2806, -inf
        %v2866 = vmax.f32 %v2858, %v2865
        %v2867 = vmax.f32 %v2860, %v2862
        %v2868 = vmax.f32 %v2864, %v2866
        %v2869 = vmax.f32 %v2867, %v2868
        %v2870 = vrot.slane %v2869, 4
        %v2871 = vmax.f32 %v2869, %v2870
        %v2872 = vrot.slane %v2871, 2
        %v2873 = vmax.f32 %v2871, %v2872
        %v2874 = vrot.slane %v2873, 1
        %v2875 = vmax.f32 %v2873, %v2874
        %v2876 = vsub.f32 %v2775, %v2875
        %v2877 = vsub.f32 %v2776, %v2875
        %v2878 = vsub.f32 %v2777, %v2875
        %v2879 = vsub.f32 %v2778, %v2875
        %v2880 = vsub.f32 %v2779, %v2875
        %v2881 = vsub.f32 %v2780, %v2875
        %v2882 = vsub.f32 %v2781, %v2875
        %v2883 = vsub.f32 %v2782, %v2875
        %v2884 = vsub.f32 %v2783, %v2875
        %v2885 = vsub.f32 %v2784, %v2875
        %v2886 = vsub.f32 %v2785, %v2875
        %v2887 = vsub.f32 %v2786, %v2875
        %v2888 = vsub.f32 %v2787, %v2875
        %v2889 = vsub.f32 %v2788, %v2875
        %v2890 = vsub.f32 %v2789, %v2875
        %v2891 = vsub.f32 %v2790, %v2875
        %v2892 = vsub.f32 %v2791, %v2875
        %v2893 = vsub.f32 %v2792, %v2875
        %v2894 = vsub.f32 %v2793, %v2875
        %v2895 = vsub.f32 %v2794, %v2875
        %v2896 = vsub.f32 %v2795, %v2875
        %v2897 = vsub.f32 %v2796, %v2875
        %v2898 = vsub.f32 %v2797, %v2875
        %v2899 = vsub.f32 %v2798, %v2875
        %v2900 = vsub.f32 %v2799, %v2875
        %v2901 = vsub.f32 %v2800, %v2875
        %v2902 = vsub.f32 %v2801, %v2875
        %v2903 = vsub.f32 %v2802, %v2875
        %v2904 = vsub.f32 %v2803, %v2875
        %v2905 = vsub.f32 %v2804, %v2875
        %v2906 = vsub.f32 %v2805, %v2875
        %v2907 = vsub.f32 %v2806, %v2875
        %v2908 = vmul.f32 %v2876, 1.442695
        %v2909 = vpow.pop %v2908
        %v2910 = vmul.f32 %v2877, 1.442695
        %v2911 = vpow.pop %v2910
        %v2912 = vmul.f32 %v2878, 1.442695
        %v2913 = vpow.pop %v2912
        %v2914 = vmul.f32 %v2879, 1.442695
        %v2915 = vpow.pop %v2914
        %v2916 = vmul.f32 %v2880, 1.442695
        %v2917 = vpow.pop %v2916
        %v2918 = vmul.f32 %v2881, 1.442695
        %v2919 = vpow.pop %v2918
        %v2920 = vmul.f32 %v2882, 1.442695
        %v2921 = vpow.pop %v2920
        %v2922 = vmul.f32 %v2883, 1.442695
        %v2923 = vpow.pop %v2922
        %v2924 = vmul.f32 %v2884, 1.442695
        %v2925 = vpow.pop %v2924
        %v2926 = vmul.f32 %v2885, 1.442695
        %v2927 = vpow.pop %v2926
        %v2928 = vmul.f32 %v2886, 1.442695
        %v2929 = vpow.pop %v2928
        %v2930 = vmul.f32 %v2887, 1.442695
        %v2931 = vpow.pop %v2930
        %v2932 = vmul.f32 %v2888, 1.442695
        %v2933 = vpow.pop %v2932
        %v2934 = vmul.f32 %v2889, 1.442695
        %v2935 = vpow.pop %v2934
        %v2936 = vmul.f32 %v2890, 1.442695
        %v2937 = vpow.pop %v2936
        %v2938 = vmul.f32 %v2891, 1.442695
        %v2939 = vpow.pop %v2938
        %v2940 = vmul.f32 %v2892, 1.442695
        %v2941 = vpow.pop %v2940
        %v2942 = vmul.f32 %v2893, 1.442695
        %v2943 = vpow.pop %v2942
        %v2944 = vmul.f32 %v2894, 1.442695
        %v2945 = vpow.pop %v2944
        %v2946 = vmul.f32 %v2895, 1.442695
        %v2947 = vpow.pop %v2946
        %v2948 = vmul.f32 %v2896, 1.442695
        %v2949 = vpow.pop %v2948
        %v2950 = vmul.f32 %v2897, 1.442695
        %v2951 = vpow.pop %v2950
        %v2952 = vmul.f32 %v2898, 1.442695
        %v2953 = vpow.pop %v2952
        %v2954 = vmul.f32 %v2899, 1.442695
        %v2955 = vpow.pop %v2954
        %v2956 = vmul.f32 %v2900, 1.442695
        %v2957 = vpow.pop %v2956
        %v2958 = vmul.f32 %v2901, 1.442695
        %v2959 = vpow.pop %v2958
        %v2960 = vmul.f32 %v2902, 1.442695
        %v2961 = vpow.pop %v2960
        %v2962 = vmul.f32 %v2903, 1.442695
        %v2963 = vpow.pop %v2962
        %v2964 = vmul.f32 %v2904, 1.442695
        %v2965 = vpow.pop %v2964
        %v2966 = vmul.f32 %v2905, 1.442695
        %v2967 = vpow.pop %v2966
        %v2968 = vmul.f32 %v2906, 1.442695
        %v2969 = vpow.pop %v2968
        %v2970 = vmul.f32 %v2907, 1.442695
        %v2971 = vpow.pop %v2970
        %v2972 = vmul.f32 %v2909, %v2775
        %v2973 = vmul.f32 %v2911, %v2776
        %v2974 = vmul.f32 %v2913, %v2777
        %v2975 = vmul.f32 %v2915, %v2778
        %v2976 = vmul.f32 %v2917, %v2779
        %v2977 = vmul.f32 %v2919, %v2780
        %v2978 = vmul.f32 %v2921, %v2781
        %v2979 = vmul.f32 %v2923, %v2782
        %v2980 = vmul.f32 %v2925, %v2783
        %v2981 = vmul.f32 %v2927, %v2784
        %v2982 = vmul.f32 %v2929, %v2785
        %v2983 = vmul.f32 %v2931, %v2786
        %v2984 = vmul.f32 %v2933, %v2787
        %v2985 = vmul.f32 %v2935, %v2788
        %v2986 = vmul.f32 %v2937, %v2789
        %v2987 = vmul.f32 %v2939, %v2790
        %v2988 = vmul.f32 %v2941, %v2791
        %v2989 = vmul.f32 %v2943, %v2792
        %v2990 = vmul.f32 %v2945, %v2793
        %v2991 = vmul.f32 %v2947, %v2794
        %v2992 = vmul.f32 %v2949, %v2795
        %v2993 = vmul.f32 %v2951, %v2796
        %v2994 = vmul.f32 %v2953, %v2797
        %v2995 = vmul.f32 %v2955, %v2798
        %v2996 = vmul.f32 %v2957, %v2799
        %v2997 = vmul.f32 %v2959, %v2800
        %v2998 = vmul.f32 %v2961, %v2801
        %v2999 = vmul.f32 %v2963, %v2802
        %v3000 = vmul.f32 %v2965, %v2803
        %v3001 = vmul.f32 %v2967, %v2804
        %v3002 = vmul.f32 %v2969, %v2805
        %v3003 = vmul.f32 %v2971, %v2806
        %3036 = vrot.lane.b32.xlu0 %v2972, 32
        %v3037 = vpop.permute.xlu0 %3036
        %3038 = vrot.lane.b32.xlu0 %v2973, 32
        %v3039 = vpop.permute.xlu0 %3038
        %3040 = vrot.lane.b32.xlu0 %v2974, 32
        %v3041 = vpop.permute.xlu0 %3040
        %3042 = vrot.lane.b32.xlu0 %v2975, 32
        %v3043 = vpop.permute.xlu0 %3042
        %3044 = vrot.lane.b32.xlu0 %v2976, 32
        %v3045 = vpop.permute.xlu0 %3044
        %3046 = vrot.lane.b32.xlu0 %v2977, 32
        %v3047 = vpop.permute.xlu0 %3046
        %3048 = vrot.lane.b32.xlu0 %v2978, 32
        %v3049 = vpop.permute.xlu0 %3048
        %3050 = vrot.lane.b32.xlu0 %v2979, 32
        %v3051 = vpop.permute.xlu0 %3050
        %3052 = vrot.lane.b32.xlu0 %v2980, 32
        %v3053 = vpop.permute.xlu0 %3052
        %3054 = vrot.lane.b32.xlu0 %v2981, 32
        %v3055 = vpop.permute.xlu0 %3054
        %3056 = vrot.lane.b32.xlu0 %v2982, 32
        %v3057 = vpop.permute.xlu0 %3056
        %3058 = vrot.lane.b32.xlu0 %v2983, 32
        %v3059 = vpop.permute.xlu0 %3058
        %3060 = vrot.lane.b32.xlu0 %v2984, 32
        %v3061 = vpop.permute.xlu0 %3060
        %3062 = vrot.lane.b32.xlu0 %v2985, 32
        %v3063 = vpop.permute.xlu0 %3062
        %3064 = vrot.lane.b32.xlu0 %v2986, 32
        %v3065 = vpop.permute.xlu0 %3064
        %3066 = vrot.lane.b32.xlu0 %v2987, 32
        %v3067 = vpop.permute.xlu0 %3066
        %3068 = vrot.lane.b32.xlu0 %v2988, 32
        %v3069 = vpop.permute.xlu0 %3068
        %3070 = vrot.lane.b32.xlu0 %v2989, 32
        %v3071 = vpop.permute.xlu0 %3070
        %3072 = vrot.lane.b32.xlu0 %v2990, 32
        %v3073 = vpop.permute.xlu0 %3072
        %3074 = vrot.lane.b32.xlu0 %v2991, 32
        %v3075 = vpop.permute.xlu0 %3074
        %3076 = vrot.lane.b32.xlu0 %v2992, 32
        %v3077 = vpop.permute.xlu0 %3076
        %3078 = vrot.lane.b32.xlu0 %v2993, 32
        %v3079 = vpop.permute.xlu0 %3078
        %3080 = vrot.lane.b32.xlu0 %v2994, 32
        %v3081 = vpop.permute.xlu0 %3080
        %3082 = vrot.lane.b32.xlu0 %v2995, 32
        %v3083 = vpop.permute.xlu0 %3082
        %3084 = vrot.lane.b32.xlu0 %v2996, 32
        %v3085 = vpop.permute.xlu0 %3084
        %3086 = vrot.lane.b32.xlu0 %v2997, 32
        %v3087 = vpop.permute.xlu0 %3086
        %3088 = vrot.lane.b32.xlu0 %v2998, 32
        %v3089 = vpop.permute.xlu0 %3088
        %3090 = vrot.lane.b32.xlu0 %v2999, 32
        %v3091 = vpop.permute.xlu0 %3090
        %3092 = vrot.lane.b32.xlu0 %v3000, 32
        %v3093 = vpop.permute.xlu0 %3092
        %3094 = vrot.lane.b32.xlu0 %v3001, 32
        %v3095 = vpop.permute.xlu0 %3094
        %3096 = vrot.lane.b32.xlu0 %v3002, 32
        %v3097 = vpop.permute.xlu0 %3096
        %3098 = vrot.lane.b32.xlu0 %v3003, 32
        %v3099 = vpop.permute.xlu0 %3098
        %v3132 = vsel %vm1653, %v2909, %v3037
        %v3133 = vsel %vm1653, %v2911, %v3039
        %v3134 = vsel %vm1653, %v2913, %v3041
        %v3135 = vsel %vm1653, %v2915, %v3043
        %v3136 = vsel %vm1653, %v2917, %v3045
        %v3137 = vsel %vm1653, %v2919, %v3047
        %v3138 = vsel %vm1653, %v2921, %v3049
        %v3139 = vsel %vm1653, %v2923, %v3051
        %v3140 = vsel %vm1653, %v2925, %v3053
        %v3141 = vsel %vm1653, %v2927, %v3055
        %v3142 = vsel %vm1653, %v2929, %v3057
        %v3143 = vsel %vm1653, %v2931, %v3059
        %v3144 = vsel %vm1653, %v2933, %v3061
        %v3145 = vsel %vm1653, %v2935, %v3063
        %v3146 = vsel %vm1653, %v2937, %v3065
        %v3147 = vsel %vm1653, %v2939, %v3067
        %v3148 = vsel %vm1653, %v2941, %v3069
        %v3149 = vsel %vm1653, %v2943, %v3071
        %v3150 = vsel %vm1653, %v2945, %v3073
        %v3151 = vsel %vm1653, %v2947, %v3075
        %v3152 = vsel %vm1653, %v2949, %v3077
        %v3153 = vsel %vm1653, %v2951, %v3079
        %v3154 = vsel %vm1653, %v2953, %v3081
        %v3155 = vsel %vm1653, %v2955, %v3083
        %v3156 = vsel %vm1653, %v2957, %v3085
        %v3157 = vsel %vm1653, %v2959, %v3087
        %v3158 = vsel %vm1653, %v2961, %v3089
        %v3159 = vsel %vm1653, %v2963, %v3091
        %v3160 = vsel %vm1653, %v2965, %v3093
        %v3161 = vsel %vm1653, %v2967, %v3095
        %v3162 = vsel %vm1653, %v2969, %v3097
        %v3163 = vsel %vm1653, %v2971, %v3099
        %3164 = vmatpush.msra.mxu0 %v3147
        %3165 = vmatpush.msra.mxu0 %v3146
        %3166 = vmatpush.msra.mxu0 %v3145
        %3167 = vmatpush.msra.mxu0 %v3144
        %3168 = vmatpush.msra.mxu0 %v3143
        %3169 = vmatpush.msra.mxu0 %v3142
        %3170 = vmatpush.msra.mxu0 %v3141
        %3171 = vmatpush.msra.mxu0 %v3140
        %3172 = vmatpush.msra.mxu0 %v3139
        %3173 = vmatpush.msra.mxu0 %v3138
        %3174 = vmatpush.msra.mxu0 %v3137
        %3175 = vmatpush.msra.mxu0 %v3136
        %3176 = vmatpush.msra.mxu0 %v3135
        %3177 = vmatpush.msra.mxu0 %v3134
        %3178 = vmatpush.msra.mxu0 %v3133
        %3179 = vmatpush.msra.mxu0 %v3132
        %3180 = vmatmul.f32.gmra.mxu0 %v1062
        %v3181 = vpop.f32.mrf.mxu0
        %v3182 = vadd.f32 0.0, %v3181
        %3183 = vmatmul.f32.gmra.mxu0 %v1064
        %v3184 = vpop.f32.mrf.mxu0
        %v3185 = vadd.f32 0.0, %v3184
        %3186 = vmatmul.f32.gmra.mxu0 %v1066
        %v3187 = vpop.f32.mrf.mxu0
        %v3188 = vadd.f32 0.0, %v3187
        %3189 = vmatmul.f32.gmra.mxu0 %v1068
        %v3190 = vpop.f32.mrf.mxu0
        %v3191 = vadd.f32 0.0, %v3190
        %3192 = vmatmul.f32.gmra.mxu0 %v1070
        %v3193 = vpop.f32.mrf.mxu0
        %v3194 = vadd.f32 0.0, %v3193
        %3195 = vmatmul.f32.gmra.mxu0 %v1072
        %v3196 = vpop.f32.mrf.mxu0
        %v3197 = vadd.f32 0.0, %v3196
        %3198 = vmatmul.f32.gmra.mxu0 %v1074
        %v3199 = vpop.f32.mrf.mxu0
        %v3200 = vadd.f32 0.0, %v3199
        %3201 = vmatmul.f32.gmra.mxu0 %v1076
        %v3202 = vpop.f32.mrf.mxu0
        %v3203 = vadd.f32 0.0, %v3202
        %3204 = vmatmul.f32.gmra.mxu0 %v1078
        %v3205 = vpop.f32.mrf.mxu0
        %v3206 = vadd.f32 0.0, %v3205
        %3207 = vmatmul.f32.gmra.mxu0 %v1080
        %v3208 = vpop.f32.mrf.mxu0
        %v3209 = vadd.f32 0.0, %v3208
        %3210 = vmatmul.f32.gmra.mxu0 %v1082
        %v3211 = vpop.f32.mrf.mxu0
        %v3212 = vadd.f32 0.0, %v3211
        %3213 = vmatmul.f32.gmra.mxu0 %v1084
        %v3214 = vpop.f32.mrf.mxu0
        %v3215 = vadd.f32 0.0, %v3214
        %3216 = vmatmul.f32.gmra.mxu0 %v1086
        %v3217 = vpop.f32.mrf.mxu0
        %v3218 = vadd.f32 0.0, %v3217
        %3219 = vmatmul.f32.gmra.mxu0 %v1088
        %v3220 = vpop.f32.mrf.mxu0
        %v3221 = vadd.f32 0.0, %v3220
        %3222 = vmatmul.f32.gmra.mxu0 %v1090
        %v3223 = vpop.f32.mrf.mxu0
        %v3224 = vadd.f32 0.0, %v3223
        %3225 = vmatmul.f32.gmra.mxu0 %v1092
        %v3226 = vpop.f32.mrf.mxu0
        %v3227 = vadd.f32 0.0, %v3226
        %3228 = vdwg.mxu0
        %3229 = vmatpush.msra.mxu0 %v3163
        %3230 = vmatpush.msra.mxu0 %v3162
        %3231 = vmatpush.msra.mxu0 %v3161
        %3232 = vmatpush.msra.mxu0 %v3160
        %3233 = vmatpush.msra.mxu0 %v3159
        %3234 = vmatpush.msra.mxu0 %v3158
        %3235 = vmatpush.msra.mxu0 %v3157
        %3236 = vmatpush.msra.mxu0 %v3156
        %3237 = vmatpush.msra.mxu0 %v3155
        %3238 = vmatpush.msra.mxu0 %v3154
        %3239 = vmatpush.msra.mxu0 %v3153
        %3240 = vmatpush.msra.mxu0 %v3152
        %3241 = vmatpush.msra.mxu0 %v3151
        %3242 = vmatpush.msra.mxu0 %v3150
        %3243 = vmatpush.msra.mxu0 %v3149
        %3244 = vmatpush.msra.mxu0 %v3148
        %3245 = vmatmul.f32.gmra.mxu0 %v1063
        %v3246 = vpop.f32.mrf.mxu0
        %v3247 = vadd.f32 %v3182, %v3246
        %3248 = vmatmul.f32.gmra.mxu0 %v1065
        %v3249 = vpop.f32.mrf.mxu0
        %v3250 = vadd.f32 %v3185, %v3249
        %3251 = vmatmul.f32.gmra.mxu0 %v1067
        %v3252 = vpop.f32.mrf.mxu0
        %v3253 = vadd.f32 %v3188, %v3252
        %3254 = vmatmul.f32.gmra.mxu0 %v1069
        %v3255 = vpop.f32.mrf.mxu0
        %v3256 = vadd.f32 %v3191, %v3255
        %3257 = vmatmul.f32.gmra.mxu0 %v1071
        %v3258 = vpop.f32.mrf.mxu0
        %v3259 = vadd.f32 %v3194, %v3258
        %3260 = vmatmul.f32.gmra.mxu0 %v1073
        %v3261 = vpop.f32.mrf.mxu0
        %v3262 = vadd.f32 %v3197, %v3261
        %3263 = vmatmul.f32.gmra.mxu0 %v1075
        %v3264 = vpop.f32.mrf.mxu0
        %v3265 = vadd.f32 %v3200, %v3264
        %3266 = vmatmul.f32.gmra.mxu0 %v1077
        %v3267 = vpop.f32.mrf.mxu0
        %v3268 = vadd.f32 %v3203, %v3267
        %3269 = vmatmul.f32.gmra.mxu0 %v1079
        %v3270 = vpop.f32.mrf.mxu0
        %v3271 = vadd.f32 %v3206, %v3270
        %3272 = vmatmul.f32.gmra.mxu0 %v1081
        %v3273 = vpop.f32.mrf.mxu0
        %v3274 = vadd.f32 %v3209, %v3273
        %3275 = vmatmul.f32.gmra.mxu0 %v1083
        %v3276 = vpop.f32.mrf.mxu0
        %v3277 = vadd.f32 %v3212, %v3276
        %3278 = vmatmul.f32.gmra.mxu0 %v1085
        %v3279 = vpop.f32.mrf.mxu0
        %v3280 = vadd.f32 %v3215, %v3279
        %3281 = vmatmul.f32.gmra.mxu0 %v1087
        %v3282 = vpop.f32.mrf.mxu0
        %v3283 = vadd.f32 %v3218, %v3282
        %3284 = vmatmul.f32.gmra.mxu0 %v1089
        %v3285 = vpop.f32.mrf.mxu0
        %v3286 = vadd.f32 %v3221, %v3285
        %3287 = vmatmul.f32.gmra.mxu0 %v1091
        %v3288 = vpop.f32.mrf.mxu0
        %v3289 = vadd.f32 %v3224, %v3288
        %3290 = vmatmul.f32.gmra.mxu0 %v1093
        %v3291 = vpop.f32.mrf.mxu0
        %v3292 = vadd.f32 %v3227, %v3291
        %3293 = vdwg.mxu0
        %v3294 = vmax.f32 %v3247, 1e-20
        %v3295 = vmax.f32 %v3250, 1e-20
        %v3296 = vmax.f32 %v3253, 1e-20
        %v3297 = vmax.f32 %v3256, 1e-20
        %v3298 = vmax.f32 %v3259, 1e-20
        %v3299 = vmax.f32 %v3262, 1e-20
        %v3300 = vmax.f32 %v3265, 1e-20
        %v3301 = vmax.f32 %v3268, 1e-20
        %v3302 = vmax.f32 %v3271, 1e-20
        %v3303 = vmax.f32 %v3274, 1e-20
        %v3304 = vmax.f32 %v3277, 1e-20
        %v3305 = vmax.f32 %v3280, 1e-20
        %v3306 = vmax.f32 %v3283, 1e-20
        %v3307 = vmax.f32 %v3286, 1e-20
        %v3308 = vmax.f32 %v3289, 1e-20
        %v3309 = vmax.f32 %v3292, 1e-20
        %v3310 = vrcp.pop %v3294
        %v3311 = vrcp.pop %v3295
        %v3312 = vrcp.pop %v3296
        %v3313 = vrcp.pop %v3297
        %v3314 = vrcp.pop %v3298
        %v3315 = vrcp.pop %v3299
        %v3316 = vrcp.pop %v3300
        %v3317 = vrcp.pop %v3301
        %v3318 = vrcp.pop %v3302
        %v3319 = vrcp.pop %v3303
        %v3320 = vrcp.pop %v3304
        %v3321 = vrcp.pop %v3305
        %v3322 = vrcp.pop %v3306
        %v3323 = vrcp.pop %v3307
        %v3324 = vrcp.pop %v3308
        %v3325 = vrcp.pop %v3309
        %vm3326 = vcmp.gt.f32.partialorder %v3247, 0.0
        %vm3327 = vcmp.gt.f32.partialorder %v3250, 0.0
        %vm3328 = vcmp.gt.f32.partialorder %v3253, 0.0
        %vm3329 = vcmp.gt.f32.partialorder %v3256, 0.0
        %vm3330 = vcmp.gt.f32.partialorder %v3259, 0.0
        %vm3331 = vcmp.gt.f32.partialorder %v3262, 0.0
        %vm3332 = vcmp.gt.f32.partialorder %v3265, 0.0
        %vm3333 = vcmp.gt.f32.partialorder %v3268, 0.0
        %vm3334 = vcmp.gt.f32.partialorder %v3271, 0.0
        %vm3335 = vcmp.gt.f32.partialorder %v3274, 0.0
        %vm3336 = vcmp.gt.f32.partialorder %v3277, 0.0
        %vm3337 = vcmp.gt.f32.partialorder %v3280, 0.0
        %vm3338 = vcmp.gt.f32.partialorder %v3283, 0.0
        %vm3339 = vcmp.gt.f32.partialorder %v3286, 0.0
        %vm3340 = vcmp.gt.f32.partialorder %v3289, 0.0
        %vm3341 = vcmp.gt.f32.partialorder %v3292, 0.0
        %3358 = vrot.lane.b32.xlu0 %v3310, 32
        %v3359 = vpop.permute.xlu0 %3358
        %3360 = vrot.lane.b32.xlu0 %v3311, 32
        %v3361 = vpop.permute.xlu0 %3360
        %3362 = vrot.lane.b32.xlu0 %v3312, 32
        %v3363 = vpop.permute.xlu0 %3362
        %3364 = vrot.lane.b32.xlu0 %v3313, 32
        %v3365 = vpop.permute.xlu0 %3364
        %3366 = vrot.lane.b32.xlu0 %v3314, 32
        %v3367 = vpop.permute.xlu0 %3366
        %3368 = vrot.lane.b32.xlu0 %v3315, 32
        %v3369 = vpop.permute.xlu0 %3368
        %3370 = vrot.lane.b32.xlu0 %v3316, 32
        %v3371 = vpop.permute.xlu0 %3370
        %3372 = vrot.lane.b32.xlu0 %v3317, 32
        %v3373 = vpop.permute.xlu0 %3372
        %3374 = vrot.lane.b32.xlu0 %v3318, 32
        %v3375 = vpop.permute.xlu0 %3374
        %3376 = vrot.lane.b32.xlu0 %v3319, 32
        %v3377 = vpop.permute.xlu0 %3376
        %3378 = vrot.lane.b32.xlu0 %v3320, 32
        %v3379 = vpop.permute.xlu0 %3378
        %3380 = vrot.lane.b32.xlu0 %v3321, 32
        %v3381 = vpop.permute.xlu0 %3380
        %3382 = vrot.lane.b32.xlu0 %v3322, 32
        %v3383 = vpop.permute.xlu0 %3382
        %3384 = vrot.lane.b32.xlu0 %v3323, 32
        %v3385 = vpop.permute.xlu0 %3384
        %3386 = vrot.lane.b32.xlu0 %v3324, 32
        %v3387 = vpop.permute.xlu0 %3386
        %3388 = vrot.lane.b32.xlu0 %v3325, 32
        %v3389 = vpop.permute.xlu0 %3388
        %v3406 = vmul.f32 %v3247, %v3359
        %v3407 = vmul.f32 %v3250, %v3361
        %v3408 = vmul.f32 %v3253, %v3363
        %v3409 = vmul.f32 %v3256, %v3365
        %v3410 = vmul.f32 %v3259, %v3367
        %v3411 = vmul.f32 %v3262, %v3369
        %v3412 = vmul.f32 %v3265, %v3371
        %v3413 = vmul.f32 %v3268, %v3373
        %v3414 = vmul.f32 %v3271, %v3375
        %v3415 = vmul.f32 %v3274, %v3377
        %v3416 = vmul.f32 %v3277, %v3379
        %v3417 = vmul.f32 %v3280, %v3381
        %v3418 = vmul.f32 %v3283, %v3383
        %v3419 = vmul.f32 %v3286, %v3385
        %v3420 = vmul.f32 %v3289, %v3387
        %v3421 = vmul.f32 %v3292, %v3389
        %3438 = vrot.lane.b32.xlu0 %v3406, 96
        %v3439 = vpop.permute.xlu0 %3438
        %3440 = vrot.lane.b32.xlu0 %v3407, 96
        %v3441 = vpop.permute.xlu0 %3440
        %3442 = vrot.lane.b32.xlu0 %v3408, 96
        %v3443 = vpop.permute.xlu0 %3442
        %3444 = vrot.lane.b32.xlu0 %v3409, 96
        %v3445 = vpop.permute.xlu0 %3444
        %3446 = vrot.lane.b32.xlu0 %v3410, 96
        %v3447 = vpop.permute.xlu0 %3446
        %3448 = vrot.lane.b32.xlu0 %v3411, 96
        %v3449 = vpop.permute.xlu0 %3448
        %3450 = vrot.lane.b32.xlu0 %v3412, 96
        %v3451 = vpop.permute.xlu0 %3450
        %3452 = vrot.lane.b32.xlu0 %v3413, 96
        %v3453 = vpop.permute.xlu0 %3452
        %3454 = vrot.lane.b32.xlu0 %v3414, 96
        %v3455 = vpop.permute.xlu0 %3454
        %3456 = vrot.lane.b32.xlu0 %v3415, 96
        %v3457 = vpop.permute.xlu0 %3456
        %3458 = vrot.lane.b32.xlu0 %v3416, 96
        %v3459 = vpop.permute.xlu0 %3458
        %3460 = vrot.lane.b32.xlu0 %v3417, 96
        %v3461 = vpop.permute.xlu0 %3460
        %3462 = vrot.lane.b32.xlu0 %v3418, 96
        %v3463 = vpop.permute.xlu0 %3462
        %3464 = vrot.lane.b32.xlu0 %v3419, 96
        %v3465 = vpop.permute.xlu0 %3464
        %3466 = vrot.lane.b32.xlu0 %v3420, 96
        %v3467 = vpop.permute.xlu0 %3466
        %3468 = vrot.lane.b32.xlu0 %v3421, 96
        %v3469 = vpop.permute.xlu0 %3468
        %v3486 = vsel %vm3326, %v3439, 0.0
        %v3487 = vsel %vm3327, %v3441, 0.0
        %v3488 = vsel %vm3328, %v3443, 0.0
        %v3489 = vsel %vm3329, %v3445, 0.0
        %v3490 = vsel %vm3330, %v3447, 0.0
        %v3491 = vsel %vm3331, %v3449, 0.0
        %v3492 = vsel %vm3332, %v3451, 0.0
        %v3493 = vsel %vm3333, %v3453, 0.0
        %v3494 = vsel %vm3334, %v3455, 0.0
        %v3495 = vsel %vm3335, %v3457, 0.0
        %v3496 = vsel %vm3336, %v3459, 0.0
        %v3497 = vsel %vm3337, %v3461, 0.0
        %v3498 = vsel %vm3338, %v3463, 0.0
        %v3499 = vsel %vm3339, %v3465, 0.0
        %v3500 = vsel %vm3340, %v3467, 0.0
        %v3501 = vsel %vm3341, %v3469, 0.0
        %v3502 = vadd.f32 %v3486, %v2614
        %v3503 = vadd.f32 %v3487, %v2615
        %v3504 = vadd.f32 %v3488, %v2616
        %v3505 = vadd.f32 %v3489, %v2617
        %v3506 = vadd.f32 %v3490, %v2618
        %v3507 = vadd.f32 %v3491, %v2619
        %v3508 = vadd.f32 %v3492, %v2620
        %v3509 = vadd.f32 %v3493, %v2621
        %v3510 = vadd.f32 %v3494, %v2622
        %v3511 = vadd.f32 %v3495, %v2623
        %v3512 = vadd.f32 %v3496, %v2624
        %v3513 = vadd.f32 %v3497, %v2625
        %v3514 = vadd.f32 %v3498, %v2626
        %v3515 = vadd.f32 %v3499, %v2627
        %v3516 = vadd.f32 %v3500, %v2628
        %v3517 = vadd.f32 %v3501, %v2629
        %v3519 = vperm.slane %v990, 0
        %v3522 = vsel %vm1653, %v3502, 0
        %v3525 = vsel %vm1653, %v3503, 0
        %v3528 = vsel %vm1653, %v3504, 0
        %v3531 = vsel %vm1653, %v3505, 0
        %v3534 = vsel %vm1653, %v3506, 0
        %v3537 = vsel %vm1653, %v3507, 0
        %v3540 = vsel %vm1653, %v3508, 0
        %v3543 = vsel %vm1653, %v3509, 0
        %v3546 = vsel %vm1653, %v3510, 0
        %v3549 = vsel %vm1653, %v3511, 0
        %v3552 = vsel %vm1653, %v3512, 0
        %v3555 = vsel %vm1653, %v3513, 0
        %v3558 = vsel %vm1653, %v3514, 0
        %v3561 = vsel %vm1653, %v3515, 0
        %v3564 = vsel %vm1653, %v3516, 0
        %v3567 = vsel %vm1653, %v3517, 0
        %3569 = vmatpush.msra.mxu0 0.0
        %3570 = vmatpush.msra.mxu0 0.0
        %3571 = vmatpush.msra.mxu0 0.0
        %3572 = vmatpush.msra.mxu0 0.0
        %3573 = vmatpush.msra.mxu0 0.0
        %3574 = vmatpush.msra.mxu0 0.0
        %3575 = vmatpush.msra.mxu0 0.0
        %3576 = vmatpush.msra.mxu0 0.0
        %3577 = vmatpush.msra.mxu0 0.0
        %3578 = vmatpush.msra.mxu0 0.0
        %3579 = vmatpush.msra.mxu0 0.0
        %3580 = vmatpush.msra.mxu0 0.0
        %3581 = vmatpush.msra.mxu0 %v989
        %3582 = vmatpush.msra.mxu0 %v988
        %3583 = vmatpush.msra.mxu0 %v987
        %3584 = vmatpush.msra.mxu0 %v986
        %3585 = vmatmul.f32.gmra.mxu0 %v3522
        %v3586 = vpop.f32.mrf.mxu0
        %v3587 = vadd.f32 %v3519, %v3586
        %3588 = vmatmul.f32.gmra.mxu0 %v3525
        %v3589 = vpop.f32.mrf.mxu0
        %v3590 = vadd.f32 %v3519, %v3589
        %3591 = vmatmul.f32.gmra.mxu0 %v3528
        %v3592 = vpop.f32.mrf.mxu0
        %v3593 = vadd.f32 %v3519, %v3592
        %3594 = vmatmul.f32.gmra.mxu0 %v3531
        %v3595 = vpop.f32.mrf.mxu0
        %v3596 = vadd.f32 %v3519, %v3595
        %3597 = vmatmul.f32.gmra.mxu0 %v3534
        %v3598 = vpop.f32.mrf.mxu0
        %v3599 = vadd.f32 %v3519, %v3598
        %3600 = vmatmul.f32.gmra.mxu0 %v3537
        %v3601 = vpop.f32.mrf.mxu0
        %v3602 = vadd.f32 %v3519, %v3601
        %3603 = vmatmul.f32.gmra.mxu0 %v3540
        %v3604 = vpop.f32.mrf.mxu0
        %v3605 = vadd.f32 %v3519, %v3604
        %3606 = vmatmul.f32.gmra.mxu0 %v3543
        %v3607 = vpop.f32.mrf.mxu0
        %v3608 = vadd.f32 %v3519, %v3607
        %3609 = vmatmul.f32.gmra.mxu0 %v3546
        %v3610 = vpop.f32.mrf.mxu0
        %v3611 = vadd.f32 %v3519, %v3610
        %3612 = vmatmul.f32.gmra.mxu0 %v3549
        %v3613 = vpop.f32.mrf.mxu0
        %v3614 = vadd.f32 %v3519, %v3613
        %3615 = vmatmul.f32.gmra.mxu0 %v3552
        %v3616 = vpop.f32.mrf.mxu0
        %v3617 = vadd.f32 %v3519, %v3616
        %3618 = vmatmul.f32.gmra.mxu0 %v3555
        %v3619 = vpop.f32.mrf.mxu0
        %v3620 = vadd.f32 %v3519, %v3619
        %3621 = vmatmul.f32.gmra.mxu0 %v3558
        %v3622 = vpop.f32.mrf.mxu0
        %v3623 = vadd.f32 %v3519, %v3622
        %3624 = vmatmul.f32.gmra.mxu0 %v3561
        %v3625 = vpop.f32.mrf.mxu0
        %v3626 = vadd.f32 %v3519, %v3625
        %3627 = vmatmul.f32.gmra.mxu0 %v3564
        %v3628 = vpop.f32.mrf.mxu0
        %v3629 = vadd.f32 %v3519, %v3628
        %3630 = vmatmul.f32.gmra.mxu0 %v3567
        %v3631 = vpop.f32.mrf.mxu0
        %v3632 = vadd.f32 %v3519, %v3631
        %3633 = vdwg.mxu0
        %v3634 = vmax.f32 %v3587, 0.0
        %v3635 = vmax.f32 %v3590, 0.0
        %v3636 = vmax.f32 %v3593, 0.0
        %v3637 = vmax.f32 %v3596, 0.0
        %v3638 = vmax.f32 %v3599, 0.0
        %v3639 = vmax.f32 %v3602, 0.0
        %v3640 = vmax.f32 %v3605, 0.0
        %v3641 = vmax.f32 %v3608, 0.0
        %v3642 = vmax.f32 %v3611, 0.0
        %v3643 = vmax.f32 %v3614, 0.0
        %v3644 = vmax.f32 %v3617, 0.0
        %v3645 = vmax.f32 %v3620, 0.0
        %v3646 = vmax.f32 %v3623, 0.0
        %v3647 = vmax.f32 %v3626, 0.0
        %v3648 = vmax.f32 %v3629, 0.0
        %v3649 = vmax.f32 %v3632, 0.0
        %v3651 = vperm.slane %v999, 0
        %v3654 = vsel %vm2500, %v3634, 0
        %v3657 = vsel %vm2500, %v3635, 0
        %v3660 = vsel %vm2500, %v3636, 0
        %v3663 = vsel %vm2500, %v3637, 0
        %v3666 = vsel %vm2500, %v3638, 0
        %v3669 = vsel %vm2500, %v3639, 0
        %v3672 = vsel %vm2500, %v3640, 0
        %v3675 = vsel %vm2500, %v3641, 0
        %v3678 = vsel %vm2500, %v3642, 0
        %v3681 = vsel %vm2500, %v3643, 0
        %v3684 = vsel %vm2500, %v3644, 0
        %v3687 = vsel %vm2500, %v3645, 0
        %v3690 = vsel %vm2500, %v3646, 0
        %v3693 = vsel %vm2500, %v3647, 0
        %v3696 = vsel %vm2500, %v3648, 0
        %v3699 = vsel %vm2500, %v3649, 0
        %3701 = vmatpush.msra.mxu0 0.0
        %3702 = vmatpush.msra.mxu0 0.0
        %3703 = vmatpush.msra.mxu0 0.0
        %3704 = vmatpush.msra.mxu0 0.0
        %3705 = vmatpush.msra.mxu0 0.0
        %3706 = vmatpush.msra.mxu0 0.0
        %3707 = vmatpush.msra.mxu0 0.0
        %3708 = vmatpush.msra.mxu0 0.0
        %3709 = vmatpush.msra.mxu0 %v998
        %3710 = vmatpush.msra.mxu0 %v997
        %3711 = vmatpush.msra.mxu0 %v996
        %3712 = vmatpush.msra.mxu0 %v995
        %3713 = vmatpush.msra.mxu0 %v994
        %3714 = vmatpush.msra.mxu0 %v993
        %3715 = vmatpush.msra.mxu0 %v992
        %3716 = vmatpush.msra.mxu0 %v991
        %3717 = vmatmul.f32.gmra.mxu0 %v3654
        %v3718 = vpop.f32.mrf.mxu0
        %v3719 = vadd.f32 %v3651, %v3718
        %3720 = vmatmul.f32.gmra.mxu0 %v3657
        %v3721 = vpop.f32.mrf.mxu0
        %v3722 = vadd.f32 %v3651, %v3721
        %3723 = vmatmul.f32.gmra.mxu0 %v3660
        %v3724 = vpop.f32.mrf.mxu0
        %v3725 = vadd.f32 %v3651, %v3724
        %3726 = vmatmul.f32.gmra.mxu0 %v3663
        %v3727 = vpop.f32.mrf.mxu0
        %v3728 = vadd.f32 %v3651, %v3727
        %3729 = vmatmul.f32.gmra.mxu0 %v3666
        %v3730 = vpop.f32.mrf.mxu0
        %v3731 = vadd.f32 %v3651, %v3730
        %3732 = vmatmul.f32.gmra.mxu0 %v3669
        %v3733 = vpop.f32.mrf.mxu0
        %v3734 = vadd.f32 %v3651, %v3733
        %3735 = vmatmul.f32.gmra.mxu0 %v3672
        %v3736 = vpop.f32.mrf.mxu0
        %v3737 = vadd.f32 %v3651, %v3736
        %3738 = vmatmul.f32.gmra.mxu0 %v3675
        %v3739 = vpop.f32.mrf.mxu0
        %v3740 = vadd.f32 %v3651, %v3739
        %3741 = vmatmul.f32.gmra.mxu0 %v3678
        %v3742 = vpop.f32.mrf.mxu0
        %v3743 = vadd.f32 %v3651, %v3742
        %3744 = vmatmul.f32.gmra.mxu0 %v3681
        %v3745 = vpop.f32.mrf.mxu0
        %v3746 = vadd.f32 %v3651, %v3745
        %3747 = vmatmul.f32.gmra.mxu0 %v3684
        %v3748 = vpop.f32.mrf.mxu0
        %v3749 = vadd.f32 %v3651, %v3748
        %3750 = vmatmul.f32.gmra.mxu0 %v3687
        %v3751 = vpop.f32.mrf.mxu0
        %v3752 = vadd.f32 %v3651, %v3751
        %3753 = vmatmul.f32.gmra.mxu0 %v3690
        %v3754 = vpop.f32.mrf.mxu0
        %v3755 = vadd.f32 %v3651, %v3754
        %3756 = vmatmul.f32.gmra.mxu0 %v3693
        %v3757 = vpop.f32.mrf.mxu0
        %v3758 = vadd.f32 %v3651, %v3757
        %3759 = vmatmul.f32.gmra.mxu0 %v3696
        %v3760 = vpop.f32.mrf.mxu0
        %v3761 = vadd.f32 %v3651, %v3760
        %3762 = vmatmul.f32.gmra.mxu0 %v3699
        %v3763 = vpop.f32.mrf.mxu0
        %v3764 = vadd.f32 %v3651, %v3763
        %3765 = vdwg.mxu0
        %v3766 = vmax.f32 %v3719, 0.0
        %v3767 = vmax.f32 %v3722, 0.0
        %v3768 = vmax.f32 %v3725, 0.0
        %v3769 = vmax.f32 %v3728, 0.0
        %v3770 = vmax.f32 %v3731, 0.0
        %v3771 = vmax.f32 %v3734, 0.0
        %v3772 = vmax.f32 %v3737, 0.0
        %v3773 = vmax.f32 %v3740, 0.0
        %v3774 = vmax.f32 %v3743, 0.0
        %v3775 = vmax.f32 %v3746, 0.0
        %v3776 = vmax.f32 %v3749, 0.0
        %v3777 = vmax.f32 %v3752, 0.0
        %v3778 = vmax.f32 %v3755, 0.0
        %v3779 = vmax.f32 %v3758, 0.0
        %v3780 = vmax.f32 %v3761, 0.0
        %v3781 = vmax.f32 %v3764, 0.0
        %3782 = vmatpush.msra.mxu0 %v3781
        %3783 = vmatpush.msra.mxu0 %v3780
        %3784 = vmatpush.msra.mxu0 %v3779
        %3785 = vmatpush.msra.mxu0 %v3778
        %3786 = vmatpush.msra.mxu0 %v3777
        %3787 = vmatpush.msra.mxu0 %v3776
        %3788 = vmatpush.msra.mxu0 %v3775
        %3789 = vmatpush.msra.mxu0 %v3774
        %3790 = vmatpush.msra.mxu0 %v3773
        %3791 = vmatpush.msra.mxu0 %v3772
        %3792 = vmatpush.msra.mxu0 %v3771
        %3793 = vmatpush.msra.mxu0 %v3770
        %3794 = vmatpush.msra.mxu0 %v3769
        %3795 = vmatpush.msra.mxu0 %v3768
        %3796 = vmatpush.msra.mxu0 %v3767
        %3797 = vmatpush.msra.mxu0 %v3766
        %3798 = vmatmul.f32.gmra.mxu0 %v1030
        %v3799 = vpop.f32.mrf.mxu0
        %v3800 = vadd.f32 %v1381, %v3799
        %3801 = vmatmul.f32.gmra.mxu0 %v1031
        %v3802 = vpop.f32.mrf.mxu0
        %v3803 = vadd.f32 %v1384, %v3802
        %3804 = vmatmul.f32.gmra.mxu0 %v1032
        %v3805 = vpop.f32.mrf.mxu0
        %v3806 = vadd.f32 %v1387, %v3805
        %3807 = vmatmul.f32.gmra.mxu0 %v1033
        %v3808 = vpop.f32.mrf.mxu0
        %v3809 = vadd.f32 %v1390, %v3808
        %3810 = vmatmul.f32.gmra.mxu0 %v1034
        %v3811 = vpop.f32.mrf.mxu0
        %v3812 = vadd.f32 %v1393, %v3811
        %3813 = vmatmul.f32.gmra.mxu0 %v1035
        %v3814 = vpop.f32.mrf.mxu0
        %v3815 = vadd.f32 %v1396, %v3814
        %3816 = vmatmul.f32.gmra.mxu0 %v1036
        %v3817 = vpop.f32.mrf.mxu0
        %v3818 = vadd.f32 %v1399, %v3817
        %3819 = vmatmul.f32.gmra.mxu0 %v1037
        %v3820 = vpop.f32.mrf.mxu0
        %v3821 = vadd.f32 %v1402, %v3820
        %3822 = vmatmul.f32.gmra.mxu0 %v1038
        %v3823 = vpop.f32.mrf.mxu0
        %v3824 = vadd.f32 %v1405, %v3823
        %3825 = vmatmul.f32.gmra.mxu0 %v1039
        %v3826 = vpop.f32.mrf.mxu0
        %v3827 = vadd.f32 %v1408, %v3826
        %3828 = vmatmul.f32.gmra.mxu0 %v1040
        %v3829 = vpop.f32.mrf.mxu0
        %v3830 = vadd.f32 %v1411, %v3829
        %3831 = vmatmul.f32.gmra.mxu0 %v1041
        %v3832 = vpop.f32.mrf.mxu0
        %v3833 = vadd.f32 %v1414, %v3832
        %3834 = vmatmul.f32.gmra.mxu0 %v1042
        %v3835 = vpop.f32.mrf.mxu0
        %v3836 = vadd.f32 %v1417, %v3835
        %3837 = vmatmul.f32.gmra.mxu0 %v1043
        %v3838 = vpop.f32.mrf.mxu0
        %v3839 = vadd.f32 %v1420, %v3838
        %3840 = vmatmul.f32.gmra.mxu0 %v1044
        %v3841 = vpop.f32.mrf.mxu0
        %v3842 = vadd.f32 %v1423, %v3841
        %3843 = vmatmul.f32.gmra.mxu0 %v1045
        %v3844 = vpop.f32.mrf.mxu0
        %v3845 = vadd.f32 %v1426, %v3844
        %3846 = vmatmul.f32.gmra.mxu0 %v1046
        %v3847 = vpop.f32.mrf.mxu0
        %v3848 = vadd.f32 %v1429, %v3847
        %3849 = vmatmul.f32.gmra.mxu0 %v1047
        %v3850 = vpop.f32.mrf.mxu0
        %v3851 = vadd.f32 %v1432, %v3850
        %3852 = vmatmul.f32.gmra.mxu0 %v1048
        %v3853 = vpop.f32.mrf.mxu0
        %v3854 = vadd.f32 %v1435, %v3853
        %3855 = vmatmul.f32.gmra.mxu0 %v1049
        %v3856 = vpop.f32.mrf.mxu0
        %v3857 = vadd.f32 %v1438, %v3856
        %3858 = vmatmul.f32.gmra.mxu0 %v1050
        %v3859 = vpop.f32.mrf.mxu0
        %v3860 = vadd.f32 %v1441, %v3859
        %3861 = vmatmul.f32.gmra.mxu0 %v1051
        %v3862 = vpop.f32.mrf.mxu0
        %v3863 = vadd.f32 %v1444, %v3862
        %3864 = vmatmul.f32.gmra.mxu0 %v1052
        %v3865 = vpop.f32.mrf.mxu0
        %v3866 = vadd.f32 %v1447, %v3865
        %3867 = vmatmul.f32.gmra.mxu0 %v1053
        %v3868 = vpop.f32.mrf.mxu0
        %v3869 = vadd.f32 %v1450, %v3868
        %3870 = vmatmul.f32.gmra.mxu0 %v1054
        %v3871 = vpop.f32.mrf.mxu0
        %v3872 = vadd.f32 %v1453, %v3871
        %3873 = vmatmul.f32.gmra.mxu0 %v1055
        %v3874 = vpop.f32.mrf.mxu0
        %v3875 = vadd.f32 %v1456, %v3874
        %3876 = vmatmul.f32.gmra.mxu0 %v1056
        %v3877 = vpop.f32.mrf.mxu0
        %v3878 = vadd.f32 %v1459, %v3877
        %3879 = vmatmul.f32.gmra.mxu0 %v1057
        %v3880 = vpop.f32.mrf.mxu0
        %v3881 = vadd.f32 %v1462, %v3880
        %3882 = vmatmul.f32.gmra.mxu0 %v1058
        %v3883 = vpop.f32.mrf.mxu0
        %v3884 = vadd.f32 %v1465, %v3883
        %3885 = vmatmul.f32.gmra.mxu0 %v1059
        %v3886 = vpop.f32.mrf.mxu0
        %v3887 = vadd.f32 %v1468, %v3886
        %3888 = vmatmul.f32.gmra.mxu0 %v1060
        %v3889 = vpop.f32.mrf.mxu0
        %v3890 = vadd.f32 %v1471, %v3889
        %3891 = vmatmul.f32.gmra.mxu0 %v1061
        %v3892 = vpop.f32.mrf.mxu0
        %v3893 = vadd.f32 %v1474, %v3892
        %3894 = vdwg.mxu0
        %v3895 = vmax.f32 %v3800, 0.0
        %v3896 = vmax.f32 %v3803, 0.0
        %v3897 = vmax.f32 %v3806, 0.0
        %v3898 = vmax.f32 %v3809, 0.0
        %v3899 = vmax.f32 %v3812, 0.0
        %v3900 = vmax.f32 %v3815, 0.0
        %v3901 = vmax.f32 %v3818, 0.0
        %v3902 = vmax.f32 %v3821, 0.0
        %v3903 = vmax.f32 %v3824, 0.0
        %v3904 = vmax.f32 %v3827, 0.0
        %v3905 = vmax.f32 %v3830, 0.0
        %v3906 = vmax.f32 %v3833, 0.0
        %v3907 = vmax.f32 %v3836, 0.0
        %v3908 = vmax.f32 %v3839, 0.0
        %v3909 = vmax.f32 %v3842, 0.0
        %v3910 = vmax.f32 %v3845, 0.0
        %v3911 = vmax.f32 %v3848, 0.0
        %v3912 = vmax.f32 %v3851, 0.0
        %v3913 = vmax.f32 %v3854, 0.0
        %v3914 = vmax.f32 %v3857, 0.0
        %v3915 = vmax.f32 %v3860, 0.0
        %v3916 = vmax.f32 %v3863, 0.0
        %v3917 = vmax.f32 %v3866, 0.0
        %v3918 = vmax.f32 %v3869, 0.0
        %v3919 = vmax.f32 %v3872, 0.0
        %v3920 = vmax.f32 %v3875, 0.0
        %v3921 = vmax.f32 %v3878, 0.0
        %v3922 = vmax.f32 %v3881, 0.0
        %v3923 = vmax.f32 %v3884, 0.0
        %v3924 = vmax.f32 %v3887, 0.0
        %v3925 = vmax.f32 %v3890, 0.0
        %v3926 = vmax.f32 %v3893, 0.0
        %v3927 = vadd.f32 %v3895, 1e-07
        %v3928 = vadd.f32 %v3896, 1e-07
        %v3929 = vadd.f32 %v3897, 1e-07
        %v3930 = vadd.f32 %v3898, 1e-07
        %v3931 = vadd.f32 %v3899, 1e-07
        %v3932 = vadd.f32 %v3900, 1e-07
        %v3933 = vadd.f32 %v3901, 1e-07
        %v3934 = vadd.f32 %v3902, 1e-07
        %v3935 = vadd.f32 %v3903, 1e-07
        %v3936 = vadd.f32 %v3904, 1e-07
        %v3937 = vadd.f32 %v3905, 1e-07
        %v3938 = vadd.f32 %v3906, 1e-07
        %v3939 = vadd.f32 %v3907, 1e-07
        %v3940 = vadd.f32 %v3908, 1e-07
        %v3941 = vadd.f32 %v3909, 1e-07
        %v3942 = vadd.f32 %v3910, 1e-07
        %v3943 = vadd.f32 %v3911, 1e-07
        %v3944 = vadd.f32 %v3912, 1e-07
        %v3945 = vadd.f32 %v3913, 1e-07
        %v3946 = vadd.f32 %v3914, 1e-07
        %v3947 = vadd.f32 %v3915, 1e-07
        %v3948 = vadd.f32 %v3916, 1e-07
        %v3949 = vadd.f32 %v3917, 1e-07
        %v3950 = vadd.f32 %v3918, 1e-07
        %v3951 = vadd.f32 %v3919, 1e-07
        %v3952 = vadd.f32 %v3920, 1e-07
        %v3953 = vadd.f32 %v3921, 1e-07
        %v3954 = vadd.f32 %v3922, 1e-07
        %v3955 = vadd.f32 %v3923, 1e-07
        %v3956 = vadd.f32 %v3924, 1e-07
        %v3957 = vadd.f32 %v3925, 1e-07
        %v3958 = vadd.f32 %v3926, 1e-07
        %v3959 = vsel %vm1653, %v3927, -inf
        %v3960 = vsel %vm1653, %v3928, -inf
        %v3961 = vsel %vm1653, %v3929, -inf
        %v3962 = vsel %vm1653, %v3930, -inf
        %v3963 = vsel %vm1653, %v3931, -inf
        %v3964 = vmax.f32 %v3959, %v3963
        %v3965 = vsel %vm1653, %v3932, -inf
        %v3966 = vmax.f32 %v3960, %v3965
        %v3967 = vsel %vm1653, %v3933, -inf
        %v3968 = vmax.f32 %v3961, %v3967
        %v3969 = vsel %vm1653, %v3934, -inf
        %v3970 = vmax.f32 %v3962, %v3969
        %v3971 = vsel %vm1653, %v3935, -inf
        %v3972 = vmax.f32 %v3964, %v3971
        %v3973 = vsel %vm1653, %v3936, -inf
        %v3974 = vmax.f32 %v3966, %v3973
        %v3975 = vsel %vm1653, %v3937, -inf
        %v3976 = vmax.f32 %v3968, %v3975
        %v3977 = vsel %vm1653, %v3938, -inf
        %v3978 = vmax.f32 %v3970, %v3977
        %v3979 = vsel %vm1653, %v3939, -inf
        %v3980 = vmax.f32 %v3972, %v3979
        %v3981 = vsel %vm1653, %v3940, -inf
        %v3982 = vmax.f32 %v3974, %v3981
        %v3983 = vsel %vm1653, %v3941, -inf
        %v3984 = vmax.f32 %v3976, %v3983
        %v3985 = vsel %vm1653, %v3942, -inf
        %v3986 = vmax.f32 %v3978, %v3985
        %v3987 = vsel %vm1653, %v3943, -inf
        %v3988 = vmax.f32 %v3980, %v3987
        %v3989 = vsel %vm1653, %v3944, -inf
        %v3990 = vmax.f32 %v3982, %v3989
        %v3991 = vsel %vm1653, %v3945, -inf
        %v3992 = vmax.f32 %v3984, %v3991
        %v3993 = vsel %vm1653, %v3946, -inf
        %v3994 = vmax.f32 %v3986, %v3993
        %v3995 = vsel %vm1653, %v3947, -inf
        %v3996 = vmax.f32 %v3988, %v3995
        %v3997 = vsel %vm1653, %v3948, -inf
        %v3998 = vmax.f32 %v3990, %v3997
        %v3999 = vsel %vm1653, %v3949, -inf
        %v4000 = vmax.f32 %v3992, %v3999
        %v4001 = vsel %vm1653, %v3950, -inf
        %v4002 = vmax.f32 %v3994, %v4001
        %v4003 = vsel %vm1653, %v3951, -inf
        %v4004 = vmax.f32 %v3996, %v4003
        %v4005 = vsel %vm1653, %v3952, -inf
        %v4006 = vmax.f32 %v3998, %v4005
        %v4007 = vsel %vm1653, %v3953, -inf
        %v4008 = vmax.f32 %v4000, %v4007
        %v4009 = vsel %vm1653, %v3954, -inf
        %v4010 = vmax.f32 %v4002, %v4009
        %v4011 = vsel %vm1653, %v3955, -inf
        %v4012 = vmax.f32 %v4004, %v4011
        %v4013 = vsel %vm1653, %v3956, -inf
        %v4014 = vmax.f32 %v4006, %v4013
        %v4015 = vsel %vm1653, %v3957, -inf
        %v4016 = vmax.f32 %v4008, %v4015
        %v4017 = vsel %vm1653, %v3958, -inf
        %v4018 = vmax.f32 %v4010, %v4017
        %v4019 = vmax.f32 %v4012, %v4014
        %v4020 = vmax.f32 %v4016, %v4018
        %v4021 = vmax.f32 %v4019, %v4020
        %v4022 = vrot.slane %v4021, 4
        %v4023 = vmax.f32 %v4021, %v4022
        %v4024 = vrot.slane %v4023, 2
        %v4025 = vmax.f32 %v4023, %v4024
        %v4026 = vrot.slane %v4025, 1
        %v4027 = vmax.f32 %v4025, %v4026
        %v4028 = vsub.f32 %v3927, %v4027
        %v4029 = vsub.f32 %v3928, %v4027
        %v4030 = vsub.f32 %v3929, %v4027
        %v4031 = vsub.f32 %v3930, %v4027
        %v4032 = vsub.f32 %v3931, %v4027
        %v4033 = vsub.f32 %v3932, %v4027
        %v4034 = vsub.f32 %v3933, %v4027
        %v4035 = vsub.f32 %v3934, %v4027
        %v4036 = vsub.f32 %v3935, %v4027
        %v4037 = vsub.f32 %v3936, %v4027
        %v4038 = vsub.f32 %v3937, %v4027
        %v4039 = vsub.f32 %v3938, %v4027
        %v4040 = vsub.f32 %v3939, %v4027
        %v4041 = vsub.f32 %v3940, %v4027
        %v4042 = vsub.f32 %v3941, %v4027
        %v4043 = vsub.f32 %v3942, %v4027
        %v4044 = vsub.f32 %v3943, %v4027
        %v4045 = vsub.f32 %v3944, %v4027
        %v4046 = vsub.f32 %v3945, %v4027
        %v4047 = vsub.f32 %v3946, %v4027
        %v4048 = vsub.f32 %v3947, %v4027
        %v4049 = vsub.f32 %v3948, %v4027
        %v4050 = vsub.f32 %v3949, %v4027
        %v4051 = vsub.f32 %v3950, %v4027
        %v4052 = vsub.f32 %v3951, %v4027
        %v4053 = vsub.f32 %v3952, %v4027
        %v4054 = vsub.f32 %v3953, %v4027
        %v4055 = vsub.f32 %v3954, %v4027
        %v4056 = vsub.f32 %v3955, %v4027
        %v4057 = vsub.f32 %v3956, %v4027
        %v4058 = vsub.f32 %v3957, %v4027
        %v4059 = vsub.f32 %v3958, %v4027
        %v4060 = vmul.f32 %v4028, 1.442695
        %v4061 = vpow.pop %v4060
        %v4062 = vmul.f32 %v4029, 1.442695
        %v4063 = vpow.pop %v4062
        %v4064 = vmul.f32 %v4030, 1.442695
        %v4065 = vpow.pop %v4064
        %v4066 = vmul.f32 %v4031, 1.442695
        %v4067 = vpow.pop %v4066
        %v4068 = vmul.f32 %v4032, 1.442695
        %v4069 = vpow.pop %v4068
        %v4070 = vmul.f32 %v4033, 1.442695
        %v4071 = vpow.pop %v4070
        %v4072 = vmul.f32 %v4034, 1.442695
        %v4073 = vpow.pop %v4072
        %v4074 = vmul.f32 %v4035, 1.442695
        %v4075 = vpow.pop %v4074
        %v4076 = vmul.f32 %v4036, 1.442695
        %v4077 = vpow.pop %v4076
        %v4078 = vmul.f32 %v4037, 1.442695
        %v4079 = vpow.pop %v4078
        %v4080 = vmul.f32 %v4038, 1.442695
        %v4081 = vpow.pop %v4080
        %v4082 = vmul.f32 %v4039, 1.442695
        %v4083 = vpow.pop %v4082
        %v4084 = vmul.f32 %v4040, 1.442695
        %v4085 = vpow.pop %v4084
        %v4086 = vmul.f32 %v4041, 1.442695
        %v4087 = vpow.pop %v4086
        %v4088 = vmul.f32 %v4042, 1.442695
        %v4089 = vpow.pop %v4088
        %v4090 = vmul.f32 %v4043, 1.442695
        %v4091 = vpow.pop %v4090
        %v4092 = vmul.f32 %v4044, 1.442695
        %v4093 = vpow.pop %v4092
        %v4094 = vmul.f32 %v4045, 1.442695
        %v4095 = vpow.pop %v4094
        %v4096 = vmul.f32 %v4046, 1.442695
        %v4097 = vpow.pop %v4096
        %v4098 = vmul.f32 %v4047, 1.442695
        %v4099 = vpow.pop %v4098
        %v4100 = vmul.f32 %v4048, 1.442695
        %v4101 = vpow.pop %v4100
        %v4102 = vmul.f32 %v4049, 1.442695
        %v4103 = vpow.pop %v4102
        %v4104 = vmul.f32 %v4050, 1.442695
        %v4105 = vpow.pop %v4104
        %v4106 = vmul.f32 %v4051, 1.442695
        %v4107 = vpow.pop %v4106
        %v4108 = vmul.f32 %v4052, 1.442695
        %v4109 = vpow.pop %v4108
        %v4110 = vmul.f32 %v4053, 1.442695
        %v4111 = vpow.pop %v4110
        %v4112 = vmul.f32 %v4054, 1.442695
        %v4113 = vpow.pop %v4112
        %v4114 = vmul.f32 %v4055, 1.442695
        %v4115 = vpow.pop %v4114
        %v4116 = vmul.f32 %v4056, 1.442695
        %v4117 = vpow.pop %v4116
        %v4118 = vmul.f32 %v4057, 1.442695
        %v4119 = vpow.pop %v4118
        %v4120 = vmul.f32 %v4058, 1.442695
        %v4121 = vpow.pop %v4120
        %v4122 = vmul.f32 %v4059, 1.442695
        %v4123 = vpow.pop %v4122
        %v4124 = vmul.f32 %v4061, %v3927
        %v4125 = vmul.f32 %v4063, %v3928
        %v4126 = vmul.f32 %v4065, %v3929
        %v4127 = vmul.f32 %v4067, %v3930
        %v4128 = vmul.f32 %v4069, %v3931
        %v4129 = vmul.f32 %v4071, %v3932
        %v4130 = vmul.f32 %v4073, %v3933
        %v4131 = vmul.f32 %v4075, %v3934
        %v4132 = vmul.f32 %v4077, %v3935
        %v4133 = vmul.f32 %v4079, %v3936
        %v4134 = vmul.f32 %v4081, %v3937
        %v4135 = vmul.f32 %v4083, %v3938
        %v4136 = vmul.f32 %v4085, %v3939
        %v4137 = vmul.f32 %v4087, %v3940
        %v4138 = vmul.f32 %v4089, %v3941
        %v4139 = vmul.f32 %v4091, %v3942
        %v4140 = vmul.f32 %v4093, %v3943
        %v4141 = vmul.f32 %v4095, %v3944
        %v4142 = vmul.f32 %v4097, %v3945
        %v4143 = vmul.f32 %v4099, %v3946
        %v4144 = vmul.f32 %v4101, %v3947
        %v4145 = vmul.f32 %v4103, %v3948
        %v4146 = vmul.f32 %v4105, %v3949
        %v4147 = vmul.f32 %v4107, %v3950
        %v4148 = vmul.f32 %v4109, %v3951
        %v4149 = vmul.f32 %v4111, %v3952
        %v4150 = vmul.f32 %v4113, %v3953
        %v4151 = vmul.f32 %v4115, %v3954
        %v4152 = vmul.f32 %v4117, %v3955
        %v4153 = vmul.f32 %v4119, %v3956
        %v4154 = vmul.f32 %v4121, %v3957
        %v4155 = vmul.f32 %v4123, %v3958
        %4188 = vrot.lane.b32.xlu0 %v4124, 32
        %v4189 = vpop.permute.xlu0 %4188
        %4190 = vrot.lane.b32.xlu0 %v4125, 32
        %v4191 = vpop.permute.xlu0 %4190
        %4192 = vrot.lane.b32.xlu0 %v4126, 32
        %v4193 = vpop.permute.xlu0 %4192
        %4194 = vrot.lane.b32.xlu0 %v4127, 32
        %v4195 = vpop.permute.xlu0 %4194
        %4196 = vrot.lane.b32.xlu0 %v4128, 32
        %v4197 = vpop.permute.xlu0 %4196
        %4198 = vrot.lane.b32.xlu0 %v4129, 32
        %v4199 = vpop.permute.xlu0 %4198
        %4200 = vrot.lane.b32.xlu0 %v4130, 32
        %v4201 = vpop.permute.xlu0 %4200
        %4202 = vrot.lane.b32.xlu0 %v4131, 32
        %v4203 = vpop.permute.xlu0 %4202
        %4204 = vrot.lane.b32.xlu0 %v4132, 32
        %v4205 = vpop.permute.xlu0 %4204
        %4206 = vrot.lane.b32.xlu0 %v4133, 32
        %v4207 = vpop.permute.xlu0 %4206
        %4208 = vrot.lane.b32.xlu0 %v4134, 32
        %v4209 = vpop.permute.xlu0 %4208
        %4210 = vrot.lane.b32.xlu0 %v4135, 32
        %v4211 = vpop.permute.xlu0 %4210
        %4212 = vrot.lane.b32.xlu0 %v4136, 32
        %v4213 = vpop.permute.xlu0 %4212
        %4214 = vrot.lane.b32.xlu0 %v4137, 32
        %v4215 = vpop.permute.xlu0 %4214
        %4216 = vrot.lane.b32.xlu0 %v4138, 32
        %v4217 = vpop.permute.xlu0 %4216
        %4218 = vrot.lane.b32.xlu0 %v4139, 32
        %v4219 = vpop.permute.xlu0 %4218
        %4220 = vrot.lane.b32.xlu0 %v4140, 32
        %v4221 = vpop.permute.xlu0 %4220
        %4222 = vrot.lane.b32.xlu0 %v4141, 32
        %v4223 = vpop.permute.xlu0 %4222
        %4224 = vrot.lane.b32.xlu0 %v4142, 32
        %v4225 = vpop.permute.xlu0 %4224
        %4226 = vrot.lane.b32.xlu0 %v4143, 32
        %v4227 = vpop.permute.xlu0 %4226
        %4228 = vrot.lane.b32.xlu0 %v4144, 32
        %v4229 = vpop.permute.xlu0 %4228
        %4230 = vrot.lane.b32.xlu0 %v4145, 32
        %v4231 = vpop.permute.xlu0 %4230
        %4232 = vrot.lane.b32.xlu0 %v4146, 32
        %v4233 = vpop.permute.xlu0 %4232
        %4234 = vrot.lane.b32.xlu0 %v4147, 32
        %v4235 = vpop.permute.xlu0 %4234
        %4236 = vrot.lane.b32.xlu0 %v4148, 32
        %v4237 = vpop.permute.xlu0 %4236
        %4238 = vrot.lane.b32.xlu0 %v4149, 32
        %v4239 = vpop.permute.xlu0 %4238
        %4240 = vrot.lane.b32.xlu0 %v4150, 32
        %v4241 = vpop.permute.xlu0 %4240
        %4242 = vrot.lane.b32.xlu0 %v4151, 32
        %v4243 = vpop.permute.xlu0 %4242
        %4244 = vrot.lane.b32.xlu0 %v4152, 32
        %v4245 = vpop.permute.xlu0 %4244
        %4246 = vrot.lane.b32.xlu0 %v4153, 32
        %v4247 = vpop.permute.xlu0 %4246
        %4248 = vrot.lane.b32.xlu0 %v4154, 32
        %v4249 = vpop.permute.xlu0 %4248
        %4250 = vrot.lane.b32.xlu0 %v4155, 32
        %v4251 = vpop.permute.xlu0 %4250
        %v4284 = vsel %vm1653, %v4061, %v4189
        %v4285 = vsel %vm1653, %v4063, %v4191
        %v4286 = vsel %vm1653, %v4065, %v4193
        %v4287 = vsel %vm1653, %v4067, %v4195
        %v4288 = vsel %vm1653, %v4069, %v4197
        %v4289 = vsel %vm1653, %v4071, %v4199
        %v4290 = vsel %vm1653, %v4073, %v4201
        %v4291 = vsel %vm1653, %v4075, %v4203
        %v4292 = vsel %vm1653, %v4077, %v4205
        %v4293 = vsel %vm1653, %v4079, %v4207
        %v4294 = vsel %vm1653, %v4081, %v4209
        %v4295 = vsel %vm1653, %v4083, %v4211
        %v4296 = vsel %vm1653, %v4085, %v4213
        %v4297 = vsel %vm1653, %v4087, %v4215
        %v4298 = vsel %vm1653, %v4089, %v4217
        %v4299 = vsel %vm1653, %v4091, %v4219
        %v4300 = vsel %vm1653, %v4093, %v4221
        %v4301 = vsel %vm1653, %v4095, %v4223
        %v4302 = vsel %vm1653, %v4097, %v4225
        %v4303 = vsel %vm1653, %v4099, %v4227
        %v4304 = vsel %vm1653, %v4101, %v4229
        %v4305 = vsel %vm1653, %v4103, %v4231
        %v4306 = vsel %vm1653, %v4105, %v4233
        %v4307 = vsel %vm1653, %v4107, %v4235
        %v4308 = vsel %vm1653, %v4109, %v4237
        %v4309 = vsel %vm1653, %v4111, %v4239
        %v4310 = vsel %vm1653, %v4113, %v4241
        %v4311 = vsel %vm1653, %v4115, %v4243
        %v4312 = vsel %vm1653, %v4117, %v4245
        %v4313 = vsel %vm1653, %v4119, %v4247
        %v4314 = vsel %vm1653, %v4121, %v4249
        %v4315 = vsel %vm1653, %v4123, %v4251
        %4316 = vmatpush.msra.mxu0 %v4299
        %4317 = vmatpush.msra.mxu0 %v4298
        %4318 = vmatpush.msra.mxu0 %v4297
        %4319 = vmatpush.msra.mxu0 %v4296
        %4320 = vmatpush.msra.mxu0 %v4295
        %4321 = vmatpush.msra.mxu0 %v4294
        %4322 = vmatpush.msra.mxu0 %v4293
        %4323 = vmatpush.msra.mxu0 %v4292
        %4324 = vmatpush.msra.mxu0 %v4291
        %4325 = vmatpush.msra.mxu0 %v4290
        %4326 = vmatpush.msra.mxu0 %v4289
        %4327 = vmatpush.msra.mxu0 %v4288
        %4328 = vmatpush.msra.mxu0 %v4287
        %4329 = vmatpush.msra.mxu0 %v4286
        %4330 = vmatpush.msra.mxu0 %v4285
        %4331 = vmatpush.msra.mxu0 %v4284
        %4332 = vmatmul.f32.gmra.mxu0 %v1062
        %v4333 = vpop.f32.mrf.mxu0
        %v4334 = vadd.f32 0.0, %v4333
        %4335 = vmatmul.f32.gmra.mxu0 %v1064
        %v4336 = vpop.f32.mrf.mxu0
        %v4337 = vadd.f32 0.0, %v4336
        %4338 = vmatmul.f32.gmra.mxu0 %v1066
        %v4339 = vpop.f32.mrf.mxu0
        %v4340 = vadd.f32 0.0, %v4339
        %4341 = vmatmul.f32.gmra.mxu0 %v1068
        %v4342 = vpop.f32.mrf.mxu0
        %v4343 = vadd.f32 0.0, %v4342
        %4344 = vmatmul.f32.gmra.mxu0 %v1070
        %v4345 = vpop.f32.mrf.mxu0
        %v4346 = vadd.f32 0.0, %v4345
        %4347 = vmatmul.f32.gmra.mxu0 %v1072
        %v4348 = vpop.f32.mrf.mxu0
        %v4349 = vadd.f32 0.0, %v4348
        %4350 = vmatmul.f32.gmra.mxu0 %v1074
        %v4351 = vpop.f32.mrf.mxu0
        %v4352 = vadd.f32 0.0, %v4351
        %4353 = vmatmul.f32.gmra.mxu0 %v1076
        %v4354 = vpop.f32.mrf.mxu0
        %v4355 = vadd.f32 0.0, %v4354
        %4356 = vmatmul.f32.gmra.mxu0 %v1078
        %v4357 = vpop.f32.mrf.mxu0
        %v4358 = vadd.f32 0.0, %v4357
        %4359 = vmatmul.f32.gmra.mxu0 %v1080
        %v4360 = vpop.f32.mrf.mxu0
        %v4361 = vadd.f32 0.0, %v4360
        %4362 = vmatmul.f32.gmra.mxu0 %v1082
        %v4363 = vpop.f32.mrf.mxu0
        %v4364 = vadd.f32 0.0, %v4363
        %4365 = vmatmul.f32.gmra.mxu0 %v1084
        %v4366 = vpop.f32.mrf.mxu0
        %v4367 = vadd.f32 0.0, %v4366
        %4368 = vmatmul.f32.gmra.mxu0 %v1086
        %v4369 = vpop.f32.mrf.mxu0
        %v4370 = vadd.f32 0.0, %v4369
        %4371 = vmatmul.f32.gmra.mxu0 %v1088
        %v4372 = vpop.f32.mrf.mxu0
        %v4373 = vadd.f32 0.0, %v4372
        %4374 = vmatmul.f32.gmra.mxu0 %v1090
        %v4375 = vpop.f32.mrf.mxu0
        %v4376 = vadd.f32 0.0, %v4375
        %4377 = vmatmul.f32.gmra.mxu0 %v1092
        %v4378 = vpop.f32.mrf.mxu0
        %v4379 = vadd.f32 0.0, %v4378
        %4380 = vdwg.mxu0
        %4381 = vmatpush.msra.mxu0 %v4315
        %4382 = vmatpush.msra.mxu0 %v4314
        %4383 = vmatpush.msra.mxu0 %v4313
        %4384 = vmatpush.msra.mxu0 %v4312
        %4385 = vmatpush.msra.mxu0 %v4311
        %4386 = vmatpush.msra.mxu0 %v4310
        %4387 = vmatpush.msra.mxu0 %v4309
        %4388 = vmatpush.msra.mxu0 %v4308
        %4389 = vmatpush.msra.mxu0 %v4307
        %4390 = vmatpush.msra.mxu0 %v4306
        %4391 = vmatpush.msra.mxu0 %v4305
        %4392 = vmatpush.msra.mxu0 %v4304
        %4393 = vmatpush.msra.mxu0 %v4303
        %4394 = vmatpush.msra.mxu0 %v4302
        %4395 = vmatpush.msra.mxu0 %v4301
        %4396 = vmatpush.msra.mxu0 %v4300
        %4397 = vmatmul.f32.gmra.mxu0 %v1063
        %v4398 = vpop.f32.mrf.mxu0
        %v4399 = vadd.f32 %v4334, %v4398
        %4400 = vmatmul.f32.gmra.mxu0 %v1065
        %v4401 = vpop.f32.mrf.mxu0
        %v4402 = vadd.f32 %v4337, %v4401
        %4403 = vmatmul.f32.gmra.mxu0 %v1067
        %v4404 = vpop.f32.mrf.mxu0
        %v4405 = vadd.f32 %v4340, %v4404
        %4406 = vmatmul.f32.gmra.mxu0 %v1069
        %v4407 = vpop.f32.mrf.mxu0
        %v4408 = vadd.f32 %v4343, %v4407
        %4409 = vmatmul.f32.gmra.mxu0 %v1071
        %v4410 = vpop.f32.mrf.mxu0
        %v4411 = vadd.f32 %v4346, %v4410
        %4412 = vmatmul.f32.gmra.mxu0 %v1073
        %v4413 = vpop.f32.mrf.mxu0
        %v4414 = vadd.f32 %v4349, %v4413
        %4415 = vmatmul.f32.gmra.mxu0 %v1075
        %v4416 = vpop.f32.mrf.mxu0
        %v4417 = vadd.f32 %v4352, %v4416
        %4418 = vmatmul.f32.gmra.mxu0 %v1077
        %v4419 = vpop.f32.mrf.mxu0
        %v4420 = vadd.f32 %v4355, %v4419
        %4421 = vmatmul.f32.gmra.mxu0 %v1079
        %v4422 = vpop.f32.mrf.mxu0
        %v4423 = vadd.f32 %v4358, %v4422
        %4424 = vmatmul.f32.gmra.mxu0 %v1081
        %v4425 = vpop.f32.mrf.mxu0
        %v4426 = vadd.f32 %v4361, %v4425
        %4427 = vmatmul.f32.gmra.mxu0 %v1083
        %v4428 = vpop.f32.mrf.mxu0
        %v4429 = vadd.f32 %v4364, %v4428
        %4430 = vmatmul.f32.gmra.mxu0 %v1085
        %v4431 = vpop.f32.mrf.mxu0
        %v4432 = vadd.f32 %v4367, %v4431
        %4433 = vmatmul.f32.gmra.mxu0 %v1087
        %v4434 = vpop.f32.mrf.mxu0
        %v4435 = vadd.f32 %v4370, %v4434
        %4436 = vmatmul.f32.gmra.mxu0 %v1089
        %v4437 = vpop.f32.mrf.mxu0
        %v4438 = vadd.f32 %v4373, %v4437
        %4439 = vmatmul.f32.gmra.mxu0 %v1091
        %v4440 = vpop.f32.mrf.mxu0
        %v4441 = vadd.f32 %v4376, %v4440
        %4442 = vmatmul.f32.gmra.mxu0 %v1093
        %v4443 = vpop.f32.mrf.mxu0
        %v4444 = vadd.f32 %v4379, %v4443
        %4445 = vdwg.mxu0
        %v4446 = vmax.f32 %v4399, 1e-20
        %v4447 = vmax.f32 %v4402, 1e-20
        %v4448 = vmax.f32 %v4405, 1e-20
        %v4449 = vmax.f32 %v4408, 1e-20
        %v4450 = vmax.f32 %v4411, 1e-20
        %v4451 = vmax.f32 %v4414, 1e-20
        %v4452 = vmax.f32 %v4417, 1e-20
        %v4453 = vmax.f32 %v4420, 1e-20
        %v4454 = vmax.f32 %v4423, 1e-20
        %v4455 = vmax.f32 %v4426, 1e-20
        %v4456 = vmax.f32 %v4429, 1e-20
        %v4457 = vmax.f32 %v4432, 1e-20
        %v4458 = vmax.f32 %v4435, 1e-20
        %v4459 = vmax.f32 %v4438, 1e-20
        %v4460 = vmax.f32 %v4441, 1e-20
        %v4461 = vmax.f32 %v4444, 1e-20
        %v4462 = vrcp.pop %v4446
        %v4463 = vrcp.pop %v4447
        %v4464 = vrcp.pop %v4448
        %v4465 = vrcp.pop %v4449
        %v4466 = vrcp.pop %v4450
        %v4467 = vrcp.pop %v4451
        %v4468 = vrcp.pop %v4452
        %v4469 = vrcp.pop %v4453
        %v4470 = vrcp.pop %v4454
        %v4471 = vrcp.pop %v4455
        %v4472 = vrcp.pop %v4456
        %v4473 = vrcp.pop %v4457
        %v4474 = vrcp.pop %v4458
        %v4475 = vrcp.pop %v4459
        %v4476 = vrcp.pop %v4460
        %v4477 = vrcp.pop %v4461
        %vm4478 = vcmp.gt.f32.partialorder %v4399, 0.0
        %vm4479 = vcmp.gt.f32.partialorder %v4402, 0.0
        %vm4480 = vcmp.gt.f32.partialorder %v4405, 0.0
        %vm4481 = vcmp.gt.f32.partialorder %v4408, 0.0
        %vm4482 = vcmp.gt.f32.partialorder %v4411, 0.0
        %vm4483 = vcmp.gt.f32.partialorder %v4414, 0.0
        %vm4484 = vcmp.gt.f32.partialorder %v4417, 0.0
        %vm4485 = vcmp.gt.f32.partialorder %v4420, 0.0
        %vm4486 = vcmp.gt.f32.partialorder %v4423, 0.0
        %vm4487 = vcmp.gt.f32.partialorder %v4426, 0.0
        %vm4488 = vcmp.gt.f32.partialorder %v4429, 0.0
        %vm4489 = vcmp.gt.f32.partialorder %v4432, 0.0
        %vm4490 = vcmp.gt.f32.partialorder %v4435, 0.0
        %vm4491 = vcmp.gt.f32.partialorder %v4438, 0.0
        %vm4492 = vcmp.gt.f32.partialorder %v4441, 0.0
        %vm4493 = vcmp.gt.f32.partialorder %v4444, 0.0
        %4510 = vrot.lane.b32.xlu0 %v4462, 32
        %v4511 = vpop.permute.xlu0 %4510
        %4512 = vrot.lane.b32.xlu0 %v4463, 32
        %v4513 = vpop.permute.xlu0 %4512
        %4514 = vrot.lane.b32.xlu0 %v4464, 32
        %v4515 = vpop.permute.xlu0 %4514
        %4516 = vrot.lane.b32.xlu0 %v4465, 32
        %v4517 = vpop.permute.xlu0 %4516
        %4518 = vrot.lane.b32.xlu0 %v4466, 32
        %v4519 = vpop.permute.xlu0 %4518
        %4520 = vrot.lane.b32.xlu0 %v4467, 32
        %v4521 = vpop.permute.xlu0 %4520
        %4522 = vrot.lane.b32.xlu0 %v4468, 32
        %v4523 = vpop.permute.xlu0 %4522
        %4524 = vrot.lane.b32.xlu0 %v4469, 32
        %v4525 = vpop.permute.xlu0 %4524
        %4526 = vrot.lane.b32.xlu0 %v4470, 32
        %v4527 = vpop.permute.xlu0 %4526
        %4528 = vrot.lane.b32.xlu0 %v4471, 32
        %v4529 = vpop.permute.xlu0 %4528
        %4530 = vrot.lane.b32.xlu0 %v4472, 32
        %v4531 = vpop.permute.xlu0 %4530
        %4532 = vrot.lane.b32.xlu0 %v4473, 32
        %v4533 = vpop.permute.xlu0 %4532
        %4534 = vrot.lane.b32.xlu0 %v4474, 32
        %v4535 = vpop.permute.xlu0 %4534
        %4536 = vrot.lane.b32.xlu0 %v4475, 32
        %v4537 = vpop.permute.xlu0 %4536
        %4538 = vrot.lane.b32.xlu0 %v4476, 32
        %v4539 = vpop.permute.xlu0 %4538
        %4540 = vrot.lane.b32.xlu0 %v4477, 32
        %v4541 = vpop.permute.xlu0 %4540
        %v4558 = vmul.f32 %v4399, %v4511
        %v4559 = vmul.f32 %v4402, %v4513
        %v4560 = vmul.f32 %v4405, %v4515
        %v4561 = vmul.f32 %v4408, %v4517
        %v4562 = vmul.f32 %v4411, %v4519
        %v4563 = vmul.f32 %v4414, %v4521
        %v4564 = vmul.f32 %v4417, %v4523
        %v4565 = vmul.f32 %v4420, %v4525
        %v4566 = vmul.f32 %v4423, %v4527
        %v4567 = vmul.f32 %v4426, %v4529
        %v4568 = vmul.f32 %v4429, %v4531
        %v4569 = vmul.f32 %v4432, %v4533
        %v4570 = vmul.f32 %v4435, %v4535
        %v4571 = vmul.f32 %v4438, %v4537
        %v4572 = vmul.f32 %v4441, %v4539
        %v4573 = vmul.f32 %v4444, %v4541
        %4590 = vrot.lane.b32.xlu0 %v4558, 96
        %v4591 = vpop.permute.xlu0 %4590
        %4592 = vrot.lane.b32.xlu0 %v4559, 96
        %v4593 = vpop.permute.xlu0 %4592
        %4594 = vrot.lane.b32.xlu0 %v4560, 96
        %v4595 = vpop.permute.xlu0 %4594
        %4596 = vrot.lane.b32.xlu0 %v4561, 96
        %v4597 = vpop.permute.xlu0 %4596
        %4598 = vrot.lane.b32.xlu0 %v4562, 96
        %v4599 = vpop.permute.xlu0 %4598
        %4600 = vrot.lane.b32.xlu0 %v4563, 96
        %v4601 = vpop.permute.xlu0 %4600
        %4602 = vrot.lane.b32.xlu0 %v4564, 96
        %v4603 = vpop.permute.xlu0 %4602
        %4604 = vrot.lane.b32.xlu0 %v4565, 96
        %v4605 = vpop.permute.xlu0 %4604
        %4606 = vrot.lane.b32.xlu0 %v4566, 96
        %v4607 = vpop.permute.xlu0 %4606
        %4608 = vrot.lane.b32.xlu0 %v4567, 96
        %v4609 = vpop.permute.xlu0 %4608
        %4610 = vrot.lane.b32.xlu0 %v4568, 96
        %v4611 = vpop.permute.xlu0 %4610
        %4612 = vrot.lane.b32.xlu0 %v4569, 96
        %v4613 = vpop.permute.xlu0 %4612
        %4614 = vrot.lane.b32.xlu0 %v4570, 96
        %v4615 = vpop.permute.xlu0 %4614
        %4616 = vrot.lane.b32.xlu0 %v4571, 96
        %v4617 = vpop.permute.xlu0 %4616
        %4618 = vrot.lane.b32.xlu0 %v4572, 96
        %v4619 = vpop.permute.xlu0 %4618
        %4620 = vrot.lane.b32.xlu0 %v4573, 96
        %v4621 = vpop.permute.xlu0 %4620
        %v4638 = vsel %vm4478, %v4591, 0.0
        %v4639 = vsel %vm4479, %v4593, 0.0
        %v4640 = vsel %vm4480, %v4595, 0.0
        %v4641 = vsel %vm4481, %v4597, 0.0
        %v4642 = vsel %vm4482, %v4599, 0.0
        %v4643 = vsel %vm4483, %v4601, 0.0
        %v4644 = vsel %vm4484, %v4603, 0.0
        %v4645 = vsel %vm4485, %v4605, 0.0
        %v4646 = vsel %vm4486, %v4607, 0.0
        %v4647 = vsel %vm4487, %v4609, 0.0
        %v4648 = vsel %vm4488, %v4611, 0.0
        %v4649 = vsel %vm4489, %v4613, 0.0
        %v4650 = vsel %vm4490, %v4615, 0.0
        %v4651 = vsel %vm4491, %v4617, 0.0
        %v4652 = vsel %vm4492, %v4619, 0.0
        %v4653 = vsel %vm4493, %v4621, 0.0
        %v4654 = vadd.f32 %v4638, %v3766
        %v4655 = vadd.f32 %v4639, %v3767
        %v4656 = vadd.f32 %v4640, %v3768
        %v4657 = vadd.f32 %v4641, %v3769
        %v4658 = vadd.f32 %v4642, %v3770
        %v4659 = vadd.f32 %v4643, %v3771
        %v4660 = vadd.f32 %v4644, %v3772
        %v4661 = vadd.f32 %v4645, %v3773
        %v4662 = vadd.f32 %v4646, %v3774
        %v4663 = vadd.f32 %v4647, %v3775
        %v4664 = vadd.f32 %v4648, %v3776
        %v4665 = vadd.f32 %v4649, %v3777
        %v4666 = vadd.f32 %v4650, %v3778
        %v4667 = vadd.f32 %v4651, %v3779
        %v4668 = vadd.f32 %v4652, %v3780
        %v4669 = vadd.f32 %v4653, %v3781
        %v4671 = vperm.slane %v1004, 0
        %v4674 = vsel %vm1653, %v4654, 0
        %v4677 = vsel %vm1653, %v4655, 0
        %v4680 = vsel %vm1653, %v4656, 0
        %v4683 = vsel %vm1653, %v4657, 0
        %v4686 = vsel %vm1653, %v4658, 0
        %v4689 = vsel %vm1653, %v4659, 0
        %v4692 = vsel %vm1653, %v4660, 0
        %v4695 = vsel %vm1653, %v4661, 0
        %v4698 = vsel %vm1653, %v4662, 0
        %v4701 = vsel %vm1653, %v4663, 0
        %v4704 = vsel %vm1653, %v4664, 0
        %v4707 = vsel %vm1653, %v4665, 0
        %v4710 = vsel %vm1653, %v4666, 0
        %v4713 = vsel %vm1653, %v4667, 0
        %v4716 = vsel %vm1653, %v4668, 0
        %v4719 = vsel %vm1653, %v4669, 0
        %4721 = vmatpush.msra.mxu0 0.0
        %4722 = vmatpush.msra.mxu0 0.0
        %4723 = vmatpush.msra.mxu0 0.0
        %4724 = vmatpush.msra.mxu0 0.0
        %4725 = vmatpush.msra.mxu0 0.0
        %4726 = vmatpush.msra.mxu0 0.0
        %4727 = vmatpush.msra.mxu0 0.0
        %4728 = vmatpush.msra.mxu0 0.0
        %4729 = vmatpush.msra.mxu0 0.0
        %4730 = vmatpush.msra.mxu0 0.0
        %4731 = vmatpush.msra.mxu0 0.0
        %4732 = vmatpush.msra.mxu0 0.0
        %4733 = vmatpush.msra.mxu0 %v1003
        %4734 = vmatpush.msra.mxu0 %v1002
        %4735 = vmatpush.msra.mxu0 %v1001
        %4736 = vmatpush.msra.mxu0 %v1000
        %4737 = vmatmul.f32.gmra.mxu0 %v4674
        %v4738 = vpop.f32.mrf.mxu0
        %v4739 = vadd.f32 %v4671, %v4738
        %4740 = vmatmul.f32.gmra.mxu0 %v4677
        %v4741 = vpop.f32.mrf.mxu0
        %v4742 = vadd.f32 %v4671, %v4741
        %4743 = vmatmul.f32.gmra.mxu0 %v4680
        %v4744 = vpop.f32.mrf.mxu0
        %v4745 = vadd.f32 %v4671, %v4744
        %4746 = vmatmul.f32.gmra.mxu0 %v4683
        %v4747 = vpop.f32.mrf.mxu0
        %v4748 = vadd.f32 %v4671, %v4747
        %4749 = vmatmul.f32.gmra.mxu0 %v4686
        %v4750 = vpop.f32.mrf.mxu0
        %v4751 = vadd.f32 %v4671, %v4750
        %4752 = vmatmul.f32.gmra.mxu0 %v4689
        %v4753 = vpop.f32.mrf.mxu0
        %v4754 = vadd.f32 %v4671, %v4753
        %4755 = vmatmul.f32.gmra.mxu0 %v4692
        %v4756 = vpop.f32.mrf.mxu0
        %v4757 = vadd.f32 %v4671, %v4756
        %4758 = vmatmul.f32.gmra.mxu0 %v4695
        %v4759 = vpop.f32.mrf.mxu0
        %v4760 = vadd.f32 %v4671, %v4759
        %4761 = vmatmul.f32.gmra.mxu0 %v4698
        %v4762 = vpop.f32.mrf.mxu0
        %v4763 = vadd.f32 %v4671, %v4762
        %4764 = vmatmul.f32.gmra.mxu0 %v4701
        %v4765 = vpop.f32.mrf.mxu0
        %v4766 = vadd.f32 %v4671, %v4765
        %4767 = vmatmul.f32.gmra.mxu0 %v4704
        %v4768 = vpop.f32.mrf.mxu0
        %v4769 = vadd.f32 %v4671, %v4768
        %4770 = vmatmul.f32.gmra.mxu0 %v4707
        %v4771 = vpop.f32.mrf.mxu0
        %v4772 = vadd.f32 %v4671, %v4771
        %4773 = vmatmul.f32.gmra.mxu0 %v4710
        %v4774 = vpop.f32.mrf.mxu0
        %v4775 = vadd.f32 %v4671, %v4774
        %4776 = vmatmul.f32.gmra.mxu0 %v4713
        %v4777 = vpop.f32.mrf.mxu0
        %v4778 = vadd.f32 %v4671, %v4777
        %4779 = vmatmul.f32.gmra.mxu0 %v4716
        %v4780 = vpop.f32.mrf.mxu0
        %v4781 = vadd.f32 %v4671, %v4780
        %4782 = vmatmul.f32.gmra.mxu0 %v4719
        %v4783 = vpop.f32.mrf.mxu0
        %v4784 = vadd.f32 %v4671, %v4783
        %4785 = vdwg.mxu0
        %v4786 = vmax.f32 %v4739, 0.0
        %v4787 = vmax.f32 %v4742, 0.0
        %v4788 = vmax.f32 %v4745, 0.0
        %v4789 = vmax.f32 %v4748, 0.0
        %v4790 = vmax.f32 %v4751, 0.0
        %v4791 = vmax.f32 %v4754, 0.0
        %v4792 = vmax.f32 %v4757, 0.0
        %v4793 = vmax.f32 %v4760, 0.0
        %v4794 = vmax.f32 %v4763, 0.0
        %v4795 = vmax.f32 %v4766, 0.0
        %v4796 = vmax.f32 %v4769, 0.0
        %v4797 = vmax.f32 %v4772, 0.0
        %v4798 = vmax.f32 %v4775, 0.0
        %v4799 = vmax.f32 %v4778, 0.0
        %v4800 = vmax.f32 %v4781, 0.0
        %v4801 = vmax.f32 %v4784, 0.0
        %v4803 = vperm.slane %v1013, 0
        %v4806 = vsel %vm2500, %v4786, 0
        %v4809 = vsel %vm2500, %v4787, 0
        %v4812 = vsel %vm2500, %v4788, 0
        %v4815 = vsel %vm2500, %v4789, 0
        %v4818 = vsel %vm2500, %v4790, 0
        %v4821 = vsel %vm2500, %v4791, 0
        %v4824 = vsel %vm2500, %v4792, 0
        %v4827 = vsel %vm2500, %v4793, 0
        %v4830 = vsel %vm2500, %v4794, 0
        %v4833 = vsel %vm2500, %v4795, 0
        %v4836 = vsel %vm2500, %v4796, 0
        %v4839 = vsel %vm2500, %v4797, 0
        %v4842 = vsel %vm2500, %v4798, 0
        %v4845 = vsel %vm2500, %v4799, 0
        %v4848 = vsel %vm2500, %v4800, 0
        %v4851 = vsel %vm2500, %v4801, 0
        %4853 = vmatpush.msra.mxu0 0.0
        %4854 = vmatpush.msra.mxu0 0.0
        %4855 = vmatpush.msra.mxu0 0.0
        %4856 = vmatpush.msra.mxu0 0.0
        %4857 = vmatpush.msra.mxu0 0.0
        %4858 = vmatpush.msra.mxu0 0.0
        %4859 = vmatpush.msra.mxu0 0.0
        %4860 = vmatpush.msra.mxu0 0.0
        %4861 = vmatpush.msra.mxu0 %v1012
        %4862 = vmatpush.msra.mxu0 %v1011
        %4863 = vmatpush.msra.mxu0 %v1010
        %4864 = vmatpush.msra.mxu0 %v1009
        %4865 = vmatpush.msra.mxu0 %v1008
        %4866 = vmatpush.msra.mxu0 %v1007
        %4867 = vmatpush.msra.mxu0 %v1006
        %4868 = vmatpush.msra.mxu0 %v1005
        %4869 = vmatmul.f32.gmra.mxu0 %v4806
        %v4870 = vpop.f32.mrf.mxu0
        %v4871 = vadd.f32 %v4803, %v4870
        %4872 = vmatmul.f32.gmra.mxu0 %v4809
        %v4873 = vpop.f32.mrf.mxu0
        %v4874 = vadd.f32 %v4803, %v4873
        %4875 = vmatmul.f32.gmra.mxu0 %v4812
        %v4876 = vpop.f32.mrf.mxu0
        %v4877 = vadd.f32 %v4803, %v4876
        %4878 = vmatmul.f32.gmra.mxu0 %v4815
        %v4879 = vpop.f32.mrf.mxu0
        %v4880 = vadd.f32 %v4803, %v4879
        %4881 = vmatmul.f32.gmra.mxu0 %v4818
        %v4882 = vpop.f32.mrf.mxu0
        %v4883 = vadd.f32 %v4803, %v4882
        %4884 = vmatmul.f32.gmra.mxu0 %v4821
        %v4885 = vpop.f32.mrf.mxu0
        %v4886 = vadd.f32 %v4803, %v4885
        %4887 = vmatmul.f32.gmra.mxu0 %v4824
        %v4888 = vpop.f32.mrf.mxu0
        %v4889 = vadd.f32 %v4803, %v4888
        %4890 = vmatmul.f32.gmra.mxu0 %v4827
        %v4891 = vpop.f32.mrf.mxu0
        %v4892 = vadd.f32 %v4803, %v4891
        %4893 = vmatmul.f32.gmra.mxu0 %v4830
        %v4894 = vpop.f32.mrf.mxu0
        %v4895 = vadd.f32 %v4803, %v4894
        %4896 = vmatmul.f32.gmra.mxu0 %v4833
        %v4897 = vpop.f32.mrf.mxu0
        %v4898 = vadd.f32 %v4803, %v4897
        %4899 = vmatmul.f32.gmra.mxu0 %v4836
        %v4900 = vpop.f32.mrf.mxu0
        %v4901 = vadd.f32 %v4803, %v4900
        %4902 = vmatmul.f32.gmra.mxu0 %v4839
        %v4903 = vpop.f32.mrf.mxu0
        %v4904 = vadd.f32 %v4803, %v4903
        %4905 = vmatmul.f32.gmra.mxu0 %v4842
        %v4906 = vpop.f32.mrf.mxu0
        %v4907 = vadd.f32 %v4803, %v4906
        %4908 = vmatmul.f32.gmra.mxu0 %v4845
        %v4909 = vpop.f32.mrf.mxu0
        %v4910 = vadd.f32 %v4803, %v4909
        %4911 = vmatmul.f32.gmra.mxu0 %v4848
        %v4912 = vpop.f32.mrf.mxu0
        %v4913 = vadd.f32 %v4803, %v4912
        %4914 = vmatmul.f32.gmra.mxu0 %v4851
        %v4915 = vpop.f32.mrf.mxu0
        %v4916 = vadd.f32 %v4803, %v4915
        %4917 = vdwg.mxu0
        %v4918 = vmax.f32 %v4871, 0.0
        %v4919 = vmax.f32 %v4874, 0.0
        %v4920 = vmax.f32 %v4877, 0.0
        %v4921 = vmax.f32 %v4880, 0.0
        %v4922 = vmax.f32 %v4883, 0.0
        %v4923 = vmax.f32 %v4886, 0.0
        %v4924 = vmax.f32 %v4889, 0.0
        %v4925 = vmax.f32 %v4892, 0.0
        %v4926 = vmax.f32 %v4895, 0.0
        %v4927 = vmax.f32 %v4898, 0.0
        %v4928 = vmax.f32 %v4901, 0.0
        %v4929 = vmax.f32 %v4904, 0.0
        %v4930 = vmax.f32 %v4907, 0.0
        %v4931 = vmax.f32 %v4910, 0.0
        %v4932 = vmax.f32 %v4913, 0.0
        %v4933 = vmax.f32 %v4916, 0.0
        %v4934 = vld [vmem:[%s959] sm:$0xff]
        %4935 = vmatpush.msra.mxu0 %v4933
        %4936 = vmatpush.msra.mxu0 %v4932
        %4937 = vmatpush.msra.mxu0 %v4931
        %4938 = vmatpush.msra.mxu0 %v4930
        %4939 = vmatpush.msra.mxu0 %v4929
        %4940 = vmatpush.msra.mxu0 %v4928
        %4941 = vmatpush.msra.mxu0 %v4927
        %4942 = vmatpush.msra.mxu0 %v4926
        %4943 = vmatpush.msra.mxu0 %v4925
        %4944 = vmatpush.msra.mxu0 %v4924
        %4945 = vmatpush.msra.mxu0 %v4923
        %4946 = vmatpush.msra.mxu0 %v4922
        %4947 = vmatpush.msra.mxu0 %v4921
        %4948 = vmatpush.msra.mxu0 %v4920
        %4949 = vmatpush.msra.mxu0 %v4919
        %4950 = vmatpush.msra.mxu0 %v4918
        %4951 = vmatmul.f32.gmra.mxu0 %v4934
        %v4952 = vpop.f32.mrf.mxu0
        %v4953 = vadd.f32 0.0, %v4952
        %4954 = vdwg.mxu0
        %v4955 = vld [vmem:[%s963] sm:$0xff]
        %4957 = vrot.lane.b32.xlu0 %v4955, 32
        %v4958 = vpop.permute.xlu0 %4957
        %v4960 = vsel %vm1653, %v4953, %v4958
        %v4962 = vperm.slane %v1019, 0
        %vm4964 = vcmask 293888
        %v4966 = vsel %vm4964, %v4960, 0
        %vm4968 = vcmask 1043456
        %v4970 = vsel %vm4968, %v1018, 0
        %4972 = vmatpush.msra.mxu0 0.0
        %4973 = vmatpush.msra.mxu0 0.0
        %4974 = vmatpush.msra.mxu0 0.0
        %4975 = vmatpush.msra.mxu0 0.0
        %4976 = vmatpush.msra.mxu0 0.0
        %4977 = vmatpush.msra.mxu0 0.0
        %4978 = vmatpush.msra.mxu0 0.0
        %4979 = vmatpush.msra.mxu0 0.0
        %4980 = vmatpush.msra.mxu0 0.0
        %4981 = vmatpush.msra.mxu0 0.0
        %4982 = vmatpush.msra.mxu0 0.0
        %4983 = vmatpush.msra.mxu0 %v4970
        %4984 = vmatpush.msra.mxu0 %v1017
        %4985 = vmatpush.msra.mxu0 %v1016
        %4986 = vmatpush.msra.mxu0 %v1015
        %4987 = vmatpush.msra.mxu0 %v1014
        %4988 = vmatmul.f32.gmra.mxu0 %v4966
        %v4989 = vpop.f32.mrf.mxu0
        %v4990 = vadd.f32 %v4962, %v4989
        %4991 = vdwg.mxu0
        %v4992 = vmax.f32 %v4990, 0.0
        %v4994 = vperm.slane %v1024, 0
        %v4997 = vsel %vm1653, %v4992, 0
        %4999 = vmatpush.msra.mxu0 0.0
        %5000 = vmatpush.msra.mxu0 0.0
        %5001 = vmatpush.msra.mxu0 0.0
        %5002 = vmatpush.msra.mxu0 0.0
        %5003 = vmatpush.msra.mxu0 0.0
        %5004 = vmatpush.msra.mxu0 0.0
        %5005 = vmatpush.msra.mxu0 0.0
        %5006 = vmatpush.msra.mxu0 0.0
        %5007 = vmatpush.msra.mxu0 0.0
        %5008 = vmatpush.msra.mxu0 0.0
        %5009 = vmatpush.msra.mxu0 0.0
        %5010 = vmatpush.msra.mxu0 0.0
        %5011 = vmatpush.msra.mxu0 %v1023
        %5012 = vmatpush.msra.mxu0 %v1022
        %5013 = vmatpush.msra.mxu0 %v1021
        %5014 = vmatpush.msra.mxu0 %v1020
        %5015 = vmatmul.f32.gmra.mxu0 %v4997
        %v5016 = vpop.f32.mrf.mxu0
        %v5017 = vadd.f32 %v4994, %v5016
        %5018 = vdwg.mxu0
        %v5019 = vmax.f32 %v5017, 0.0
        %v5021 = vperm.slane %v1029, 0
        %v5024 = vsel %vm1653, %v5019, 0
        %5026 = vmatpush.msra.mxu0 0.0
        %5027 = vmatpush.msra.mxu0 0.0
        %5028 = vmatpush.msra.mxu0 0.0
        %5029 = vmatpush.msra.mxu0 0.0
        %5030 = vmatpush.msra.mxu0 0.0
        %5031 = vmatpush.msra.mxu0 0.0
        %5032 = vmatpush.msra.mxu0 0.0
        %5033 = vmatpush.msra.mxu0 0.0
        %5034 = vmatpush.msra.mxu0 0.0
        %5035 = vmatpush.msra.mxu0 0.0
        %5036 = vmatpush.msra.mxu0 0.0
        %5037 = vmatpush.msra.mxu0 0.0
        %5038 = vmatpush.msra.mxu0 %v1028
        %5039 = vmatpush.msra.mxu0 %v1027
        %5040 = vmatpush.msra.mxu0 %v1026
        %5041 = vmatpush.msra.mxu0 %v1025
        %5042 = vmatmul.f32.gmra.mxu0 %v5024
        %v5043 = vpop.f32.mrf.mxu0
        %v5044 = vadd.f32 %v5021, %v5043
        %5045 = vdwg.mxu0
        %v5046 = vand.u32 2147483647, %v5044
        %v5047 = vsub.f32 0.0, %v5046
        %v5048 = vmul.f32 %v5047, 1.442695
        %v5049 = vpow.pop %v5048
        %vm5050 = vcmp.ge.f32.partialorder %v5044, 0.0
        %v5051 = vadd.f32 %v5049, 1.0
        %v5052 = vrcp.pop %v5051
        %v5053 = vmul.f32 %v5051, %v5052
        %v5054 = vsub.f32 1.0, %v5053
        %v5055 = vmul.f32 %v5052, %v5054
        %v5056 = vadd.f32 %v5052, %v5055
        %vm5057 = vweird.f32 %v5051
        %vm5058 = vweird.f32 %v5052
        %vm5059 = vmor %vm5057, %vm5058
        %v5060 = vsel %vm5059, %v5052, %v5056
        %v5061 = vand.u32 2147483647, %v5051
        %vm5062 = vcmp.eq.f32.partialorder %v5061, 8.507059e+37
        %v5063 = vand.u32 %v5051, 2147483648
        %v5064 = vor.u32 1.1754944e-38, %v5063
        %v5065 = vsel %vm5062, %v5064, %v5060
        %v5066 = vmul.f32 1.0, %v5065
        %v5067 = vmul.f32 %v5049, %v5065
        %v5068 = vsel %vm5050, %v5066, %v5067
        %vm5069 = vcmask 23552
        %5070 = vst.msk [vmem:[%s967] sm:$0xff] %vm5069, %v5068
        %p5071 = scmp.lt.s32.totalorder %s42, 1
        %s5072 = scalar_select %p5071, %s42, 1
        %s5073 = smul.addr %s5072, 8
        %s5074 = scalar_lea.vmem %s28, %s5073
        // Predicated region
        $region137: #{tpu_custom_call.1} parent=131 // pred_check
          %p5075 = pneg %p678
        $region138: #{tpu_custom_call.1} parent=131 // pred_check_branch
          %5077 = sbr.rel (%p5075) target = $region140
        $region139: #{tpu_custom_call.1} parent=131 // pred_region
          _
        $region140: #{tpu_custom_call.1} parent=131 // pred_fallthru
          _
      $region132: #{tpu_custom_call.1} parent=5 // pred_fallthru
        _
      %p5078 = scmp.le.s32.totalorder 2, %s37
      // Predicated region
      $region141: #{tpu_custom_call.1} parent=5 // pred_check
        %p5079 = pneg %p5078
      $region142: #{tpu_custom_call.1} parent=5 // pred_check_branch
        %5081 = sbr.rel (%p5079) target = $region144
      $region143: #{tpu_custom_call.1} parent=5 // pred_region
        %s5082 = ssub.s32 %s37, 2
        // Predicated region
        $region145: #{tpu_custom_call.1} parent=143 // pred_check
          %p5083 = pneg %p684
        $region146: #{tpu_custom_call.1} parent=143 // pred_check_branch
          %5085 = sbr.rel (%p5083) target = $region148
        $region147: #{tpu_custom_call.1} parent=143 // pred_region
          %p5086 = scmp.lt.s32.totalorder %s43, 1
          %s5087 = scalar_select %p5086, %s43, 1
          %s5088 = smul.addr %s5087, 8
          %s5089 = scalar_lea.vmem %s28, %s5088
        $region148: #{tpu_custom_call.1} parent=143 // pred_fallthru
          _
      $region144: #{tpu_custom_call.1} parent=5 // pred_fallthru
        _
    $region6: #{tpu_custom_call.1} parent=1 // loop_footer
      %s41 = sadd.s32 1, %s37
    $region7: #{tpu_custom_call.1} parent=1 // loop_footer_branch
      %36 = sbr.rel target = $region3
    $region8: #{tpu_custom_call.1} parent=1 // loop_exit
      _
    %5090 = vsyncpa [#allocation3], 1
    %s5091 = scalar_lea.sflag [#allocation3], 1
    %5092 = vsyncpa %s5091, 1

</llo_original>
